<compile_context>
chip_gen: v6e
topology: v6e:2x2x1
jax: 0.10.0
libtpu: 0.0.40
codegen_flags: <defaults>
</compile_context>

<pallas_src>
import functools

import jax
import jax.numpy as jnp
from jax import lax
from jax.experimental import pallas as pl
from jax.experimental.pallas import tpu as pltpu

EPS = 1e-5  # nn.BatchNorm3d default eps


# ----------------------------------------------------------------------------
# Pallas kernel: one (n, d) output plane = Conv3dSame + bias + ReLU + BN stats
# ----------------------------------------------------------------------------
def _conv_relu_stats_kernel(x0_ref, x1_ref, x2_ref, w_ref, b_ref,
                            y_ref, s_ref, q_ref, *, dil, out_h):
    """x*_ref : (1, 1, Hp, Wp*C)   three depth-shifted padded planes (kd taps)
       w_ref  : (9, Wp*C, W*F)     banded RHS per (kd, kh); kw+channels folded in
       b_ref  : (1, W*F)           bias broadcast over w positions (f32)
       y_ref  : (1, 1, H, W*F)     post-ReLU activations (lane-dense store)
       s_ref  : (1, 1, 1, W*F)     per-step per-(w, channel) sums (f32)
       q_ref  : (1, 1, 1, W*F)     per-step per-(w, channel) sums of squares
    """
    wf = y_ref.shape[3]
    acc = jnp.zeros((out_h, wf), jnp.float32)
    # 9 accumulating MXU passes: depth tap via the three shifted inputs,
    # height tap via a static row slice, width tap + C folded into the RHS band.
    for kd, x_ref in enumerate((x0_ref, x1_ref, x2_ref)):
        for kh in range(3):
            lhs = x_ref[0, 0, pl.ds(kh * dil, out_h), :]          # (H, Wp*C)
            acc = acc + jnp.dot(lhs, w_ref[3 * kd + kh],
                                preferred_element_type=jnp.float32)
    y = jnp.maximum(acc + b_ref[...], 0.0)                        # bias+ReLU f32
    y_ref[0, 0] = y.astype(y_ref.dtype)                           # lane-dense vst
    # Fused BN reduction on the lane-dense tile (f32); W-fold happens in JAX.
    s_ref[0, 0] = jnp.sum(y, axis=0, keepdims=True)
    q_ref[0, 0] = jnp.sum(y * y, axis=0, keepdims=True)


def _conv_relu_stats(xp, rhs, bias_row, dil, out_h, out_w, f, y_dtype):
    """Grid over (batch, output depth); each step produces one (H, W*F) plane."""
    n, dp, hp, wpc = xp.shape
    d = dp - 2 * dil
    wf = out_w * f
    kernel = functools.partial(_conv_relu_stats_kernel, dil=dil, out_h=out_h)

    def xmap(kd):
        return lambda ni, di, kd=kd: (ni, di + kd * dil, 0, 0)

    return pl.pallas_call(
        kernel,
        out_shape=(jax.ShapeDtypeStruct((n, d, out_h, wf), y_dtype),
                   jax.ShapeDtypeStruct((n, d, 1, wf), jnp.float32),
                   jax.ShapeDtypeStruct((n, d, 1, wf), jnp.float32)),
        grid=(n, d),
        in_specs=[pl.BlockSpec((1, 1, hp, wpc), xmap(0)),
                  pl.BlockSpec((1, 1, hp, wpc), xmap(1)),
                  pl.BlockSpec((1, 1, hp, wpc), xmap(2)),
                  pl.BlockSpec((9, rhs.shape[1], rhs.shape[2]),
                               lambda ni, di: (0, 0, 0)),          # weight-stationary
                  pl.BlockSpec((1, wf), lambda ni, di: (0, 0))],
        out_specs=(pl.BlockSpec((1, 1, out_h, wf), lambda ni, di: (ni, di, 0, 0)),
                   pl.BlockSpec((1, 1, 1, wf), lambda ni, di: (ni, di, 0, 0)),
                   pl.BlockSpec((1, 1, 1, wf), lambda ni, di: (ni, di, 0, 0))),
        compiler_params=pltpu.CompilerParams(
            dimension_semantics=("parallel", "parallel"),   # N*D tiles >> 2 TCs
            vmem_limit_bytes=32 * 1024 * 1024),
    )(xp, xp, xp, rhs, bias_row)


# ----------------------------------------------------------------------------
# JAX glue: banded RHS, padding/layout, BN coefficients (plain-JAX, fused by XLA)
# ----------------------------------------------------------------------------
def _banded_rhs(w_oidhw, out_w, dil):
    """(F, C, 3, 3, 3) -> (9, Wp*C, W*F) banded matrices.

    B_{kd,kh}[(w', c), (w, f)] = sum_kw [w' == w + kw*dil] * weight[f, c, kd, kh, kw]
    so one (H, Wp*C) @ (Wp*C, W*F) matmul performs the kw taps and the channel
    contraction for a whole output row-plane, emitting a lane-dense (H, W*F) tile.
    """
    wp = out_w + 2 * dil
    mats = []
    for kd in range(3):
        for kh in range(3):
            b = jnp.zeros((wp * int(w_oidhw.shape[1]), out_w * int(w_oidhw.shape[0])),
                          jnp.float32)
            for kw in range(3):
                tap = jnp.transpose(w_oidhw[:, :, kd, kh, kw]).astype(jnp.float32)  # (C, F)
                shift = jnp.eye(wp, out_w, k=-kw * dil, dtype=jnp.float32)          # (Wp, W)
                b = b + jnp.kron(shift, tap)
            mats.append(b)
    return jnp.stack(mats, axis=0)


def _stage(x_ndhwc, w, b, gamma, beta, dil, compute_dtype):
    """Conv3dSame(3x3x3, dilation) -> ReLU -> BatchNorm3d (batch statistics)."""
    n, d, h, wd, c = x_ndhwc.shape
    f = int(w.shape[0])
    wf = wd * f

    # "Same" zero padding (k=3, s=1 => dil each side), channels-last, W*C lane-fused.
    xp = jnp.pad(x_ndhwc, ((0, 0), (dil, dil), (dil, dil), (dil, dil), (0, 0)))
    xp = xp.reshape(n, d + 2 * dil, h + 2 * dil, (wd + 2 * dil) * c).astype(compute_dtype)

    rhs = _banded_rhs(w, wd, dil).astype(compute_dtype)
    bias_row = jnp.tile(b.astype(jnp.float32), wd).reshape(1, wf)

    y, s, q = _conv_relu_stats(xp, rhs, bias_row, dil, h, wd, f, compute_dtype)

    # Training-mode (biased-variance) BN coefficients from the fused per-step sums.
    # No padded-row correction is needed: every grid step covers exactly valid
    # output positions.
    m = n * d * h * wd
    s_c = jnp.sum(s, axis=(0, 1, 2)).reshape(wd, f).sum(axis=0)
    q_c = jnp.sum(q, axis=(0, 1, 2)).reshape(wd, f).sum(axis=0)
    mean = s_c / m
    var = jnp.maximum(q_c / m - mean * mean, 0.0)   # TODO(synk): Welford if means >> spread
    scale = gamma.astype(jnp.float32) * lax.rsqrt(var + EPS)
    shift = beta.astype(jnp.float32) - mean * scale

    # BN apply in plain JAX: XLA fuses it into the next stage's pad/cast (or the
    # final output transpose), so there is no standalone BN pass / extra HBM trip.
    z = y.astype(jnp.float32).reshape(n, d, h, wd, f) * scale + shift
    return z


def midscope_conv3d_block(x_ncdhw, params, *, compute_dtype=jnp.bfloat16):
    """Forward pass.  x_ncdhw: (N, Cin, D, H, W) -> (N, F, D, H, W)."""
    w1, b1, g1, bt1, w2, b2, g2, bt2 = params
    x = jnp.transpose(x_ncdhw, (0, 2, 3, 4, 1))            # NCDHW -> NDHWC
    z1 = _stage(x, w1, b1, g1, bt1, 1, compute_dtype)
    z2 = _stage(z1, w2, b2, g2, bt2, 2, compute_dtype)
    out = jnp.transpose(z2, (0, 4, 1, 2, 3))               # back to NCDHW
    return out.astype(x_ncdhw.dtype)


# ----------------------------------------------------------------------------
# Pure-JAX reference (for correctness check)
# ----------------------------------------------------------------------------
def _reference(x, params):
    w1, b1, g1, bt1, w2, b2, g2, bt2 = params

    def conv(x, w, b, dil):
        y = lax.conv_general_dilated(
            x, w, window_strides=(1, 1, 1), padding=[(dil, dil)] * 3,
            rhs_dilation=(dil, dil, dil),
            dimension_numbers=("NCDHW", "OIDHW", "NCDHW"))
        return y + b[None, :, None, None, None]

    def bn(x, g, bta):
        mean = jnp.mean(x, axis=(0, 2, 3, 4), keepdims=True)
        var = jnp.mean(jnp.square(x - mean), axis=(0, 2, 3, 4), keepdims=True)
        xh = (x - mean) * lax.rsqrt(var + EPS)
        return xh * g[None, :, None, None, None] + bta[None, :, None, None, None]

    y = bn(jnp.maximum(conv(x, w1, b1, 1), 0.0), g1, bt1)
    y = bn(jnp.maximum(conv(y, w2, b2, 2), 0.0), g2, bt2)
    return y


# ----------------------------------------------------------------------------
if __name__ == "__main__":
    # Small shapes consistent with the module: batch=2, in_filters=4, filters=8,
    # spatial D=H=W=8.
    N, Cin, F, D, H, W = 2, 4, 8, 8, 8, 8

    key = jax.random.PRNGKey(0)
    kx, kw1, kb1, kw2, kb2 = jax.random.split(key, 5)

    x = jax.random.normal(kx, (N, Cin, D, H, W), dtype=jnp.float32)

    # Deterministic synthetic parameters; BN affine at PyTorch defaults
    # (gamma=1, beta=0); BN uses batch statistics (training mode).
    w1 = 0.1 * jax.random.normal(kw1, (F, Cin, 3, 3, 3), dtype=jnp.float32)
    b1 = 0.1 * jax.random.normal(kb1, (F,), dtype=jnp.float32)
    w2 = 0.1 * jax.random.normal(kw2, (F, F, 3, 3, 3), dtype=jnp.float32)
    b2 = 0.1 * jax.random.normal(kb2, (F,), dtype=jnp.float32)
    g1 = jnp.ones((F,), jnp.float32)
    bt1 = jnp.zeros((F,), jnp.float32)
    g2 = jnp.ones((F,), jnp.float32)
    bt2 = jnp.zeros((F,), jnp.float32)
    params = (w1, b1, g1, bt1, w2, b2, g2, bt2)

    fwd = jax.jit(midscope_conv3d_block, static_argnames=("compute_dtype",))
    ref = jax.block_until_ready(_reference(x, params))

    # f32 compute path: tight check of the banded-matmul conv, fused ReLU/stats
    # and JAX-side BN against the lax.conv reference.
    out32 = jax.block_until_ready(fwd(x, params, compute_dtype=jnp.float32))
    assert out32.shape == (N, F, D, H, W), out32.shape
    assert bool(jnp.all(jnp.isfinite(out32)))
    err32 = float(jnp.max(jnp.abs(out32 - ref)))
    assert jnp.allclose(out32, ref, atol=1e-3, rtol=1e-3), err32

    # Default performance path: bf16 matmul inputs / activation storage,
    # f32 accumulation and BN math.
    out = jax.block_until_ready(fwd(x, params))
    assert out.shape == (N, F, D, H, W), out.shape
    assert bool(jnp.all(jnp.isfinite(out)))
    err = float(jnp.max(jnp.abs(out.astype(jnp.float32) - ref)))
    assert jnp.allclose(out.astype(jnp.float32), ref, atol=7.5e-2, rtol=7.5e-2), err

    print("KERNEL_OK")
</pallas_src>

<mosaic_0001>
module attributes {stable_mosaic.version = 11 : i64} {
  func.func @_conv_relu_stats_kernel(%arg0: i32, %arg1: i32, %arg2: memref<1x1x10x40xf32, #tpu.memory_space<vmem>>, %arg3: memref<1x1x10x40xf32, #tpu.memory_space<vmem>>, %arg4: memref<1x1x10x40xf32, #tpu.memory_space<vmem>>, %arg5: memref<9x40x64xf32, #tpu.memory_space<vmem>>, %arg6: memref<1x64xf32, #tpu.memory_space<vmem>>, %arg7: memref<1x1x8x64xf32, #tpu.memory_space<vmem>>, %arg8: memref<1x1x1x64xf32, #tpu.memory_space<vmem>>, %arg9: memref<1x1x1x64xf32, #tpu.memory_space<vmem>>) attributes {dimension_semantics = [#tpu.dimension_semantics<parallel>, #tpu.dimension_semantics<parallel>], iteration_bounds = array<i64: 2, 8>, scalar_prefetch = 0 : i64, scratch_operands = 0 : i64, tpu.core_type = #tpu.core_type<tc>, window_params = [{transform_indices = @transform_0, window_bounds = array<i64: 1, 1, 10, 40>}, {transform_indices = @transform_1, window_bounds = array<i64: 1, 1, 10, 40>}, {transform_indices = @transform_2, window_bounds = array<i64: 1, 1, 10, 40>}, {pipeline_mode = #tpu.pipeline_mode<synchronous>, transform_indices = @transform_3, window_bounds = array<i64: 9, 40, 64>}, {pipeline_mode = #tpu.pipeline_mode<synchronous>, transform_indices = @transform_4, window_bounds = array<i64: 1, 64>}, {transform_indices = @transform_5, window_bounds = array<i64: 1, 1, 8, 64>}, {transform_indices = @transform_6, window_bounds = array<i64: 1, 1, 1, 64>}, {transform_indices = @transform_7, window_bounds = array<i64: 1, 1, 1, 64>}]} {
    %cst = arith.constant 0.000000e+00 : f32
    %0 = vector.broadcast %cst : f32 to vector<8x64xf32>
    %c0 = arith.constant 0 : index
    %c0_0 = arith.constant 0 : index
    %c0_1 = arith.constant 0 : index
    %c0_2 = arith.constant 0 : index
    %1 = vector.load %arg2[%c0, %c0_0, %c0_1, %c0_2] : memref<1x1x10x40xf32, #tpu.memory_space<vmem>>, vector<1x1x8x40xf32>
    %2 = vector.shape_cast %1 : vector<1x1x8x40xf32> to vector<8x40xf32>
    %c0_3 = arith.constant 0 : index
    %c0_4 = arith.constant 0 : index
    %c0_5 = arith.constant 0 : index
    %3 = vector.load %arg5[%c0_3, %c0_4, %c0_5] : memref<9x40x64xf32, #tpu.memory_space<vmem>>, vector<1x40x64xf32>
    %4 = vector.shape_cast %3 : vector<1x40x64xf32> to vector<40x64xf32>
    %cst_6 = arith.constant dense<0.000000e+00> : vector<8x64xf32>
    %5 = tpu.matmul %2, %4, %cst_6 {dimension_numbers = #tpu.dot_dimension_numbers<[1], [0], [0], [1], [0, 0, 1, 1], [], []>} : vector<8x40xf32>, vector<40x64xf32>, vector<8x64xf32> -> vector<8x64xf32>
    %6 = arith.addf %0, %5 : vector<8x64xf32>
    %c0_7 = arith.constant 0 : index
    %c0_8 = arith.constant 0 : index
    %c1 = arith.constant 1 : index
    %c0_9 = arith.constant 0 : index
    %7 = vector.load %arg2[%c0_7, %c0_8, %c1, %c0_9] : memref<1x1x10x40xf32, #tpu.memory_space<vmem>>, vector<1x1x8x40xf32>
    %8 = vector.shape_cast %7 : vector<1x1x8x40xf32> to vector<8x40xf32>
    %c1_10 = arith.constant 1 : index
    %c0_11 = arith.constant 0 : index
    %c0_12 = arith.constant 0 : index
    %9 = vector.load %arg5[%c1_10, %c0_11, %c0_12] : memref<9x40x64xf32, #tpu.memory_space<vmem>>, vector<1x40x64xf32>
    %10 = vector.shape_cast %9 : vector<1x40x64xf32> to vector<40x64xf32>
    %cst_13 = arith.constant dense<0.000000e+00> : vector<8x64xf32>
    %11 = tpu.matmul %8, %10, %cst_13 {dimension_numbers = #tpu.dot_dimension_numbers<[1], [0], [0], [1], [0, 0, 1, 1], [], []>} : vector<8x40xf32>, vector<40x64xf32>, vector<8x64xf32> -> vector<8x64xf32>
    %12 = arith.addf %6, %11 : vector<8x64xf32>
    %c0_14 = arith.constant 0 : index
    %c0_15 = arith.constant 0 : index
    %c2 = arith.constant 2 : index
    %c0_16 = arith.constant 0 : index
    %13 = vector.load %arg2[%c0_14, %c0_15, %c2, %c0_16] : memref<1x1x10x40xf32, #tpu.memory_space<vmem>>, vector<1x1x8x40xf32>
    %14 = vector.shape_cast %13 : vector<1x1x8x40xf32> to vector<8x40xf32>
    %c2_17 = arith.constant 2 : index
    %c0_18 = arith.constant 0 : index
    %c0_19 = arith.constant 0 : index
    %15 = vector.load %arg5[%c2_17, %c0_18, %c0_19] : memref<9x40x64xf32, #tpu.memory_space<vmem>>, vector<1x40x64xf32>
    %16 = vector.shape_cast %15 : vector<1x40x64xf32> to vector<40x64xf32>
    %cst_20 = arith.constant dense<0.000000e+00> : vector<8x64xf32>
    %17 = tpu.matmul %14, %16, %cst_20 {dimension_numbers = #tpu.dot_dimension_numbers<[1], [0], [0], [1], [0, 0, 1, 1], [], []>} : vector<8x40xf32>, vector<40x64xf32>, vector<8x64xf32> -> vector<8x64xf32>
    %18 = arith.addf %12, %17 : vector<8x64xf32>
    %c0_21 = arith.constant 0 : index
    %c0_22 = arith.constant 0 : index
    %c0_23 = arith.constant 0 : index
    %c0_24 = arith.constant 0 : index
    %19 = vector.load %arg3[%c0_21, %c0_22, %c0_23, %c0_24] : memref<1x1x10x40xf32, #tpu.memory_space<vmem>>, vector<1x1x8x40xf32>
    %20 = vector.shape_cast %19 : vector<1x1x8x40xf32> to vector<8x40xf32>
    %c3 = arith.constant 3 : index
    %c0_25 = arith.constant 0 : index
    %c0_26 = arith.constant 0 : index
    %21 = vector.load %arg5[%c3, %c0_25, %c0_26] : memref<9x40x64xf32, #tpu.memory_space<vmem>>, vector<1x40x64xf32>
    %22 = vector.shape_cast %21 : vector<1x40x64xf32> to vector<40x64xf32>
    %cst_27 = arith.constant dense<0.000000e+00> : vector<8x64xf32>
    %23 = tpu.matmul %20, %22, %cst_27 {dimension_numbers = #tpu.dot_dimension_numbers<[1], [0], [0], [1], [0, 0, 1, 1], [], []>} : vector<8x40xf32>, vector<40x64xf32>, vector<8x64xf32> -> vector<8x64xf32>
    %24 = arith.addf %18, %23 : vector<8x64xf32>
    %c0_28 = arith.constant 0 : index
    %c0_29 = arith.constant 0 : index
    %c1_30 = arith.constant 1 : index
    %c0_31 = arith.constant 0 : index
    %25 = vector.load %arg3[%c0_28, %c0_29, %c1_30, %c0_31] : memref<1x1x10x40xf32, #tpu.memory_space<vmem>>, vector<1x1x8x40xf32>
    %26 = vector.shape_cast %25 : vector<1x1x8x40xf32> to vector<8x40xf32>
    %c4 = arith.constant 4 : index
    %c0_32 = arith.constant 0 : index
    %c0_33 = arith.constant 0 : index
    %27 = vector.load %arg5[%c4, %c0_32, %c0_33] : memref<9x40x64xf32, #tpu.memory_space<vmem>>, vector<1x40x64xf32>
    %28 = vector.shape_cast %27 : vector<1x40x64xf32> to vector<40x64xf32>
    %cst_34 = arith.constant dense<0.000000e+00> : vector<8x64xf32>
    %29 = tpu.matmul %26, %28, %cst_34 {dimension_numbers = #tpu.dot_dimension_numbers<[1], [0], [0], [1], [0, 0, 1, 1], [], []>} : vector<8x40xf32>, vector<40x64xf32>, vector<8x64xf32> -> vector<8x64xf32>
    %30 = arith.addf %24, %29 : vector<8x64xf32>
    %c0_35 = arith.constant 0 : index
    %c0_36 = arith.constant 0 : index
    %c2_37 = arith.constant 2 : index
    %c0_38 = arith.constant 0 : index
    %31 = vector.load %arg3[%c0_35, %c0_36, %c2_37, %c0_38] : memref<1x1x10x40xf32, #tpu.memory_space<vmem>>, vector<1x1x8x40xf32>
    %32 = vector.shape_cast %31 : vector<1x1x8x40xf32> to vector<8x40xf32>
    %c5 = arith.constant 5 : index
    %c0_39 = arith.constant 0 : index
    %c0_40 = arith.constant 0 : index
    %33 = vector.load %arg5[%c5, %c0_39, %c0_40] : memref<9x40x64xf32, #tpu.memory_space<vmem>>, vector<1x40x64xf32>
    %34 = vector.shape_cast %33 : vector<1x40x64xf32> to vector<40x64xf32>
    %cst_41 = arith.constant dense<0.000000e+00> : vector<8x64xf32>
    %35 = tpu.matmul %32, %34, %cst_41 {dimension_numbers = #tpu.dot_dimension_numbers<[1], [0], [0], [1], [0, 0, 1, 1], [], []>} : vector<8x40xf32>, vector<40x64xf32>, vector<8x64xf32> -> vector<8x64xf32>
    %36 = arith.addf %30, %35 : vector<8x64xf32>
    %c0_42 = arith.constant 0 : index
    %c0_43 = arith.constant 0 : index
    %c0_44 = arith.constant 0 : index
    %c0_45 = arith.constant 0 : index
    %37 = vector.load %arg4[%c0_42, %c0_43, %c0_44, %c0_45] : memref<1x1x10x40xf32, #tpu.memory_space<vmem>>, vector<1x1x8x40xf32>
    %38 = vector.shape_cast %37 : vector<1x1x8x40xf32> to vector<8x40xf32>
    %c6 = arith.constant 6 : index
    %c0_46 = arith.constant 0 : index
    %c0_47 = arith.constant 0 : index
    %39 = vector.load %arg5[%c6, %c0_46, %c0_47] : memref<9x40x64xf32, #tpu.memory_space<vmem>>, vector<1x40x64xf32>
    %40 = vector.shape_cast %39 : vector<1x40x64xf32> to vector<40x64xf32>
    %cst_48 = arith.constant dense<0.000000e+00> : vector<8x64xf32>
    %41 = tpu.matmul %38, %40, %cst_48 {dimension_numbers = #tpu.dot_dimension_numbers<[1], [0], [0], [1], [0, 0, 1, 1], [], []>} : vector<8x40xf32>, vector<40x64xf32>, vector<8x64xf32> -> vector<8x64xf32>
    %42 = arith.addf %36, %41 : vector<8x64xf32>
    %c0_49 = arith.constant 0 : index
    %c0_50 = arith.constant 0 : index
    %c1_51 = arith.constant 1 : index
    %c0_52 = arith.constant 0 : index
    %43 = vector.load %arg4[%c0_49, %c0_50, %c1_51, %c0_52] : memref<1x1x10x40xf32, #tpu.memory_space<vmem>>, vector<1x1x8x40xf32>
    %44 = vector.shape_cast %43 : vector<1x1x8x40xf32> to vector<8x40xf32>
    %c7 = arith.constant 7 : index
    %c0_53 = arith.constant 0 : index
    %c0_54 = arith.constant 0 : index
    %45 = vector.load %arg5[%c7, %c0_53, %c0_54] : memref<9x40x64xf32, #tpu.memory_space<vmem>>, vector<1x40x64xf32>
    %46 = vector.shape_cast %45 : vector<1x40x64xf32> to vector<40x64xf32>
    %cst_55 = arith.constant dense<0.000000e+00> : vector<8x64xf32>
    %47 = tpu.matmul %44, %46, %cst_55 {dimension_numbers = #tpu.dot_dimension_numbers<[1], [0], [0], [1], [0, 0, 1, 1], [], []>} : vector<8x40xf32>, vector<40x64xf32>, vector<8x64xf32> -> vector<8x64xf32>
    %48 = arith.addf %42, %47 : vector<8x64xf32>
    %c0_56 = arith.constant 0 : index
    %c0_57 = arith.constant 0 : index
    %c2_58 = arith.constant 2 : index
    %c0_59 = arith.constant 0 : index
    %49 = vector.load %arg4[%c0_56, %c0_57, %c2_58, %c0_59] : memref<1x1x10x40xf32, #tpu.memory_space<vmem>>, vector<1x1x8x40xf32>
    %50 = vector.shape_cast %49 : vector<1x1x8x40xf32> to vector<8x40xf32>
    %c8 = arith.constant 8 : index
    %c0_60 = arith.constant 0 : index
    %c0_61 = arith.constant 0 : index
    %51 = vector.load %arg5[%c8, %c0_60, %c0_61] : memref<9x40x64xf32, #tpu.memory_space<vmem>>, vector<1x40x64xf32>
    %52 = vector.shape_cast %51 : vector<1x40x64xf32> to vector<40x64xf32>
    %cst_62 = arith.constant dense<0.000000e+00> : vector<8x64xf32>
    %53 = tpu.matmul %50, %52, %cst_62 {dimension_numbers = #tpu.dot_dimension_numbers<[1], [0], [0], [1], [0, 0, 1, 1], [], []>} : vector<8x40xf32>, vector<40x64xf32>, vector<8x64xf32> -> vector<8x64xf32>
    %54 = arith.addf %48, %53 : vector<8x64xf32>
    %c0_63 = arith.constant 0 : index
    %c0_64 = arith.constant 0 : index
    %55 = vector.load %arg6[%c0_63, %c0_64] : memref<1x64xf32, #tpu.memory_space<vmem>>, vector<1x64xf32>
    %56 = vector.broadcast %55 : vector<1x64xf32> to vector<8x64xf32>
    %57 = arith.addf %54, %56 : vector<8x64xf32>
    %cst_65 = arith.constant 0.000000e+00 : f32
    %58 = vector.broadcast %cst_65 : f32 to vector<8x64xf32>
    %59 = arith.maximumf %57, %58 : vector<8x64xf32>
    %c0_66 = arith.constant 0 : index
    %c0_67 = arith.constant 0 : index
    %c0_68 = arith.constant 0 : index
    %c0_69 = arith.constant 0 : index
    %60 = vector.load %arg7[%c0_66, %c0_67, %c0_68, %c0_69] : memref<1x1x8x64xf32, #tpu.memory_space<vmem>>, vector<1x1x8x64xf32>
    %61 = vector.shape_cast %60 : vector<1x1x8x64xf32> to vector<8x64xf32>
    %62 = vector.shape_cast %59 : vector<8x64xf32> to vector<1x1x8x64xf32>
    tpu.vector_store %arg7[%c0_66, %c0_67, %c0_68, %c0_69], %62 {strides = array<i32>} : memref<1x1x8x64xf32, #tpu.memory_space<vmem>>, vector<1x1x8x64xf32>,
    %cst_70 = arith.constant dense<0.000000e+00> : vector<64xf32>
    %63 = vector.multi_reduction <add>, %59, %cst_70 [0] : vector<8x64xf32> to vector<64xf32>
    %64 = vector.shape_cast %63 : vector<64xf32> to vector<1x64xf32>
    %c0_71 = arith.constant 0 : index
    %c0_72 = arith.constant 0 : index
    %c0_73 = arith.constant 0 : index
    %c0_74 = arith.constant 0 : index
    %65 = vector.load %arg8[%c0_71, %c0_72, %c0_73, %c0_74] : memref<1x1x1x64xf32, #tpu.memory_space<vmem>>, vector<1x1x1x64xf32>
    %66 = vector.shape_cast %65 : vector<1x1x1x64xf32> to vector<1x64xf32>
    %67 = vector.shape_cast %64 : vector<1x64xf32> to vector<1x1x1x64xf32>
    tpu.vector_store %arg8[%c0_71, %c0_72, %c0_73, %c0_74], %67 {strides = array<i32>} : memref<1x1x1x64xf32, #tpu.memory_space<vmem>>, vector<1x1x1x64xf32>,
    %68 = arith.mulf %59, %59 : vector<8x64xf32>
    %cst_75 = arith.constant dense<0.000000e+00> : vector<64xf32>
    %69 = vector.multi_reduction <add>, %68, %cst_75 [0] : vector<8x64xf32> to vector<64xf32>
    %70 = vector.shape_cast %69 : vector<64xf32> to vector<1x64xf32>
    %c0_76 = arith.constant 0 : index
    %c0_77 = arith.constant 0 : index
    %c0_78 = arith.constant 0 : index
    %c0_79 = arith.constant 0 : index
    %71 = vector.load %arg9[%c0_76, %c0_77, %c0_78, %c0_79] : memref<1x1x1x64xf32, #tpu.memory_space<vmem>>, vector<1x1x1x64xf32>
    %72 = vector.shape_cast %71 : vector<1x1x1x64xf32> to vector<1x64xf32>
    %73 = vector.shape_cast %70 : vector<1x64xf32> to vector<1x1x1x64xf32>
    tpu.vector_store %arg9[%c0_76, %c0_77, %c0_78, %c0_79], %73 {strides = array<i32>} : memref<1x1x1x64xf32, #tpu.memory_space<vmem>>, vector<1x1x1x64xf32>,
    return
  }
  func.func @transform_0(%arg0: i32, %arg1: i32) -> (i32, i32, i32, i32) {
    %c0_i32 = arith.constant 0 : i32
    %0 = arith.addi %arg1, %c0_i32 : i32
    %c0_i32_0 = arith.constant 0 : i32
    %c0_i32_1 = arith.constant 0 : i32
    %c0_i32_2 = arith.constant 0 : i32
    return %arg0, %0, %c0_i32_0, %c0_i32_1 : i32, i32, i32, i32
  }
  func.func @transform_1(%arg0: i32, %arg1: i32) -> (i32, i32, i32, i32) {
    %c1_i32 = arith.constant 1 : i32
    %0 = arith.addi %arg1, %c1_i32 : i32
    %c0_i32 = arith.constant 0 : i32
    %c0_i32_0 = arith.constant 0 : i32
    %c0_i32_1 = arith.constant 0 : i32
    return %arg0, %0, %c0_i32, %c0_i32_0 : i32, i32, i32, i32
  }
  func.func @transform_2(%arg0: i32, %arg1: i32) -> (i32, i32, i32, i32) {
    %c2_i32 = arith.constant 2 : i32
    %0 = arith.addi %arg1, %c2_i32 : i32
    %c0_i32 = arith.constant 0 : i32
    %c0_i32_0 = arith.constant 0 : i32
    %c0_i32_1 = arith.constant 0 : i32
    return %arg0, %0, %c0_i32, %c0_i32_0 : i32, i32, i32, i32
  }
  func.func @transform_3(%arg0: i32, %arg1: i32) -> (i32, i32, i32) {
    %c0_i32 = arith.constant 0 : i32
    %c0_i32_0 = arith.constant 0 : i32
    %c0_i32_1 = arith.constant 0 : i32
    %c0_i32_2 = arith.constant 0 : i32
    return %c0_i32, %c0_i32_0, %c0_i32_1 : i32, i32, i32
  }
  func.func @transform_4(%arg0: i32, %arg1: i32) -> (i32, i32) {
    %c0_i32 = arith.constant 0 : i32
    %c0_i32_0 = arith.constant 0 : i32
    %c0_i32_1 = arith.constant 0 : i32
    return %c0_i32, %c0_i32_0 : i32, i32
  }
  func.func @transform_5(%arg0: i32, %arg1: i32) -> (i32, i32, i32, i32) {
    %c0_i32 = arith.constant 0 : i32
    %c0_i32_0 = arith.constant 0 : i32
    %c0_i32_1 = arith.constant 0 : i32
    return %arg0, %arg1, %c0_i32, %c0_i32_0 : i32, i32, i32, i32
  }
  func.func @transform_6(%arg0: i32, %arg1: i32) -> (i32, i32, i32, i32) {
    %c0_i32 = arith.constant 0 : i32
    %c0_i32_0 = arith.constant 0 : i32
    %c0_i32_1 = arith.constant 0 : i32
    return %arg0, %arg1, %c0_i32, %c0_i32_0 : i32, i32, i32, i32
  }
  func.func @transform_7(%arg0: i32, %arg1: i32) -> (i32, i32, i32, i32) {
    %c0_i32 = arith.constant 0 : i32
    %c0_i32_0 = arith.constant 0 : i32
    %c0_i32_1 = arith.constant 0 : i32
    return %arg0, %arg1, %c0_i32, %c0_i32_0 : i32, i32, i32, i32
  }
}

module attributes {stable_mosaic.version = 11 : i64} {
  func.func @_conv_relu_stats_kernel(%arg0: i32, %arg1: i32, %arg2: memref<1x1x12x96xf32, #tpu.memory_space<vmem>>, %arg3: memref<1x1x12x96xf32, #tpu.memory_space<vmem>>, %arg4: memref<1x1x12x96xf32, #tpu.memory_space<vmem>>, %arg5: memref<9x96x64xf32, #tpu.memory_space<vmem>>, %arg6: memref<1x64xf32, #tpu.memory_space<vmem>>, %arg7: memref<1x1x8x64xf32, #tpu.memory_space<vmem>>, %arg8: memref<1x1x1x64xf32, #tpu.memory_space<vmem>>, %arg9: memref<1x1x1x64xf32, #tpu.memory_space<vmem>>) attributes {dimension_semantics = [#tpu.dimension_semantics<parallel>, #tpu.dimension_semantics<parallel>], iteration_bounds = array<i64: 2, 8>, scalar_prefetch = 0 : i64, scratch_operands = 0 : i64, tpu.core_type = #tpu.core_type<tc>, window_params = [{transform_indices = @transform_0, window_bounds = array<i64: 1, 1, 12, 96>}, {transform_indices = @transform_1, window_bounds = array<i64: 1, 1, 12, 96>}, {transform_indices = @transform_2, window_bounds = array<i64: 1, 1, 12, 96>}, {pipeline_mode = #tpu.pipeline_mode<synchronous>, transform_indices = @transform_3, window_bounds = array<i64: 9, 96, 64>}, {pipeline_mode = #tpu.pipeline_mode<synchronous>, transform_indices = @transform_4, window_bounds = array<i64: 1, 64>}, {transform_indices = @transform_5, window_bounds = array<i64: 1, 1, 8, 64>}, {transform_indices = @transform_6, window_bounds = array<i64: 1, 1, 1, 64>}, {transform_indices = @transform_7, window_bounds = array<i64: 1, 1, 1, 64>}]} {
    %cst = arith.constant 0.000000e+00 : f32
    %0 = vector.broadcast %cst : f32 to vector<8x64xf32>
    %c0 = arith.constant 0 : index
    %c0_0 = arith.constant 0 : index
    %c0_1 = arith.constant 0 : index
    %c0_2 = arith.constant 0 : index
    %1 = vector.load %arg2[%c0, %c0_0, %c0_1, %c0_2] : memref<1x1x12x96xf32, #tpu.memory_space<vmem>>, vector<1x1x8x96xf32>
    %2 = vector.shape_cast %1 : vector<1x1x8x96xf32> to vector<8x96xf32>
    %c0_3 = arith.constant 0 : index
    %c0_4 = arith.constant 0 : index
    %c0_5 = arith.constant 0 : index
    %3 = vector.load %arg5[%c0_3, %c0_4, %c0_5] : memref<9x96x64xf32, #tpu.memory_space<vmem>>, vector<1x96x64xf32>
    %4 = vector.shape_cast %3 : vector<1x96x64xf32> to vector<96x64xf32>
    %cst_6 = arith.constant dense<0.000000e+00> : vector<8x64xf32>
    %5 = tpu.matmul %2, %4, %cst_6 {dimension_numbers = #tpu.dot_dimension_numbers<[1], [0], [0], [1], [0, 0, 1, 1], [], []>} : vector<8x96xf32>, vector<96x64xf32>, vector<8x64xf32> -> vector<8x64xf32>
    %6 = arith.addf %0, %5 : vector<8x64xf32>
    %c0_7 = arith.constant 0 : index
    %c0_8 = arith.constant 0 : index
    %c2 = arith.constant 2 : index
    %c0_9 = arith.constant 0 : index
    %7 = vector.load %arg2[%c0_7, %c0_8, %c2, %c0_9] : memref<1x1x12x96xf32, #tpu.memory_space<vmem>>, vector<1x1x8x96xf32>
    %8 = vector.shape_cast %7 : vector<1x1x8x96xf32> to vector<8x96xf32>
    %c1 = arith.constant 1 : index
    %c0_10 = arith.constant 0 : index
    %c0_11 = arith.constant 0 : index
    %9 = vector.load %arg5[%c1, %c0_10, %c0_11] : memref<9x96x64xf32, #tpu.memory_space<vmem>>, vector<1x96x64xf32>
    %10 = vector.shape_cast %9 : vector<1x96x64xf32> to vector<96x64xf32>
    %cst_12 = arith.constant dense<0.000000e+00> : vector<8x64xf32>
    %11 = tpu.matmul %8, %10, %cst_12 {dimension_numbers = #tpu.dot_dimension_numbers<[1], [0], [0], [1], [0, 0, 1, 1], [], []>} : vector<8x96xf32>, vector<96x64xf32>, vector<8x64xf32> -> vector<8x64xf32>
    %12 = arith.addf %6, %11 : vector<8x64xf32>
    %c0_13 = arith.constant 0 : index
    %c0_14 = arith.constant 0 : index
    %c4 = arith.constant 4 : index
    %c0_15 = arith.constant 0 : index
    %13 = vector.load %arg2[%c0_13, %c0_14, %c4, %c0_15] : memref<1x1x12x96xf32, #tpu.memory_space<vmem>>, vector<1x1x8x96xf32>
    %14 = vector.shape_cast %13 : vector<1x1x8x96xf32> to vector<8x96xf32>
    %c2_16 = arith.constant 2 : index
    %c0_17 = arith.constant 0 : index
    %c0_18 = arith.constant 0 : index
    %15 = vector.load %arg5[%c2_16, %c0_17, %c0_18] : memref<9x96x64xf32, #tpu.memory_space<vmem>>, vector<1x96x64xf32>
    %16 = vector.shape_cast %15 : vector<1x96x64xf32> to vector<96x64xf32>
    %cst_19 = arith.constant dense<0.000000e+00> : vector<8x64xf32>
    %17 = tpu.matmul %14, %16, %cst_19 {dimension_numbers = #tpu.dot_dimension_numbers<[1], [0], [0], [1], [0, 0, 1, 1], [], []>} : vector<8x96xf32>, vector<96x64xf32>, vector<8x64xf32> -> vector<8x64xf32>
    %18 = arith.addf %12, %17 : vector<8x64xf32>
    %c0_20 = arith.constant 0 : index
    %c0_21 = arith.constant 0 : index
    %c0_22 = arith.constant 0 : index
    %c0_23 = arith.constant 0 : index
    %19 = vector.load %arg3[%c0_20, %c0_21, %c0_22, %c0_23] : memref<1x1x12x96xf32, #tpu.memory_space<vmem>>, vector<1x1x8x96xf32>
    %20 = vector.shape_cast %19 : vector<1x1x8x96xf32> to vector<8x96xf32>
    %c3 = arith.constant 3 : index
    %c0_24 = arith.constant 0 : index
    %c0_25 = arith.constant 0 : index
    %21 = vector.load %arg5[%c3, %c0_24, %c0_25] : memref<9x96x64xf32, #tpu.memory_space<vmem>>, vector<1x96x64xf32>
    %22 = vector.shape_cast %21 : vector<1x96x64xf32> to vector<96x64xf32>
    %cst_26 = arith.constant dense<0.000000e+00> : vector<8x64xf32>
    %23 = tpu.matmul %20, %22, %cst_26 {dimension_numbers = #tpu.dot_dimension_numbers<[1], [0], [0], [1], [0, 0, 1, 1], [], []>} : vector<8x96xf32>, vector<96x64xf32>, vector<8x64xf32> -> vector<8x64xf32>
    %24 = arith.addf %18, %23 : vector<8x64xf32>
    %c0_27 = arith.constant 0 : index
    %c0_28 = arith.constant 0 : index
    %c2_29 = arith.constant 2 : index
    %c0_30 = arith.constant 0 : index
    %25 = vector.load %arg3[%c0_27, %c0_28, %c2_29, %c0_30] : memref<1x1x12x96xf32, #tpu.memory_space<vmem>>, vector<1x1x8x96xf32>
    %26 = vector.shape_cast %25 : vector<1x1x8x96xf32> to vector<8x96xf32>
    %c4_31 = arith.constant 4 : index
    %c0_32 = arith.constant 0 : index
    %c0_33 = arith.constant 0 : index
    %27 = vector.load %arg5[%c4_31, %c0_32, %c0_33] : memref<9x96x64xf32, #tpu.memory_space<vmem>>, vector<1x96x64xf32>
    %28 = vector.shape_cast %27 : vector<1x96x64xf32> to vector<96x64xf32>
    %cst_34 = arith.constant dense<0.000000e+00> : vector<8x64xf32>
    %29 = tpu.matmul %26, %28, %cst_34 {dimension_numbers = #tpu.dot_dimension_numbers<[1], [0], [0], [1], [0, 0, 1, 1], [], []>} : vector<8x96xf32>, vector<96x64xf32>, vector<8x64xf32> -> vector<8x64xf32>
    %30 = arith.addf %24, %29 : vector<8x64xf32>
    %c0_35 = arith.constant 0 : index
    %c0_36 = arith.constant 0 : index
    %c4_37 = arith.constant 4 : index
    %c0_38 = arith.constant 0 : index
    %31 = vector.load %arg3[%c0_35, %c0_36, %c4_37, %c0_38] : memref<1x1x12x96xf32, #tpu.memory_space<vmem>>, vector<1x1x8x96xf32>
    %32 = vector.shape_cast %31 : vector<1x1x8x96xf32> to vector<8x96xf32>
    %c5 = arith.constant 5 : index
    %c0_39 = arith.constant 0 : index
    %c0_40 = arith.constant 0 : index
    %33 = vector.load %arg5[%c5, %c0_39, %c0_40] : memref<9x96x64xf32, #tpu.memory_space<vmem>>, vector<1x96x64xf32>
    %34 = vector.shape_cast %33 : vector<1x96x64xf32> to vector<96x64xf32>
    %cst_41 = arith.constant dense<0.000000e+00> : vector<8x64xf32>
    %35 = tpu.matmul %32, %34, %cst_41 {dimension_numbers = #tpu.dot_dimension_numbers<[1], [0], [0], [1], [0, 0, 1, 1], [], []>} : vector<8x96xf32>, vector<96x64xf32>, vector<8x64xf32> -> vector<8x64xf32>
    %36 = arith.addf %30, %35 : vector<8x64xf32>
    %c0_42 = arith.constant 0 : index
    %c0_43 = arith.constant 0 : index
    %c0_44 = arith.constant 0 : index
    %c0_45 = arith.constant 0 : index
    %37 = vector.load %arg4[%c0_42, %c0_43, %c0_44, %c0_45] : memref<1x1x12x96xf32, #tpu.memory_space<vmem>>, vector<1x1x8x96xf32>
    %38 = vector.shape_cast %37 : vector<1x1x8x96xf32> to vector<8x96xf32>
    %c6 = arith.constant 6 : index
    %c0_46 = arith.constant 0 : index
    %c0_47 = arith.constant 0 : index
    %39 = vector.load %arg5[%c6, %c0_46, %c0_47] : memref<9x96x64xf32, #tpu.memory_space<vmem>>, vector<1x96x64xf32>
    %40 = vector.shape_cast %39 : vector<1x96x64xf32> to vector<96x64xf32>
    %cst_48 = arith.constant dense<0.000000e+00> : vector<8x64xf32>
    %41 = tpu.matmul %38, %40, %cst_48 {dimension_numbers = #tpu.dot_dimension_numbers<[1], [0], [0], [1], [0, 0, 1, 1], [], []>} : vector<8x96xf32>, vector<96x64xf32>, vector<8x64xf32> -> vector<8x64xf32>
    %42 = arith.addf %36, %41 : vector<8x64xf32>
    %c0_49 = arith.constant 0 : index
    %c0_50 = arith.constant 0 : index
    %c2_51 = arith.constant 2 : index
    %c0_52 = arith.constant 0 : index
    %43 = vector.load %arg4[%c0_49, %c0_50, %c2_51, %c0_52] : memref<1x1x12x96xf32, #tpu.memory_space<vmem>>, vector<1x1x8x96xf32>
    %44 = vector.shape_cast %43 : vector<1x1x8x96xf32> to vector<8x96xf32>
    %c7 = arith.constant 7 : index
    %c0_53 = arith.constant 0 : index
    %c0_54 = arith.constant 0 : index
    %45 = vector.load %arg5[%c7, %c0_53, %c0_54] : memref<9x96x64xf32, #tpu.memory_space<vmem>>, vector<1x96x64xf32>
    %46 = vector.shape_cast %45 : vector<1x96x64xf32> to vector<96x64xf32>
    %cst_55 = arith.constant dense<0.000000e+00> : vector<8x64xf32>
    %47 = tpu.matmul %44, %46, %cst_55 {dimension_numbers = #tpu.dot_dimension_numbers<[1], [0], [0], [1], [0, 0, 1, 1], [], []>} : vector<8x96xf32>, vector<96x64xf32>, vector<8x64xf32> -> vector<8x64xf32>
    %48 = arith.addf %42, %47 : vector<8x64xf32>
    %c0_56 = arith.constant 0 : index
    %c0_57 = arith.constant 0 : index
    %c4_58 = arith.constant 4 : index
    %c0_59 = arith.constant 0 : index
    %49 = vector.load %arg4[%c0_56, %c0_57, %c4_58, %c0_59] : memref<1x1x12x96xf32, #tpu.memory_space<vmem>>, vector<1x1x8x96xf32>
    %50 = vector.shape_cast %49 : vector<1x1x8x96xf32> to vector<8x96xf32>
    %c8 = arith.constant 8 : index
    %c0_60 = arith.constant 0 : index
    %c0_61 = arith.constant 0 : index
    %51 = vector.load %arg5[%c8, %c0_60, %c0_61] : memref<9x96x64xf32, #tpu.memory_space<vmem>>, vector<1x96x64xf32>
    %52 = vector.shape_cast %51 : vector<1x96x64xf32> to vector<96x64xf32>
    %cst_62 = arith.constant dense<0.000000e+00> : vector<8x64xf32>
    %53 = tpu.matmul %50, %52, %cst_62 {dimension_numbers = #tpu.dot_dimension_numbers<[1], [0], [0], [1], [0, 0, 1, 1], [], []>} : vector<8x96xf32>, vector<96x64xf32>, vector<8x64xf32> -> vector<8x64xf32>
    %54 = arith.addf %48, %53 : vector<8x64xf32>
    %c0_63 = arith.constant 0 : index
    %c0_64 = arith.constant 0 : index
    %55 = vector.load %arg6[%c0_63, %c0_64] : memref<1x64xf32, #tpu.memory_space<vmem>>, vector<1x64xf32>
    %56 = vector.broadcast %55 : vector<1x64xf32> to vector<8x64xf32>
    %57 = arith.addf %54, %56 : vector<8x64xf32>
    %cst_65 = arith.constant 0.000000e+00 : f32
    %58 = vector.broadcast %cst_65 : f32 to vector<8x64xf32>
    %59 = arith.maximumf %57, %58 : vector<8x64xf32>
    %c0_66 = arith.constant 0 : index
    %c0_67 = arith.constant 0 : index
    %c0_68 = arith.constant 0 : index
    %c0_69 = arith.constant 0 : index
    %60 = vector.load %arg7[%c0_66, %c0_67, %c0_68, %c0_69] : memref<1x1x8x64xf32, #tpu.memory_space<vmem>>, vector<1x1x8x64xf32>
    %61 = vector.shape_cast %60 : vector<1x1x8x64xf32> to vector<8x64xf32>
    %62 = vector.shape_cast %59 : vector<8x64xf32> to vector<1x1x8x64xf32>
    tpu.vector_store %arg7[%c0_66, %c0_67, %c0_68, %c0_69], %62 {strides = array<i32>} : memref<1x1x8x64xf32, #tpu.memory_space<vmem>>, vector<1x1x8x64xf32>,
    %cst_70 = arith.constant dense<0.000000e+00> : vector<64xf32>
    %63 = vector.multi_reduction <add>, %59, %cst_70 [0] : vector<8x64xf32> to vector<64xf32>
    %64 = vector.shape_cast %63 : vector<64xf32> to vector<1x64xf32>
    %c0_71 = arith.constant 0 : index
    %c0_72 = arith.constant 0 : index
    %c0_73 = arith.constant 0 : index
    %c0_74 = arith.constant 0 : index
    %65 = vector.load %arg8[%c0_71, %c0_72, %c0_73, %c0_74] : memref<1x1x1x64xf32, #tpu.memory_space<vmem>>, vector<1x1x1x64xf32>
    %66 = vector.shape_cast %65 : vector<1x1x1x64xf32> to vector<1x64xf32>
    %67 = vector.shape_cast %64 : vector<1x64xf32> to vector<1x1x1x64xf32>
    tpu.vector_store %arg8[%c0_71, %c0_72, %c0_73, %c0_74], %67 {strides = array<i32>} : memref<1x1x1x64xf32, #tpu.memory_space<vmem>>, vector<1x1x1x64xf32>,
    %68 = arith.mulf %59, %59 : vector<8x64xf32>
    %cst_75 = arith.constant dense<0.000000e+00> : vector<64xf32>
    %69 = vector.multi_reduction <add>, %68, %cst_75 [0] : vector<8x64xf32> to vector<64xf32>
    %70 = vector.shape_cast %69 : vector<64xf32> to vector<1x64xf32>
    %c0_76 = arith.constant 0 : index
    %c0_77 = arith.constant 0 : index
    %c0_78 = arith.constant 0 : index
    %c0_79 = arith.constant 0 : index
    %71 = vector.load %arg9[%c0_76, %c0_77, %c0_78, %c0_79] : memref<1x1x1x64xf32, #tpu.memory_space<vmem>>, vector<1x1x1x64xf32>
    %72 = vector.shape_cast %71 : vector<1x1x1x64xf32> to vector<1x64xf32>
    %73 = vector.shape_cast %70 : vector<1x64xf32> to vector<1x1x1x64xf32>
    tpu.vector_store %arg9[%c0_76, %c0_77, %c0_78, %c0_79], %73 {strides = array<i32>} : memref<1x1x1x64xf32, #tpu.memory_space<vmem>>, vector<1x1x1x64xf32>,
    return
  }
  func.func @transform_0(%arg0: i32, %arg1: i32) -> (i32, i32, i32, i32) {
    %c0_i32 = arith.constant 0 : i32
    %0 = arith.addi %arg1, %c0_i32 : i32
    %c0_i32_0 = arith.constant 0 : i32
    %c0_i32_1 = arith.constant 0 : i32
    %c0_i32_2 = arith.constant 0 : i32
    return %arg0, %0, %c0_i32_0, %c0_i32_1 : i32, i32, i32, i32
  }
  func.func @transform_1(%arg0: i32, %arg1: i32) -> (i32, i32, i32, i32) {
    %c2_i32 = arith.constant 2 : i32
    %0 = arith.addi %arg1, %c2_i32 : i32
    %c0_i32 = arith.constant 0 : i32
    %c0_i32_0 = arith.constant 0 : i32
    %c0_i32_1 = arith.constant 0 : i32
    return %arg0, %0, %c0_i32, %c0_i32_0 : i32, i32, i32, i32
  }
  func.func @transform_2(%arg0: i32, %arg1: i32) -> (i32, i32, i32, i32) {
    %c4_i32 = arith.constant 4 : i32
    %0 = arith.addi %arg1, %c4_i32 : i32
    %c0_i32 = arith.constant 0 : i32
    %c0_i32_0 = arith.constant 0 : i32
    %c0_i32_1 = arith.constant 0 : i32
    return %arg0, %0, %c0_i32, %c0_i32_0 : i32, i32, i32, i32
  }
  func.func @transform_3(%arg0: i32, %arg1: i32) -> (i32, i32, i32) {
    %c0_i32 = arith.constant 0 : i32
    %c0_i32_0 = arith.constant 0 : i32
    %c0_i32_1 = arith.constant 0 : i32
    %c0_i32_2 = arith.constant 0 : i32
    return %c0_i32, %c0_i32_0, %c0_i32_1 : i32, i32, i32
  }
  func.func @transform_4(%arg0: i32, %arg1: i32) -> (i32, i32) {
    %c0_i32 = arith.constant 0 : i32
    %c0_i32_0 = arith.constant 0 : i32
    %c0_i32_1 = arith.constant 0 : i32
    return %c0_i32, %c0_i32_0 : i32, i32
  }
  func.func @transform_5(%arg0: i32, %arg1: i32) -> (i32, i32, i32, i32) {
    %c0_i32 = arith.constant 0 : i32
    %c0_i32_0 = arith.constant 0 : i32
    %c0_i32_1 = arith.constant 0 : i32
    return %arg0, %arg1, %c0_i32, %c0_i32_0 : i32, i32, i32, i32
  }
  func.func @transform_6(%arg0: i32, %arg1: i32) -> (i32, i32, i32, i32) {
    %c0_i32 = arith.constant 0 : i32
    %c0_i32_0 = arith.constant 0 : i32
    %c0_i32_1 = arith.constant 0 : i32
    return %arg0, %arg1, %c0_i32, %c0_i32_0 : i32, i32, i32, i32
  }
  func.func @transform_7(%arg0: i32, %arg1: i32) -> (i32, i32, i32, i32) {
    %c0_i32 = arith.constant 0 : i32
    %c0_i32_0 = arith.constant 0 : i32
    %c0_i32_1 = arith.constant 0 : i32
    return %arg0, %arg1, %c0_i32, %c0_i32_0 : i32, i32, i32, i32
  }
}

</mosaic_0001>

<llo_original>
// kernel: tile.13
$region0: #{tile.13}
  #allocation2 [shape = 's32[1]{0}', space=sflag, size = 0x4, scoped, tag = 'scoped memory for tile.13']
  %s0 = inlined_call_operand.hbm [shape: f32[8], index: 0, kind: input, shape index: {}]
  %s1 = inlined_call_operand.vmem [shape: f32[8,8], index: 1, kind: output, shape index: {}]
  $region1: #{tile.13} parent=0
    #allocation0 [shape = 'u8[512]{0}', space=vmem, size = 0x400, scoped, tag = 'operand span for operand 0']
    #allocation1 [shape = 's32[1]{0}', space=sflag, size = 0x4, scoped, tag = 'scoped memory for tile.13']
    %2 = vsyncpa [#allocation1], 0
    // Predicated region
    $region2: #{tile.13} parent=1 // pred_check
      _
    $region3: #{tile.13} parent=1 // pred_check_branch
      %4 = sbr.rel (0) target = $region5
    $region4: #{tile.13} parent=1 // pred_region
      %s6 = ssub.s32 16, 16
      %7 = vsyncadd [#allocation1], %s6
      %s9 = sshll.u32 [#allocation0], 4
      %s10 = int_to_ptr.vmem [resolvable:$true] %s9
      %12 = dma.hbm_to_vmem [thread:$0]  %s0, 16, %s10, [#allocation1]
    $region5: #{tile.13} parent=1 // pred_fallthru
      _
    // Predicated region
    $region6: #{tile.13} parent=1 // pred_check
      _
    $region7: #{tile.13} parent=1 // pred_check_branch
      %14 = sbr.rel (0) target = $region9
    $region8: #{tile.13} parent=1 // pred_region
      %15 = dma.done [#allocation1], 16
    $region9: #{tile.13} parent=1 // pred_fallthru
      _
    %v16 = vld [vmem:[#allocation0] ss:$0 sm:$0xff]
    %17 = vst [vmem:[%s1] sm:$0xff] %v16
    %18 = vsyncpa [#allocation1], 1

// kernel: tile.14
$region0: #{tile.14}
  %s0 = inlined_call_operand.vmem [shape: f32[8,8], index: 0, kind: input, shape index: {}]
  %s1 = inlined_call_operand.vmem [shape: f32[1,64], index: 1, kind: output, shape index: {}]
  $region1: #{tile.14} parent=0
    #allocation0 [shape = 'u8[4096]{0}', space=vmem, size = 0x1000, scoped, tag = 'scoped mem for output reshape']
    %v2 = vld [vmem:[%s0] sm:$0x1]
    %vm3 = vcmask 64512
    %4 = vst.msk [vmem:[#allocation0] sm:$0x1] %vm3, %v2
    %s5 = scalar_lea.vmem %s0, 7
    %v6 = vld [vmem:[%s5] sm:$0x1]
    %7 = vrot.lane.b32.xlu0 %v6, 56
    %v8 = vpop.permute.xlu0 %7
    %vm9 = vcmask 523712
    %10 = vst.msk [vmem:[#allocation0] sm:$0x1] %vm9, %v8
    %s11 = scalar_lea.vmem %s0, 6
    %v12 = vld [vmem:[%s11] sm:$0x1]
    %13 = vrot.lane.b32.xlu0 %v12, 48
    %v14 = vpop.permute.xlu0 %13
    %vm15 = vcmask 458112
    %16 = vst.msk [vmem:[#allocation0] sm:$0x1] %vm15, %v14
    %s17 = scalar_lea.vmem %s0, 5
    %v18 = vld [vmem:[%s17] sm:$0x1]
    %19 = vrot.lane.b32.xlu0 %v18, 40
    %v20 = vpop.permute.xlu0 %19
    %vm21 = vcmask 392512
    %22 = vst.msk [vmem:[#allocation0] sm:$0x1] %vm21, %v20
    %s23 = scalar_lea.vmem %s0, 4
    %v24 = vld [vmem:[%s23] sm:$0x1]
    %25 = vrot.lane.b32.xlu0 %v24, 32
    %v26 = vpop.permute.xlu0 %25
    %vm27 = vcmask 326912
    %28 = vst.msk [vmem:[#allocation0] sm:$0x1] %vm27, %v26
    %s29 = scalar_lea.vmem %s0, 3
    %v30 = vld [vmem:[%s29] sm:$0x1]
    %31 = vrot.lane.b32.xlu0 %v30, 24
    %v32 = vpop.permute.xlu0 %31
    %vm33 = vcmask 261312
    %34 = vst.msk [vmem:[#allocation0] sm:$0x1] %vm33, %v32
    %s35 = scalar_lea.vmem %s0, 2
    %v36 = vld [vmem:[%s35] sm:$0x1]
    %37 = vrot.lane.b32.xlu0 %v36, 16
    %v38 = vpop.permute.xlu0 %37
    %vm39 = vcmask 195712
    %40 = vst.msk [vmem:[#allocation0] sm:$0x1] %vm39, %v38
    %s41 = scalar_lea.vmem %s0, 1
    %v42 = vld [vmem:[%s41] sm:$0x1]
    %43 = vrot.lane.b32.xlu0 %v42, 8
    %v44 = vpop.permute.xlu0 %43
    %vm45 = vcmask 130112
    %46 = vst.msk [vmem:[#allocation0] sm:$0x1] %vm45, %v44
    %s48 = sshll.u32 1, 1
    %s49 = ssub.s32 %s48, 1
    %v51 = vld [vmem:[#allocation0] sm:%s49]
    %s52 = sshll.u32 1, 1
    %s53 = ssub.s32 %s52, 1
    %54 = vst [vmem:[%s1] sm:%s53] %v51

// kernel: midscope_conv3d_block.2
$region0: #{midscope_conv3d_block.2}
  #allocation0 [shape = 'u32[]', space=smem, size = 0x4, offset = 0x4, fixed_abs, tag = 'smem constant byte address 0x4 - core index']
  #allocation1 [shape = 'u32[144,128]{1,0:T(1,128)}', space=vmem, size = 0x12000, scoped, tag = 'internal scratch']
  %s0 = inlined_call_operand.vmem [shape: f32[2,10,10,40], index: 0, kind: input, shape index: {}, may-alias: {0,1,2}]
  %s1 = inlined_call_operand.vmem [shape: f32[2,10,10,40], index: 1, kind: input, shape index: {}, may-alias: {0,1,2}]
  %s2 = inlined_call_operand.vmem [shape: f32[2,10,10,40], index: 2, kind: input, shape index: {}, may-alias: {0,1,2}]
  %s3 = inlined_call_operand.vmem [shape: f32[9,40,64], index: 3, kind: input, shape index: {}]
  %s4 = inlined_call_operand.vmem [shape: f32[1,64], index: 4, kind: input, shape index: {}]
  %s5 = inlined_call_operand.vmem [shape: f32[2,8,8,64], index: 5, kind: output, shape index: {0}]
  %s6 = inlined_call_operand.vmem [shape: f32[2,8,1,64], index: 6, kind: output, shape index: {1}]
  %s7 = inlined_call_operand.vmem [shape: f32[2,8,1,64], index: 7, kind: output, shape index: {2}]
  %8 = xla_tuple %s5, %s6, %s7
  %s9 = sld [smem:[#allocation0]]
  $region69: #{midscope_conv3d_block.2} parent=0
    _
  %s11 = ssub.s32 1, %s9
  %s12 = scalar_select 0, %s11, %s9
  loop: start=0, step=1, limit=18
  $region2: #{midscope_conv3d_block.2} parent=0 // loop_pre_header
    _
  $region3: #{midscope_conv3d_block.2} parent=0 // loop_header
    %s14 = sphi 0, %s18
    %p15 = scmp.ge.s32.totalorder %s14, 18
    %s21 = sphi 0, %s33
    %s22 = sphi 0, %s29
    %s23 = sphi 0, %s21
    %s24 = sphi 0, %s22
    %s25 = sphi 0, %s23
    %s26 = sphi 0, %s24
    %s38 = sphi 0, %s40
    %s41 = sphi 0, %s38
    %s42 = sphi 0, %s41
    %s58 = sphi 0, %s42
    %s68 = sphi 0, %s70
    %s71 = sphi 0, %s68
    %s72 = sphi 0, %s71
    %s88 = sphi 0, %s72
    %s98 = sphi 0, %s100
    %s101 = sphi 0, %s98
    %s102 = sphi 0, %s101
    %s118 = sphi 0, %s102
    %s122 = sphi 0, %s122
    %s124 = sphi 0, %s122
    %s125 = sphi 0, %s124
    %s139 = sphi 0, %s125
    %s143 = sphi 0, %s143
    %s145 = sphi 0, %s143
    %s146 = sphi 0, %s145
    %s160 = sphi 0, %s146
    %s168 = sphi 0, %s170
    %s171 = sphi 0, %s168
    %s172 = sphi 0, %s171
    %s188 = sphi 0, %s172
    %s196 = sphi 0, %s198
    %s199 = sphi 0, %s196
    %s200 = sphi 0, %s199
    %s216 = sphi 0, %s200
    %s224 = sphi 0, %s226
    %s227 = sphi 0, %s224
    %s228 = sphi 0, %s227
    %s244 = sphi 0, %s228
  $region4: #{midscope_conv3d_block.2} parent=0 // loop_header_branch
    %17 = sbr.rel (%p15) target = $region8
  $region5: #{midscope_conv3d_block.2} parent=0 // loop_body
    %s19 = ssub.s32 %s14, 1
    %s20 = ssub.s32 %s14, 2
    %s27 = sadd.s32 1, %s22
    %p28 = scmp.ge.s32.totalorder %s27, 8
    %s29 = scalar_select %p28, 0, %s27
    %s30 = sadd.s32 1, %s21
    %s31 = scalar_select %p28, %s30, %s21
    %p32 = scmp.ge.s32.totalorder %s31, 2
    %s33 = scalar_select %p32, 0, %s31
    %s34 = ssub.s32 %s21, %s33
    %s35 = ssub.s32 %s22, %s29
    %s36 = sor.u32 %s34, %s35
    %p37 = scmp.eq.s32.totalorder %s36, 0
    %s39 = sadd.s32 %s38, 1
    %s40 = scalar_select %p37, %s38, %s39
    %p43 = pneg %p37
    %p44 = scmp.eq.s32.totalorder %s14, 15
    %p45 = por %p43, %p44
    %p46 = scmp.ne.s32.totalorder %s38, %s41
    %p47 = scmp.eq.s32.totalorder %s14, 0
    %p48 = por %p46, %p47
    %p49 = scmp.ne.s32.totalorder %s38, %s41
    %p50 = scmp.eq.s32.totalorder %s19, 15
    %p51 = por %p49, %p50
    %p52 = scmp.ne.s32.totalorder %s41, %s42
    %p53 = scmp.eq.s32.totalorder %s19, 0
    %p54 = por %p52, %p53
    %p55 = scmp.ne.s32.totalorder %s41, %s42
    %p56 = scmp.eq.s32.totalorder %s20, 15
    %p57 = por %p55, %p56
    %p59 = scmp.ne.s32.totalorder %s42, %s58
    %p60 = scmp.eq.s32.totalorder %s20, 0
    %p61 = por %p59, %p60
    %s62 = sadd.s32 %s22, 1
    %s63 = sadd.s32 %s29, 1
    %s64 = ssub.s32 %s21, %s33
    %s65 = ssub.s32 %s62, %s63
    %s66 = sor.u32 %s64, %s65
    %p67 = scmp.eq.s32.totalorder %s66, 0
    %s69 = sadd.s32 %s68, 1
    %s70 = scalar_select %p67, %s68, %s69
    %p73 = pneg %p67
    %p74 = scmp.eq.s32.totalorder %s14, 15
    %p75 = por %p73, %p74
    %p76 = scmp.ne.s32.totalorder %s68, %s71
    %p77 = scmp.eq.s32.totalorder %s14, 0
    %p78 = por %p76, %p77
    %p79 = scmp.ne.s32.totalorder %s68, %s71
    %p80 = scmp.eq.s32.totalorder %s19, 15
    %p81 = por %p79, %p80
    %p82 = scmp.ne.s32.totalorder %s71, %s72
    %p83 = scmp.eq.s32.totalorder %s19, 0
    %p84 = por %p82, %p83
    %p85 = scmp.ne.s32.totalorder %s71, %s72
    %p86 = scmp.eq.s32.totalorder %s20, 15
    %p87 = por %p85, %p86
    %p89 = scmp.ne.s32.totalorder %s72, %s88
    %p90 = scmp.eq.s32.totalorder %s20, 0
    %p91 = por %p89, %p90
    %s92 = sadd.s32 %s22, 2
    %s93 = sadd.s32 %s29, 2
    %s94 = ssub.s32 %s21, %s33
    %s95 = ssub.s32 %s92, %s93
    %s96 = sor.u32 %s94, %s95
    %p97 = scmp.eq.s32.totalorder %s96, 0
    %s99 = sadd.s32 %s98, 1
    %s100 = scalar_select %p97, %s98, %s99
    %p103 = pneg %p97
    %p104 = scmp.eq.s32.totalorder %s14, 15
    %p105 = por %p103, %p104
    %p106 = scmp.ne.s32.totalorder %s98, %s101
    %p107 = scmp.eq.s32.totalorder %s14, 0
    %p108 = por %p106, %p107
    %p109 = scmp.ne.s32.totalorder %s98, %s101
    %p110 = scmp.eq.s32.totalorder %s19, 15
    %p111 = por %p109, %p110
    %p112 = scmp.ne.s32.totalorder %s101, %s102
    %p113 = scmp.eq.s32.totalorder %s19, 0
    %p114 = por %p112, %p113
    %p115 = scmp.ne.s32.totalorder %s101, %s102
    %p116 = scmp.eq.s32.totalorder %s20, 15
    %p117 = por %p115, %p116
    %p119 = scmp.ne.s32.totalorder %s102, %s118
    %p120 = scmp.eq.s32.totalorder %s20, 0
    %p121 = por %p119, %p120
    %s123 = sadd.s32 %s122, 1
    %p126 = scmp.eq.s32.totalorder %s14, 15
    %p127 = scmp.ne.s32.totalorder %s122, %s124
    %p128 = scmp.eq.s32.totalorder %s14, 0
    %p129 = por %p127, %p128
    %p130 = scmp.ne.s32.totalorder %s122, %s124
    %p131 = scmp.eq.s32.totalorder %s19, 15
    %p132 = por %p130, %p131
    %p133 = scmp.ne.s32.totalorder %s124, %s125
    %p134 = scmp.eq.s32.totalorder %s19, 0
    %p135 = por %p133, %p134
    %p136 = scmp.ne.s32.totalorder %s124, %s125
    %p137 = scmp.eq.s32.totalorder %s20, 15
    %p138 = por %p136, %p137
    %p140 = scmp.ne.s32.totalorder %s125, %s139
    %p141 = scmp.eq.s32.totalorder %s20, 0
    %p142 = por %p140, %p141
    %s144 = sadd.s32 %s143, 1
    %p147 = scmp.eq.s32.totalorder %s14, 15
    %p148 = scmp.ne.s32.totalorder %s143, %s145
    %p149 = scmp.eq.s32.totalorder %s14, 0
    %p150 = por %p148, %p149
    %p151 = scmp.ne.s32.totalorder %s143, %s145
    %p152 = scmp.eq.s32.totalorder %s19, 15
    %p153 = por %p151, %p152
    %p154 = scmp.ne.s32.totalorder %s145, %s146
    %p155 = scmp.eq.s32.totalorder %s19, 0
    %p156 = por %p154, %p155
    %p157 = scmp.ne.s32.totalorder %s145, %s146
    %p158 = scmp.eq.s32.totalorder %s20, 15
    %p159 = por %p157, %p158
    %p161 = scmp.ne.s32.totalorder %s146, %s160
    %p162 = scmp.eq.s32.totalorder %s20, 0
    %p163 = por %p161, %p162
    %s164 = ssub.s32 %s21, %s33
    %s165 = ssub.s32 %s22, %s29
    %s166 = sor.u32 %s164, %s165
    %p167 = scmp.eq.s32.totalorder %s166, 0
    %s169 = sadd.s32 %s168, 1
    %s170 = scalar_select %p167, %s168, %s169
    %p173 = pneg %p167
    %p174 = scmp.eq.s32.totalorder %s14, 15
    %p175 = por %p173, %p174
    %p176 = scmp.ne.s32.totalorder %s168, %s171
    %p177 = scmp.eq.s32.totalorder %s14, 0
    %p178 = por %p176, %p177
    %p179 = scmp.ne.s32.totalorder %s168, %s171
    %p180 = scmp.eq.s32.totalorder %s19, 15
    %p181 = por %p179, %p180
    %p182 = scmp.ne.s32.totalorder %s171, %s172
    %p183 = scmp.eq.s32.totalorder %s19, 0
    %p184 = por %p182, %p183
    %p185 = scmp.ne.s32.totalorder %s171, %s172
    %p186 = scmp.eq.s32.totalorder %s20, 15
    %p187 = por %p185, %p186
    %p189 = scmp.ne.s32.totalorder %s172, %s188
    %p190 = scmp.eq.s32.totalorder %s20, 0
    %p191 = por %p189, %p190
    %s192 = ssub.s32 %s21, %s33
    %s193 = ssub.s32 %s22, %s29
    %s194 = sor.u32 %s192, %s193
    %p195 = scmp.eq.s32.totalorder %s194, 0
    %s197 = sadd.s32 %s196, 1
    %s198 = scalar_select %p195, %s196, %s197
    %p201 = pneg %p195
    %p202 = scmp.eq.s32.totalorder %s14, 15
    %p203 = por %p201, %p202
    %p204 = scmp.ne.s32.totalorder %s196, %s199
    %p205 = scmp.eq.s32.totalorder %s14, 0
    %p206 = por %p204, %p205
    %p207 = scmp.ne.s32.totalorder %s196, %s199
    %p208 = scmp.eq.s32.totalorder %s19, 15
    %p209 = por %p207, %p208
    %p210 = scmp.ne.s32.totalorder %s199, %s200
    %p211 = scmp.eq.s32.totalorder %s19, 0
    %p212 = por %p210, %p211
    %p213 = scmp.ne.s32.totalorder %s199, %s200
    %p214 = scmp.eq.s32.totalorder %s20, 15
    %p215 = por %p213, %p214
    %p217 = scmp.ne.s32.totalorder %s200, %s216
    %p218 = scmp.eq.s32.totalorder %s20, 0
    %p219 = por %p217, %p218
    %s220 = ssub.s32 %s21, %s33
    %s221 = ssub.s32 %s22, %s29
    %s222 = sor.u32 %s220, %s221
    %p223 = scmp.eq.s32.totalorder %s222, 0
    %s225 = sadd.s32 %s224, 1
    %s226 = scalar_select %p223, %s224, %s225
    %p229 = pneg %p223
    %p230 = scmp.eq.s32.totalorder %s14, 15
    %p231 = por %p229, %p230
    %p232 = scmp.ne.s32.totalorder %s224, %s227
    %p233 = scmp.eq.s32.totalorder %s14, 0
    %p234 = por %p232, %p233
    %p235 = scmp.ne.s32.totalorder %s224, %s227
    %p236 = scmp.eq.s32.totalorder %s19, 15
    %p237 = por %p235, %p236
    %p238 = scmp.ne.s32.totalorder %s227, %s228
    %p239 = scmp.eq.s32.totalorder %s19, 0
    %p240 = por %p238, %p239
    %p241 = scmp.ne.s32.totalorder %s227, %s228
    %p242 = scmp.eq.s32.totalorder %s20, 15
    %p243 = por %p241, %p242
    %p245 = scmp.ne.s32.totalorder %s228, %s244
    %p246 = scmp.eq.s32.totalorder %s20, 0
    %p247 = por %p245, %p246
    %p248 = scmp.le.s32.totalorder 1, %s14
    %p249 = scmp.lt.s32.totalorder %s14, 17
    %p250 = pnand %p248, %p249
    %p251 = pneg %p250
    // Predicated region
    $region9: #{midscope_conv3d_block.2} parent=5 // pred_check
      _
    $region10: #{midscope_conv3d_block.2} parent=5 // pred_check_branch
      %253 = sbr.rel (%p250) target = $region12
    $region11: #{midscope_conv3d_block.2} parent=5 // pred_region
      %s254 = ssub.s32 %s14, 1
      // Predicated region
      $region13: #{midscope_conv3d_block.2} parent=11 // pred_check
        %p255 = pneg %p135
      $region14: #{midscope_conv3d_block.2} parent=11 // pred_check_branch
        %257 = sbr.rel (%p255) target = $region16
      $region15: #{midscope_conv3d_block.2} parent=11 // pred_region
        _
      $region16: #{midscope_conv3d_block.2} parent=11 // pred_fallthru
        _
      // Predicated region
      $region17: #{midscope_conv3d_block.2} parent=11 // pred_check
        %p258 = pneg %p156
      $region18: #{midscope_conv3d_block.2} parent=11 // pred_check_branch
        %260 = sbr.rel (%p258) target = $region20
      $region19: #{midscope_conv3d_block.2} parent=11 // pred_region
        _
      $region20: #{midscope_conv3d_block.2} parent=11 // pred_fallthru
        _
    $region12: #{midscope_conv3d_block.2} parent=5 // pred_fallthru
      _
    %p261 = scmp.lt.s32.totalorder %s14, 16
    // Predicated region
    $region21: #{midscope_conv3d_block.2} parent=5 // pred_check
      %p262 = pneg %p261
    $region22: #{midscope_conv3d_block.2} parent=5 // pred_check_branch
      %264 = sbr.rel (%p262) target = $region24
    $region23: #{midscope_conv3d_block.2} parent=5 // pred_region
      // Predicated region
      $region25: #{midscope_conv3d_block.2} parent=23 // pred_check
        %p265 = pneg %p48
      $region26: #{midscope_conv3d_block.2} parent=23 // pred_check_branch
        %267 = sbr.rel (%p265) target = $region28
      $region27: #{midscope_conv3d_block.2} parent=23 // pred_region
        %p268 = scmp.lt.s32.totalorder %s21, 1
        %s269 = scalar_select %p268, %s21, 1
        %p270 = scmp.lt.s32.totalorder %s22, 9
        %s271 = scalar_select %p270, %s22, 9
        %s272 = smul.addr %s271, 2
        %s273 = smul.addr %s269, 20
        %s274 = sadd.s32 %s272, %s273
        %s275 = smul.addr %s274, 8
        %s276 = scalar_lea.vmem %s0, %s275
      $region28: #{midscope_conv3d_block.2} parent=23 // pred_fallthru
        _
      // Predicated region
      $region29: #{midscope_conv3d_block.2} parent=23 // pred_check
        %p277 = pneg %p78
      $region30: #{midscope_conv3d_block.2} parent=23 // pred_check_branch
        %279 = sbr.rel (%p277) target = $region32
      $region31: #{midscope_conv3d_block.2} parent=23 // pred_region
        %s280 = sadd.s32 %s22, 1
        %p281 = scmp.lt.s32.totalorder %s21, 1
        %s282 = scalar_select %p281, %s21, 1
        %p283 = scmp.lt.s32.totalorder %s280, 9
        %s284 = scalar_select %p283, %s280, 9
        %s285 = smul.addr %s284, 2
        %s286 = smul.addr %s282, 20
        %s287 = sadd.s32 %s285, %s286
        %s288 = smul.addr %s287, 8
        %s289 = scalar_lea.vmem %s1, %s288
        %s290 = sadd.s32 %s22, 1
      $region32: #{midscope_conv3d_block.2} parent=23 // pred_fallthru
        _
      // Predicated region
      $region33: #{midscope_conv3d_block.2} parent=23 // pred_check
        %p291 = pneg %p108
      $region34: #{midscope_conv3d_block.2} parent=23 // pred_check_branch
        %293 = sbr.rel (%p291) target = $region36
      $region35: #{midscope_conv3d_block.2} parent=23 // pred_region
        %s294 = sadd.s32 %s22, 2
        %p295 = scmp.lt.s32.totalorder %s21, 1
        %s296 = scalar_select %p295, %s21, 1
        %p297 = scmp.lt.s32.totalorder %s294, 9
        %s298 = scalar_select %p297, %s294, 9
        %s299 = smul.addr %s298, 2
        %s300 = smul.addr %s296, 20
        %s301 = sadd.s32 %s299, %s300
        %s302 = smul.addr %s301, 8
        %s303 = scalar_lea.vmem %s2, %s302
        %s304 = sadd.s32 %s22, 2
      $region36: #{midscope_conv3d_block.2} parent=23 // pred_fallthru
        _
    $region24: #{midscope_conv3d_block.2} parent=5 // pred_fallthru
      _
    %p305 = scmp.le.s32.totalorder 1, %s14
    %p306 = scmp.lt.s32.totalorder %s14, 17
    %p307 = pnand %p305, %p306
    %p308 = pneg %p307
    // Predicated region
    $region37: #{midscope_conv3d_block.2} parent=5 // pred_check
      _
    $region38: #{midscope_conv3d_block.2} parent=5 // pred_check_branch
      %310 = sbr.rel (%p307) target = $region40
    $region39: #{midscope_conv3d_block.2} parent=5 // pred_region
      %s311 = ssub.s32 %s14, 1
      %p312 = scmp.lt.s32.totalorder %s23, 1
      %s313 = scalar_select %p312, %s23, 1
      %p314 = scmp.lt.s32.totalorder %s24, 9
      %s315 = scalar_select %p314, %s24, 9
      %s316 = smul.addr %s315, 2
      %s317 = smul.addr %s313, 20
      %s318 = sadd.s32 %s316, %s317
      %s319 = smul.addr %s318, 8
      %s320 = scalar_lea.vmem %s0, %s319
      %p321 = pneg %p54
      %p322 = pneg %p51
      %s323 = sadd.s32 %s24, 1
      %p324 = scmp.lt.s32.totalorder %s23, 1
      %s325 = scalar_select %p324, %s23, 1
      %p326 = scmp.lt.s32.totalorder %s323, 9
      %s327 = scalar_select %p326, %s323, 9
      %s328 = smul.addr %s327, 2
      %s329 = smul.addr %s325, 20
      %s330 = sadd.s32 %s328, %s329
      %s331 = smul.addr %s330, 8
      %s332 = scalar_lea.vmem %s1, %s331
      %p333 = pneg %p84
      %p334 = pneg %p81
      %s335 = sadd.s32 %s24, 2
      %p336 = scmp.lt.s32.totalorder %s23, 1
      %s337 = scalar_select %p336, %s23, 1
      %p338 = scmp.lt.s32.totalorder %s335, 9
      %s339 = scalar_select %p338, %s335, 9
      %s340 = smul.addr %s339, 2
      %s341 = smul.addr %s337, 20
      %s342 = sadd.s32 %s340, %s341
      %s343 = smul.addr %s342, 8
      %s344 = scalar_lea.vmem %s2, %s343
      %p345 = pneg %p114
      %p346 = pneg %p111
      %p347 = pneg %p135
      %p348 = pneg %p132
      %p349 = pneg %p156
      %p350 = pneg %p153
      %p351 = pneg %p184
      %p352 = pneg %p181
      %p353 = scmp.lt.s32.totalorder %s23, 1
      %s354 = scalar_select %p353, %s23, 1
      %p355 = scmp.lt.s32.totalorder %s24, 7
      %s356 = scalar_select %p355, %s24, 7
      %s357 = smul.addr %s354, 8
      %s358 = sadd.s32 %s356, %s357
      %s359 = smul.addr %s358, 8
      %s360 = scalar_lea.vmem %s5, %s359
      %p361 = pneg %p212
      %p362 = pneg %p209
      %p363 = scmp.lt.s32.totalorder %s23, 1
      %s364 = scalar_select %p363, %s23, 1
      %p365 = scmp.lt.s32.totalorder %s24, 7
      %s366 = scalar_select %p365, %s24, 7
      %s367 = smul.addr %s364, 8
      %s368 = sadd.s32 %s366, %s367
      %s369 = scalar_lea.vmem %s6, %s368
      %p370 = pneg %p240
      %p371 = pneg %p237
      %p372 = scmp.lt.s32.totalorder %s23, 1
      %s373 = scalar_select %p372, %s23, 1
      %p374 = scmp.lt.s32.totalorder %s24, 7
      %s375 = scalar_select %p374, %s24, 7
      %s376 = smul.addr %s373, 8
      %s377 = sadd.s32 %s375, %s376
      %s378 = scalar_lea.vmem %s7, %s377
      %p379 = scmp.lt.s32.totalorder %s23, 1
      %s380 = scalar_select %p379, %s23, 1
      %p381 = scmp.lt.s32.totalorder %s24, 9
      %s382 = scalar_select %p381, %s24, 9
      %s383 = smul.addr %s382, 2
      %s384 = smul.addr %s380, 20
      %s385 = sadd.s32 %s383, %s384
      %s386 = smul.addr %s385, 8
      %s387 = scalar_lea.vmem %s0, %s386
      %s388 = sadd.s32 %s24, 1
      %p389 = scmp.lt.s32.totalorder %s23, 1
      %s390 = scalar_select %p389, %s23, 1
      %p391 = scmp.lt.s32.totalorder %s388, 9
      %s392 = scalar_select %p391, %s388, 9
      %s393 = smul.addr %s392, 2
      %s394 = smul.addr %s390, 20
      %s395 = sadd.s32 %s393, %s394
      %s396 = smul.addr %s395, 8
      %s397 = scalar_lea.vmem %s1, %s396
      %s398 = sadd.s32 %s24, 1
      %s399 = sadd.s32 %s24, 2
      %p400 = scmp.lt.s32.totalorder %s23, 1
      %s401 = scalar_select %p400, %s23, 1
      %p402 = scmp.lt.s32.totalorder %s399, 9
      %s403 = scalar_select %p402, %s399, 9
      %s404 = smul.addr %s403, 2
      %s405 = smul.addr %s401, 20
      %s406 = sadd.s32 %s404, %s405
      %s407 = smul.addr %s406, 8
      %s408 = scalar_lea.vmem %s2, %s407
      %s409 = sadd.s32 %s24, 2
      %p410 = scmp.lt.s32.totalorder %s23, 1
      %s411 = scalar_select %p410, %s23, 1
      %p412 = scmp.lt.s32.totalorder %s24, 7
      %s413 = scalar_select %p412, %s24, 7
      %s414 = smul.addr %s411, 8
      %s415 = sadd.s32 %s413, %s414
      %s416 = smul.addr %s415, 8
      %s417 = scalar_lea.vmem %s5, %s416
      %p418 = scmp.lt.s32.totalorder %s23, 1
      %s419 = scalar_select %p418, %s23, 1
      %p420 = scmp.lt.s32.totalorder %s24, 7
      %s421 = scalar_select %p420, %s24, 7
      %s422 = smul.addr %s419, 8
      %s423 = sadd.s32 %s421, %s422
      %s424 = scalar_lea.vmem %s6, %s423
      %p425 = scmp.lt.s32.totalorder %s23, 1
      %s426 = scalar_select %p425, %s23, 1
      %p427 = scmp.lt.s32.totalorder %s24, 7
      %s428 = scalar_select %p427, %s24, 7
      %s429 = smul.addr %s426, 8
      %s430 = sadd.s32 %s428, %s429
      %s431 = scalar_lea.vmem %s7, %s430
      %v432 = vld [vmem:[%s387] sm:$0xff]
      %v433 = vld [vmem:[%s3] sm:$0xff]
      %v434 = vld [vmem:[%s3 + $0x8] sm:$0xff]
      %v435 = vld [vmem:[%s3 + $0x10] sm:$0xff]
      %v436 = vld [vmem:[%s3 + $0x18] sm:$0xff]
      %v437 = vld [vmem:[%s3 + $0x20] sm:$0xff]
      %v438 = vld [vmem:[%s387 + $0x1] sm:$0xff]
      %s439 = scalar_lea.vmem %s3, 40
      %v440 = vld [vmem:[%s439] sm:$0xff]
      %v441 = vld [vmem:[%s439 + $0x8] sm:$0xff]
      %v442 = vld [vmem:[%s439 + $0x10] sm:$0xff]
      %v443 = vld [vmem:[%s439 + $0x18] sm:$0xff]
      %v444 = vld [vmem:[%s439 + $0x20] sm:$0xff]
      %vm445 = vcmask 326656
      %v447 = vsel %vm445, %v438, 0
      %449 = vmatprep.subr.mxu0 0.0
      %450 = vmatpush1.msra.mxu0 0.0
      %451 = vmatprep.subr.mxu0 0.0
      %452 = vmatpush1.msra.mxu0 0.0
      %453 = vmatprep.subr.mxu0 0.0
      %454 = vmatpush1.msra.mxu0 0.0
      %455 = vmatprep.subr.mxu0 0.0
      %456 = vmatpush1.msra.mxu0 0.0
      %457 = vmatprep.subr.mxu0 0.0
      %458 = vmatpush1.msra.mxu0 0.0
      %459 = vmatprep.subr.mxu0 0.0
      %460 = vmatpush1.msra.mxu0 0.0
      %461 = vmatprep.subr.mxu0 0.0
      %462 = vmatpush1.msra.mxu0 0.0
      %463 = vmatprep.subr.mxu0 0.0
      %464 = vmatpush1.msra.mxu0 0.0
      %465 = vmatprep.subr.mxu0 0.0
      %466 = vmatpush1.msra.mxu0 0.0
      %467 = vmatprep.subr.mxu0 0.0
      %468 = vmatpush1.msra.mxu0 0.0
      %469 = vmatprep.subr.mxu0 0.0
      %470 = vmatpush1.msra.mxu0 0.0
      %471 = vmatprep.subr.mxu0 0.0
      %472 = vmatpush1.msra.mxu0 %v444
      %473 = vmatprep.subr.mxu0 0.0
      %474 = vmatpush1.msra.mxu0 %v443
      %475 = vmatprep.subr.mxu0 0.0
      %476 = vmatpush1.msra.mxu0 %v442
      %477 = vmatprep.subr.mxu0 0.0
      %478 = vmatpush1.msra.mxu0 %v441
      %479 = vmatprep.subr.mxu0 0.0
      %480 = vmatpush1.msra.mxu0 %v440
      %481 = vmatprep.subr.mxu0 0.0
      %482 = vmatpush2.msra.mxu0 0.0
      %483 = vmatprep.subr.mxu0 0.0
      %484 = vmatpush2.msra.mxu0 0.0
      %485 = vmatprep.subr.mxu0 0.0
      %486 = vmatpush2.msra.mxu0 0.0
      %487 = vmatprep.subr.mxu0 0.0
      %488 = vmatpush2.msra.mxu0 0.0
      %489 = vmatprep.subr.mxu0 0.0
      %490 = vmatpush2.msra.mxu0 0.0
      %491 = vmatprep.subr.mxu0 0.0
      %492 = vmatpush2.msra.mxu0 0.0
      %493 = vmatprep.subr.mxu0 0.0
      %494 = vmatpush2.msra.mxu0 0.0
      %495 = vmatprep.subr.mxu0 0.0
      %496 = vmatpush2.msra.mxu0 0.0
      %497 = vmatprep.subr.mxu0 0.0
      %498 = vmatpush2.msra.mxu0 0.0
      %499 = vmatprep.subr.mxu0 0.0
      %500 = vmatpush2.msra.mxu0 0.0
      %501 = vmatprep.subr.mxu0 0.0
      %502 = vmatpush2.msra.mxu0 0.0
      %503 = vmatprep.subr.mxu0 0.0
      %504 = vmatpush2.msra.mxu0 0.0
      %505 = vmatprep.subr.mxu0 0.0
      %506 = vmatpush2.msra.mxu0 0.0
      %507 = vmatprep.subr.mxu0 0.0
      %508 = vmatpush2.msra.mxu0 0.0
      %509 = vmatprep.subr.mxu0 0.0
      %510 = vmatpush2.msra.mxu0 0.0
      %511 = vmatprep.subr.mxu0 0.0
      %512 = vmatpush2.msra.mxu0 0.0
      %513 = vmatprep.mubr.f32.mxu0 0.0
      %514 = vmatmul.mubr.f32.gmra.mxu0 %v447
      %v515 = vpop.f32.mrf.mxu0
      %v516 = vadd.f32 0.0, %v515
      %v517 = vpop.f32.mrf.mxu0
      %518 = vdwg.mxu0
      %v520 = vsel %vm445, %v432, 0
      %522 = vmatprep.subr.mxu0 0.0
      %523 = vmatpush1.msra.mxu0 0.0
      %524 = vmatprep.subr.mxu0 0.0
      %525 = vmatpush1.msra.mxu0 0.0
      %526 = vmatprep.subr.mxu0 0.0
      %527 = vmatpush1.msra.mxu0 0.0
      %528 = vmatprep.subr.mxu0 0.0
      %529 = vmatpush1.msra.mxu0 0.0
      %530 = vmatprep.subr.mxu0 0.0
      %531 = vmatpush1.msra.mxu0 0.0
      %532 = vmatprep.subr.mxu0 0.0
      %533 = vmatpush1.msra.mxu0 0.0
      %534 = vmatprep.subr.mxu0 0.0
      %535 = vmatpush1.msra.mxu0 0.0
      %536 = vmatprep.subr.mxu0 0.0
      %537 = vmatpush1.msra.mxu0 0.0
      %538 = vmatprep.subr.mxu0 0.0
      %539 = vmatpush1.msra.mxu0 0.0
      %540 = vmatprep.subr.mxu0 0.0
      %541 = vmatpush1.msra.mxu0 0.0
      %542 = vmatprep.subr.mxu0 0.0
      %543 = vmatpush1.msra.mxu0 0.0
      %544 = vmatprep.subr.mxu0 0.0
      %545 = vmatpush1.msra.mxu0 %v437
      %546 = vmatprep.subr.mxu0 0.0
      %547 = vmatpush1.msra.mxu0 %v436
      %548 = vmatprep.subr.mxu0 0.0
      %549 = vmatpush1.msra.mxu0 %v435
      %550 = vmatprep.subr.mxu0 0.0
      %551 = vmatpush1.msra.mxu0 %v434
      %552 = vmatprep.subr.mxu0 0.0
      %553 = vmatpush1.msra.mxu0 %v433
      %554 = vmatprep.subr.mxu0 0.0
      %555 = vmatpush2.msra.mxu0 0.0
      %556 = vmatprep.subr.mxu0 0.0
      %557 = vmatpush2.msra.mxu0 0.0
      %558 = vmatprep.subr.mxu0 0.0
      %559 = vmatpush2.msra.mxu0 0.0
      %560 = vmatprep.subr.mxu0 0.0
      %561 = vmatpush2.msra.mxu0 0.0
      %562 = vmatprep.subr.mxu0 0.0
      %563 = vmatpush2.msra.mxu0 0.0
      %564 = vmatprep.subr.mxu0 0.0
      %565 = vmatpush2.msra.mxu0 0.0
      %566 = vmatprep.subr.mxu0 0.0
      %567 = vmatpush2.msra.mxu0 0.0
      %568 = vmatprep.subr.mxu0 0.0
      %569 = vmatpush2.msra.mxu0 0.0
      %570 = vmatprep.subr.mxu0 0.0
      %571 = vmatpush2.msra.mxu0 0.0
      %572 = vmatprep.subr.mxu0 0.0
      %573 = vmatpush2.msra.mxu0 0.0
      %574 = vmatprep.subr.mxu0 0.0
      %575 = vmatpush2.msra.mxu0 0.0
      %576 = vmatprep.subr.mxu0 0.0
      %577 = vmatpush2.msra.mxu0 0.0
      %578 = vmatprep.subr.mxu0 0.0
      %579 = vmatpush2.msra.mxu0 0.0
      %580 = vmatprep.subr.mxu0 0.0
      %581 = vmatpush2.msra.mxu0 0.0
      %582 = vmatprep.subr.mxu0 0.0
      %583 = vmatpush2.msra.mxu0 0.0
      %584 = vmatprep.subr.mxu0 0.0
      %585 = vmatpush2.msra.mxu0 0.0
      %586 = vmatprep.mubr.f32.mxu0 0.0
      %587 = vmatmul.mubr.f32.gmra.mxu0 %v520
      %v588 = vpop.f32.mrf.mxu0
      %v589 = vadd.f32 %v516, %v588
      %v590 = vpop.f32.mrf.mxu0
      %591 = vdwg.mxu0
      %v592 = vld [vmem:[%s387 + $0x2] sm:$0xff]
      %s593 = scalar_lea.vmem %s3, 80
      %v594 = vld [vmem:[%s593] sm:$0xff]
      %v595 = vld [vmem:[%s593 + $0x8] sm:$0xff]
      %v596 = vld [vmem:[%s593 + $0x10] sm:$0xff]
      %v597 = vld [vmem:[%s593 + $0x18] sm:$0xff]
      %v598 = vld [vmem:[%s593 + $0x20] sm:$0xff]
      %v600 = vsel %vm445, %v592, 0
      %602 = vmatprep.subr.mxu0 0.0
      %603 = vmatpush1.msra.mxu0 0.0
      %604 = vmatprep.subr.mxu0 0.0
      %605 = vmatpush1.msra.mxu0 0.0
      %606 = vmatprep.subr.mxu0 0.0
      %607 = vmatpush1.msra.mxu0 0.0
      %608 = vmatprep.subr.mxu0 0.0
      %609 = vmatpush1.msra.mxu0 0.0
      %610 = vmatprep.subr.mxu0 0.0
      %611 = vmatpush1.msra.mxu0 0.0
      %612 = vmatprep.subr.mxu0 0.0
      %613 = vmatpush1.msra.mxu0 0.0
      %614 = vmatprep.subr.mxu0 0.0
      %615 = vmatpush1.msra.mxu0 0.0
      %616 = vmatprep.subr.mxu0 0.0
      %617 = vmatpush1.msra.mxu0 0.0
      %618 = vmatprep.subr.mxu0 0.0
      %619 = vmatpush1.msra.mxu0 0.0
      %620 = vmatprep.subr.mxu0 0.0
      %621 = vmatpush1.msra.mxu0 0.0
      %622 = vmatprep.subr.mxu0 0.0
      %623 = vmatpush1.msra.mxu0 0.0
      %624 = vmatprep.subr.mxu0 0.0
      %625 = vmatpush1.msra.mxu0 %v598
      %626 = vmatprep.subr.mxu0 0.0
      %627 = vmatpush1.msra.mxu0 %v597
      %628 = vmatprep.subr.mxu0 0.0
      %629 = vmatpush1.msra.mxu0 %v596
      %630 = vmatprep.subr.mxu0 0.0
      %631 = vmatpush1.msra.mxu0 %v595
      %632 = vmatprep.subr.mxu0 0.0
      %633 = vmatpush1.msra.mxu0 %v594
      %634 = vmatprep.subr.mxu0 0.0
      %635 = vmatpush2.msra.mxu0 0.0
      %636 = vmatprep.subr.mxu0 0.0
      %637 = vmatpush2.msra.mxu0 0.0
      %638 = vmatprep.subr.mxu0 0.0
      %639 = vmatpush2.msra.mxu0 0.0
      %640 = vmatprep.subr.mxu0 0.0
      %641 = vmatpush2.msra.mxu0 0.0
      %642 = vmatprep.subr.mxu0 0.0
      %643 = vmatpush2.msra.mxu0 0.0
      %644 = vmatprep.subr.mxu0 0.0
      %645 = vmatpush2.msra.mxu0 0.0
      %646 = vmatprep.subr.mxu0 0.0
      %647 = vmatpush2.msra.mxu0 0.0
      %648 = vmatprep.subr.mxu0 0.0
      %649 = vmatpush2.msra.mxu0 0.0
      %650 = vmatprep.subr.mxu0 0.0
      %651 = vmatpush2.msra.mxu0 0.0
      %652 = vmatprep.subr.mxu0 0.0
      %653 = vmatpush2.msra.mxu0 0.0
      %654 = vmatprep.subr.mxu0 0.0
      %655 = vmatpush2.msra.mxu0 0.0
      %656 = vmatprep.subr.mxu0 0.0
      %657 = vmatpush2.msra.mxu0 0.0
      %658 = vmatprep.subr.mxu0 0.0
      %659 = vmatpush2.msra.mxu0 0.0
      %660 = vmatprep.subr.mxu0 0.0
      %661 = vmatpush2.msra.mxu0 0.0
      %662 = vmatprep.subr.mxu0 0.0
      %663 = vmatpush2.msra.mxu0 0.0
      %664 = vmatprep.subr.mxu0 0.0
      %665 = vmatpush2.msra.mxu0 0.0
      %666 = vmatprep.mubr.f32.mxu0 0.0
      %667 = vmatmul.mubr.f32.gmra.mxu0 %v600
      %v668 = vpop.f32.mrf.mxu0
      %v669 = vadd.f32 0.0, %v668
      %v670 = vpop.f32.mrf.mxu0
      %671 = vdwg.mxu0
      %v672 = vadd.f32 %v589, %v669
      %v673 = vld [vmem:[%s397] sm:$0xff]
      %s674 = scalar_lea.vmem %s3, 120
      %v675 = vld [vmem:[%s674] sm:$0xff]
      %v676 = vld [vmem:[%s674 + $0x8] sm:$0xff]
      %v677 = vld [vmem:[%s674 + $0x10] sm:$0xff]
      %v678 = vld [vmem:[%s674 + $0x18] sm:$0xff]
      %v679 = vld [vmem:[%s674 + $0x20] sm:$0xff]
      %v681 = vsel %vm445, %v673, 0
      %683 = vmatprep.subr.mxu0 0.0
      %684 = vmatpush1.msra.mxu0 0.0
      %685 = vmatprep.subr.mxu0 0.0
      %686 = vmatpush1.msra.mxu0 0.0
      %687 = vmatprep.subr.mxu0 0.0
      %688 = vmatpush1.msra.mxu0 0.0
      %689 = vmatprep.subr.mxu0 0.0
      %690 = vmatpush1.msra.mxu0 0.0
      %691 = vmatprep.subr.mxu0 0.0
      %692 = vmatpush1.msra.mxu0 0.0
      %693 = vmatprep.subr.mxu0 0.0
      %694 = vmatpush1.msra.mxu0 0.0
      %695 = vmatprep.subr.mxu0 0.0
      %696 = vmatpush1.msra.mxu0 0.0
      %697 = vmatprep.subr.mxu0 0.0
      %698 = vmatpush1.msra.mxu0 0.0
      %699 = vmatprep.subr.mxu0 0.0
      %700 = vmatpush1.msra.mxu0 0.0
      %701 = vmatprep.subr.mxu0 0.0
      %702 = vmatpush1.msra.mxu0 0.0
      %703 = vmatprep.subr.mxu0 0.0
      %704 = vmatpush1.msra.mxu0 0.0
      %705 = vmatprep.subr.mxu0 0.0
      %706 = vmatpush1.msra.mxu0 %v679
      %707 = vmatprep.subr.mxu0 0.0
      %708 = vmatpush1.msra.mxu0 %v678
      %709 = vmatprep.subr.mxu0 0.0
      %710 = vmatpush1.msra.mxu0 %v677
      %711 = vmatprep.subr.mxu0 0.0
      %712 = vmatpush1.msra.mxu0 %v676
      %713 = vmatprep.subr.mxu0 0.0
      %714 = vmatpush1.msra.mxu0 %v675
      %715 = vmatprep.subr.mxu0 0.0
      %716 = vmatpush2.msra.mxu0 0.0
      %717 = vmatprep.subr.mxu0 0.0
      %718 = vmatpush2.msra.mxu0 0.0
      %719 = vmatprep.subr.mxu0 0.0
      %720 = vmatpush2.msra.mxu0 0.0
      %721 = vmatprep.subr.mxu0 0.0
      %722 = vmatpush2.msra.mxu0 0.0
      %723 = vmatprep.subr.mxu0 0.0
      %724 = vmatpush2.msra.mxu0 0.0
      %725 = vmatprep.subr.mxu0 0.0
      %726 = vmatpush2.msra.mxu0 0.0
      %727 = vmatprep.subr.mxu0 0.0
      %728 = vmatpush2.msra.mxu0 0.0
      %729 = vmatprep.subr.mxu0 0.0
      %730 = vmatpush2.msra.mxu0 0.0
      %731 = vmatprep.subr.mxu0 0.0
      %732 = vmatpush2.msra.mxu0 0.0
      %733 = vmatprep.subr.mxu0 0.0
      %734 = vmatpush2.msra.mxu0 0.0
      %735 = vmatprep.subr.mxu0 0.0
      %736 = vmatpush2.msra.mxu0 0.0
      %737 = vmatprep.subr.mxu0 0.0
      %738 = vmatpush2.msra.mxu0 0.0
      %739 = vmatprep.subr.mxu0 0.0
      %740 = vmatpush2.msra.mxu0 0.0
      %741 = vmatprep.subr.mxu0 0.0
      %742 = vmatpush2.msra.mxu0 0.0
      %743 = vmatprep.subr.mxu0 0.0
      %744 = vmatpush2.msra.mxu0 0.0
      %745 = vmatprep.subr.mxu0 0.0
      %746 = vmatpush2.msra.mxu0 0.0
      %747 = vmatprep.mubr.f32.mxu0 0.0
      %748 = vmatmul.mubr.f32.gmra.mxu0 %v681
      %v749 = vpop.f32.mrf.mxu0
      %v750 = vadd.f32 0.0, %v749
      %v751 = vpop.f32.mrf.mxu0
      %752 = vdwg.mxu0
      %v753 = vadd.f32 %v672, %v750
      %v754 = vld [vmem:[%s397 + $0x1] sm:$0xff]
      %s755 = scalar_lea.vmem %s3, 160
      %v756 = vld [vmem:[%s755] sm:$0xff]
      %v757 = vld [vmem:[%s755 + $0x8] sm:$0xff]
      %v758 = vld [vmem:[%s755 + $0x10] sm:$0xff]
      %v759 = vld [vmem:[%s755 + $0x18] sm:$0xff]
      %v760 = vld [vmem:[%s755 + $0x20] sm:$0xff]
      %v762 = vsel %vm445, %v754, 0
      %764 = vmatprep.subr.mxu0 0.0
      %765 = vmatpush1.msra.mxu0 0.0
      %766 = vmatprep.subr.mxu0 0.0
      %767 = vmatpush1.msra.mxu0 0.0
      %768 = vmatprep.subr.mxu0 0.0
      %769 = vmatpush1.msra.mxu0 0.0
      %770 = vmatprep.subr.mxu0 0.0
      %771 = vmatpush1.msra.mxu0 0.0
      %772 = vmatprep.subr.mxu0 0.0
      %773 = vmatpush1.msra.mxu0 0.0
      %774 = vmatprep.subr.mxu0 0.0
      %775 = vmatpush1.msra.mxu0 0.0
      %776 = vmatprep.subr.mxu0 0.0
      %777 = vmatpush1.msra.mxu0 0.0
      %778 = vmatprep.subr.mxu0 0.0
      %779 = vmatpush1.msra.mxu0 0.0
      %780 = vmatprep.subr.mxu0 0.0
      %781 = vmatpush1.msra.mxu0 0.0
      %782 = vmatprep.subr.mxu0 0.0
      %783 = vmatpush1.msra.mxu0 0.0
      %784 = vmatprep.subr.mxu0 0.0
      %785 = vmatpush1.msra.mxu0 0.0
      %786 = vmatprep.subr.mxu0 0.0
      %787 = vmatpush1.msra.mxu0 %v760
      %788 = vmatprep.subr.mxu0 0.0
      %789 = vmatpush1.msra.mxu0 %v759
      %790 = vmatprep.subr.mxu0 0.0
      %791 = vmatpush1.msra.mxu0 %v758
      %792 = vmatprep.subr.mxu0 0.0
      %793 = vmatpush1.msra.mxu0 %v757
      %794 = vmatprep.subr.mxu0 0.0
      %795 = vmatpush1.msra.mxu0 %v756
      %796 = vmatprep.subr.mxu0 0.0
      %797 = vmatpush2.msra.mxu0 0.0
      %798 = vmatprep.subr.mxu0 0.0
      %799 = vmatpush2.msra.mxu0 0.0
      %800 = vmatprep.subr.mxu0 0.0
      %801 = vmatpush2.msra.mxu0 0.0
      %802 = vmatprep.subr.mxu0 0.0
      %803 = vmatpush2.msra.mxu0 0.0
      %804 = vmatprep.subr.mxu0 0.0
      %805 = vmatpush2.msra.mxu0 0.0
      %806 = vmatprep.subr.mxu0 0.0
      %807 = vmatpush2.msra.mxu0 0.0
      %808 = vmatprep.subr.mxu0 0.0
      %809 = vmatpush2.msra.mxu0 0.0
      %810 = vmatprep.subr.mxu0 0.0
      %811 = vmatpush2.msra.mxu0 0.0
      %812 = vmatprep.subr.mxu0 0.0
      %813 = vmatpush2.msra.mxu0 0.0
      %814 = vmatprep.subr.mxu0 0.0
      %815 = vmatpush2.msra.mxu0 0.0
      %816 = vmatprep.subr.mxu0 0.0
      %817 = vmatpush2.msra.mxu0 0.0
      %818 = vmatprep.subr.mxu0 0.0
      %819 = vmatpush2.msra.mxu0 0.0
      %820 = vmatprep.subr.mxu0 0.0
      %821 = vmatpush2.msra.mxu0 0.0
      %822 = vmatprep.subr.mxu0 0.0
      %823 = vmatpush2.msra.mxu0 0.0
      %824 = vmatprep.subr.mxu0 0.0
      %825 = vmatpush2.msra.mxu0 0.0
      %826 = vmatprep.subr.mxu0 0.0
      %827 = vmatpush2.msra.mxu0 0.0
      %828 = vmatprep.mubr.f32.mxu0 0.0
      %829 = vmatmul.mubr.f32.gmra.mxu0 %v762
      %v830 = vpop.f32.mrf.mxu0
      %v831 = vadd.f32 0.0, %v830
      %v832 = vpop.f32.mrf.mxu0
      %833 = vdwg.mxu0
      %v834 = vadd.f32 %v753, %v831
      %v835 = vld [vmem:[%s397 + $0x2] sm:$0xff]
      %s836 = scalar_lea.vmem %s3, 200
      %v837 = vld [vmem:[%s836] sm:$0xff]
      %v838 = vld [vmem:[%s836 + $0x8] sm:$0xff]
      %v839 = vld [vmem:[%s836 + $0x10] sm:$0xff]
      %v840 = vld [vmem:[%s836 + $0x18] sm:$0xff]
      %v841 = vld [vmem:[%s836 + $0x20] sm:$0xff]
      %v843 = vsel %vm445, %v835, 0
      %845 = vmatprep.subr.mxu0 0.0
      %846 = vmatpush1.msra.mxu0 0.0
      %847 = vmatprep.subr.mxu0 0.0
      %848 = vmatpush1.msra.mxu0 0.0
      %849 = vmatprep.subr.mxu0 0.0
      %850 = vmatpush1.msra.mxu0 0.0
      %851 = vmatprep.subr.mxu0 0.0
      %852 = vmatpush1.msra.mxu0 0.0
      %853 = vmatprep.subr.mxu0 0.0
      %854 = vmatpush1.msra.mxu0 0.0
      %855 = vmatprep.subr.mxu0 0.0
      %856 = vmatpush1.msra.mxu0 0.0
      %857 = vmatprep.subr.mxu0 0.0
      %858 = vmatpush1.msra.mxu0 0.0
      %859 = vmatprep.subr.mxu0 0.0
      %860 = vmatpush1.msra.mxu0 0.0
      %861 = vmatprep.subr.mxu0 0.0
      %862 = vmatpush1.msra.mxu0 0.0
      %863 = vmatprep.subr.mxu0 0.0
      %864 = vmatpush1.msra.mxu0 0.0
      %865 = vmatprep.subr.mxu0 0.0
      %866 = vmatpush1.msra.mxu0 0.0
      %867 = vmatprep.subr.mxu0 0.0
      %868 = vmatpush1.msra.mxu0 %v841
      %869 = vmatprep.subr.mxu0 0.0
      %870 = vmatpush1.msra.mxu0 %v840
      %871 = vmatprep.subr.mxu0 0.0
      %872 = vmatpush1.msra.mxu0 %v839
      %873 = vmatprep.subr.mxu0 0.0
      %874 = vmatpush1.msra.mxu0 %v838
      %875 = vmatprep.subr.mxu0 0.0
      %876 = vmatpush1.msra.mxu0 %v837
      %877 = vmatprep.subr.mxu0 0.0
      %878 = vmatpush2.msra.mxu0 0.0
      %879 = vmatprep.subr.mxu0 0.0
      %880 = vmatpush2.msra.mxu0 0.0
      %881 = vmatprep.subr.mxu0 0.0
      %882 = vmatpush2.msra.mxu0 0.0
      %883 = vmatprep.subr.mxu0 0.0
      %884 = vmatpush2.msra.mxu0 0.0
      %885 = vmatprep.subr.mxu0 0.0
      %886 = vmatpush2.msra.mxu0 0.0
      %887 = vmatprep.subr.mxu0 0.0
      %888 = vmatpush2.msra.mxu0 0.0
      %889 = vmatprep.subr.mxu0 0.0
      %890 = vmatpush2.msra.mxu0 0.0
      %891 = vmatprep.subr.mxu0 0.0
      %892 = vmatpush2.msra.mxu0 0.0
      %893 = vmatprep.subr.mxu0 0.0
      %894 = vmatpush2.msra.mxu0 0.0
      %895 = vmatprep.subr.mxu0 0.0
      %896 = vmatpush2.msra.mxu0 0.0
      %897 = vmatprep.subr.mxu0 0.0
      %898 = vmatpush2.msra.mxu0 0.0
      %899 = vmatprep.subr.mxu0 0.0
      %900 = vmatpush2.msra.mxu0 0.0
      %901 = vmatprep.subr.mxu0 0.0
      %902 = vmatpush2.msra.mxu0 0.0
      %903 = vmatprep.subr.mxu0 0.0
      %904 = vmatpush2.msra.mxu0 0.0
      %905 = vmatprep.subr.mxu0 0.0
      %906 = vmatpush2.msra.mxu0 0.0
      %907 = vmatprep.subr.mxu0 0.0
      %908 = vmatpush2.msra.mxu0 0.0
      %909 = vmatprep.mubr.f32.mxu0 0.0
      %910 = vmatmul.mubr.f32.gmra.mxu0 %v843
      %v911 = vpop.f32.mrf.mxu0
      %v912 = vadd.f32 0.0, %v911
      %v913 = vpop.f32.mrf.mxu0
      %914 = vdwg.mxu0
      %v915 = vadd.f32 %v834, %v912
      %v916 = vld [vmem:[%s408] sm:$0xff]
      %s917 = scalar_lea.vmem %s3, 240
      %v918 = vld [vmem:[%s917] sm:$0xff]
      %v919 = vld [vmem:[%s917 + $0x8] sm:$0xff]
      %v920 = vld [vmem:[%s917 + $0x10] sm:$0xff]
      %v921 = vld [vmem:[%s917 + $0x18] sm:$0xff]
      %v922 = vld [vmem:[%s917 + $0x20] sm:$0xff]
      %v924 = vsel %vm445, %v916, 0
      %926 = vmatprep.subr.mxu0 0.0
      %927 = vmatpush1.msra.mxu0 0.0
      %928 = vmatprep.subr.mxu0 0.0
      %929 = vmatpush1.msra.mxu0 0.0
      %930 = vmatprep.subr.mxu0 0.0
      %931 = vmatpush1.msra.mxu0 0.0
      %932 = vmatprep.subr.mxu0 0.0
      %933 = vmatpush1.msra.mxu0 0.0
      %934 = vmatprep.subr.mxu0 0.0
      %935 = vmatpush1.msra.mxu0 0.0
      %936 = vmatprep.subr.mxu0 0.0
      %937 = vmatpush1.msra.mxu0 0.0
      %938 = vmatprep.subr.mxu0 0.0
      %939 = vmatpush1.msra.mxu0 0.0
      %940 = vmatprep.subr.mxu0 0.0
      %941 = vmatpush1.msra.mxu0 0.0
      %942 = vmatprep.subr.mxu0 0.0
      %943 = vmatpush1.msra.mxu0 0.0
      %944 = vmatprep.subr.mxu0 0.0
      %945 = vmatpush1.msra.mxu0 0.0
      %946 = vmatprep.subr.mxu0 0.0
      %947 = vmatpush1.msra.mxu0 0.0
      %948 = vmatprep.subr.mxu0 0.0
      %949 = vmatpush1.msra.mxu0 %v922
      %950 = vmatprep.subr.mxu0 0.0
      %951 = vmatpush1.msra.mxu0 %v921
      %952 = vmatprep.subr.mxu0 0.0
      %953 = vmatpush1.msra.mxu0 %v920
      %954 = vmatprep.subr.mxu0 0.0
      %955 = vmatpush1.msra.mxu0 %v919
      %956 = vmatprep.subr.mxu0 0.0
      %957 = vmatpush1.msra.mxu0 %v918
      %958 = vmatprep.subr.mxu0 0.0
      %959 = vmatpush2.msra.mxu0 0.0
      %960 = vmatprep.subr.mxu0 0.0
      %961 = vmatpush2.msra.mxu0 0.0
      %962 = vmatprep.subr.mxu0 0.0
      %963 = vmatpush2.msra.mxu0 0.0
      %964 = vmatprep.subr.mxu0 0.0
      %965 = vmatpush2.msra.mxu0 0.0
      %966 = vmatprep.subr.mxu0 0.0
      %967 = vmatpush2.msra.mxu0 0.0
      %968 = vmatprep.subr.mxu0 0.0
      %969 = vmatpush2.msra.mxu0 0.0
      %970 = vmatprep.subr.mxu0 0.0
      %971 = vmatpush2.msra.mxu0 0.0
      %972 = vmatprep.subr.mxu0 0.0
      %973 = vmatpush2.msra.mxu0 0.0
      %974 = vmatprep.subr.mxu0 0.0
      %975 = vmatpush2.msra.mxu0 0.0
      %976 = vmatprep.subr.mxu0 0.0
      %977 = vmatpush2.msra.mxu0 0.0
      %978 = vmatprep.subr.mxu0 0.0
      %979 = vmatpush2.msra.mxu0 0.0
      %980 = vmatprep.subr.mxu0 0.0
      %981 = vmatpush2.msra.mxu0 0.0
      %982 = vmatprep.subr.mxu0 0.0
      %983 = vmatpush2.msra.mxu0 0.0
      %984 = vmatprep.subr.mxu0 0.0
      %985 = vmatpush2.msra.mxu0 0.0
      %986 = vmatprep.subr.mxu0 0.0
      %987 = vmatpush2.msra.mxu0 0.0
      %988 = vmatprep.subr.mxu0 0.0
      %989 = vmatpush2.msra.mxu0 0.0
      %990 = vmatprep.mubr.f32.mxu0 0.0
      %991 = vmatmul.mubr.f32.gmra.mxu0 %v924
      %v992 = vpop.f32.mrf.mxu0
      %v993 = vadd.f32 0.0, %v992
      %v994 = vpop.f32.mrf.mxu0
      %995 = vdwg.mxu0
      %v996 = vadd.f32 %v915, %v993
      %v997 = vld [vmem:[%s408 + $0x1] sm:$0xff]
      %s998 = scalar_lea.vmem %s3, 280
      %v999 = vld [vmem:[%s998] sm:$0xff]
      %v1000 = vld [vmem:[%s998 + $0x8] sm:$0xff]
      %v1001 = vld [vmem:[%s998 + $0x10] sm:$0xff]
      %v1002 = vld [vmem:[%s998 + $0x18] sm:$0xff]
      %v1003 = vld [vmem:[%s998 + $0x20] sm:$0xff]
      %v1005 = vsel %vm445, %v997, 0
      %1007 = vmatprep.subr.mxu0 0.0
      %1008 = vmatpush1.msra.mxu0 0.0
      %1009 = vmatprep.subr.mxu0 0.0
      %1010 = vmatpush1.msra.mxu0 0.0
      %1011 = vmatprep.subr.mxu0 0.0
      %1012 = vmatpush1.msra.mxu0 0.0
      %1013 = vmatprep.subr.mxu0 0.0
      %1014 = vmatpush1.msra.mxu0 0.0
      %1015 = vmatprep.subr.mxu0 0.0
      %1016 = vmatpush1.msra.mxu0 0.0
      %1017 = vmatprep.subr.mxu0 0.0
      %1018 = vmatpush1.msra.mxu0 0.0
      %1019 = vmatprep.subr.mxu0 0.0
      %1020 = vmatpush1.msra.mxu0 0.0
      %1021 = vmatprep.subr.mxu0 0.0
      %1022 = vmatpush1.msra.mxu0 0.0
      %1023 = vmatprep.subr.mxu0 0.0
      %1024 = vmatpush1.msra.mxu0 0.0
      %1025 = vmatprep.subr.mxu0 0.0
      %1026 = vmatpush1.msra.mxu0 0.0
      %1027 = vmatprep.subr.mxu0 0.0
      %1028 = vmatpush1.msra.mxu0 0.0
      %1029 = vmatprep.subr.mxu0 0.0
      %1030 = vmatpush1.msra.mxu0 %v1003
      %1031 = vmatprep.subr.mxu0 0.0
      %1032 = vmatpush1.msra.mxu0 %v1002
      %1033 = vmatprep.subr.mxu0 0.0
      %1034 = vmatpush1.msra.mxu0 %v1001
      %1035 = vmatprep.subr.mxu0 0.0
      %1036 = vmatpush1.msra.mxu0 %v1000
      %1037 = vmatprep.subr.mxu0 0.0
      %1038 = vmatpush1.msra.mxu0 %v999
      %1039 = vmatprep.subr.mxu0 0.0
      %1040 = vmatpush2.msra.mxu0 0.0
      %1041 = vmatprep.subr.mxu0 0.0
      %1042 = vmatpush2.msra.mxu0 0.0
      %1043 = vmatprep.subr.mxu0 0.0
      %1044 = vmatpush2.msra.mxu0 0.0
      %1045 = vmatprep.subr.mxu0 0.0
      %1046 = vmatpush2.msra.mxu0 0.0
      %1047 = vmatprep.subr.mxu0 0.0
      %1048 = vmatpush2.msra.mxu0 0.0
      %1049 = vmatprep.subr.mxu0 0.0
      %1050 = vmatpush2.msra.mxu0 0.0
      %1051 = vmatprep.subr.mxu0 0.0
      %1052 = vmatpush2.msra.mxu0 0.0
      %1053 = vmatprep.subr.mxu0 0.0
      %1054 = vmatpush2.msra.mxu0 0.0
      %1055 = vmatprep.subr.mxu0 0.0
      %1056 = vmatpush2.msra.mxu0 0.0
      %1057 = vmatprep.subr.mxu0 0.0
      %1058 = vmatpush2.msra.mxu0 0.0
      %1059 = vmatprep.subr.mxu0 0.0
      %1060 = vmatpush2.msra.mxu0 0.0
      %1061 = vmatprep.subr.mxu0 0.0
      %1062 = vmatpush2.msra.mxu0 0.0
      %1063 = vmatprep.subr.mxu0 0.0
      %1064 = vmatpush2.msra.mxu0 0.0
      %1065 = vmatprep.subr.mxu0 0.0
      %1066 = vmatpush2.msra.mxu0 0.0
      %1067 = vmatprep.subr.mxu0 0.0
      %1068 = vmatpush2.msra.mxu0 0.0
      %1069 = vmatprep.subr.mxu0 0.0
      %1070 = vmatpush2.msra.mxu0 0.0
      %1071 = vmatprep.mubr.f32.mxu0 0.0
      %1072 = vmatmul.mubr.f32.gmra.mxu0 %v1005
      %v1073 = vpop.f32.mrf.mxu0
      %v1074 = vadd.f32 0.0, %v1073
      %v1075 = vpop.f32.mrf.mxu0
      %1076 = vdwg.mxu0
      %v1077 = vadd.f32 %v996, %v1074
      %v1078 = vld [vmem:[%s408 + $0x2] sm:$0xff]
      %s1079 = scalar_lea.vmem %s3, 320
      %v1080 = vld [vmem:[%s1079] sm:$0xff]
      %v1081 = vld [vmem:[%s1079 + $0x8] sm:$0xff]
      %v1082 = vld [vmem:[%s1079 + $0x10] sm:$0xff]
      %v1083 = vld [vmem:[%s1079 + $0x18] sm:$0xff]
      %v1084 = vld [vmem:[%s1079 + $0x20] sm:$0xff]
      %v1086 = vsel %vm445, %v1078, 0
      %1088 = vmatprep.subr.mxu0 0.0
      %1089 = vmatpush1.msra.mxu0 0.0
      %1090 = vmatprep.subr.mxu0 0.0
      %1091 = vmatpush1.msra.mxu0 0.0
      %1092 = vmatprep.subr.mxu0 0.0
      %1093 = vmatpush1.msra.mxu0 0.0
      %1094 = vmatprep.subr.mxu0 0.0
      %1095 = vmatpush1.msra.mxu0 0.0
      %1096 = vmatprep.subr.mxu0 0.0
      %1097 = vmatpush1.msra.mxu0 0.0
      %1098 = vmatprep.subr.mxu0 0.0
      %1099 = vmatpush1.msra.mxu0 0.0
      %1100 = vmatprep.subr.mxu0 0.0
      %1101 = vmatpush1.msra.mxu0 0.0
      %1102 = vmatprep.subr.mxu0 0.0
      %1103 = vmatpush1.msra.mxu0 0.0
      %1104 = vmatprep.subr.mxu0 0.0
      %1105 = vmatpush1.msra.mxu0 0.0
      %1106 = vmatprep.subr.mxu0 0.0
      %1107 = vmatpush1.msra.mxu0 0.0
      %1108 = vmatprep.subr.mxu0 0.0
      %1109 = vmatpush1.msra.mxu0 0.0
      %1110 = vmatprep.subr.mxu0 0.0
      %1111 = vmatpush1.msra.mxu0 %v1084
      %1112 = vmatprep.subr.mxu0 0.0
      %1113 = vmatpush1.msra.mxu0 %v1083
      %1114 = vmatprep.subr.mxu0 0.0
      %1115 = vmatpush1.msra.mxu0 %v1082
      %1116 = vmatprep.subr.mxu0 0.0
      %1117 = vmatpush1.msra.mxu0 %v1081
      %1118 = vmatprep.subr.mxu0 0.0
      %1119 = vmatpush1.msra.mxu0 %v1080
      %1120 = vmatprep.subr.mxu0 0.0
      %1121 = vmatpush2.msra.mxu0 0.0
      %1122 = vmatprep.subr.mxu0 0.0
      %1123 = vmatpush2.msra.mxu0 0.0
      %1124 = vmatprep.subr.mxu0 0.0
      %1125 = vmatpush2.msra.mxu0 0.0
      %1126 = vmatprep.subr.mxu0 0.0
      %1127 = vmatpush2.msra.mxu0 0.0
      %1128 = vmatprep.subr.mxu0 0.0
      %1129 = vmatpush2.msra.mxu0 0.0
      %1130 = vmatprep.subr.mxu0 0.0
      %1131 = vmatpush2.msra.mxu0 0.0
      %1132 = vmatprep.subr.mxu0 0.0
      %1133 = vmatpush2.msra.mxu0 0.0
      %1134 = vmatprep.subr.mxu0 0.0
      %1135 = vmatpush2.msra.mxu0 0.0
      %1136 = vmatprep.subr.mxu0 0.0
      %1137 = vmatpush2.msra.mxu0 0.0
      %1138 = vmatprep.subr.mxu0 0.0
      %1139 = vmatpush2.msra.mxu0 0.0
      %1140 = vmatprep.subr.mxu0 0.0
      %1141 = vmatpush2.msra.mxu0 0.0
      %1142 = vmatprep.subr.mxu0 0.0
      %1143 = vmatpush2.msra.mxu0 0.0
      %1144 = vmatprep.subr.mxu0 0.0
      %1145 = vmatpush2.msra.mxu0 0.0
      %1146 = vmatprep.subr.mxu0 0.0
      %1147 = vmatpush2.msra.mxu0 0.0
      %1148 = vmatprep.subr.mxu0 0.0
      %1149 = vmatpush2.msra.mxu0 0.0
      %1150 = vmatprep.subr.mxu0 0.0
      %1151 = vmatpush2.msra.mxu0 0.0
      %1152 = vmatprep.mubr.f32.mxu0 0.0
      %1153 = vmatmul.mubr.f32.gmra.mxu0 %v1086
      %v1154 = vpop.f32.mrf.mxu0
      %v1155 = vadd.f32 0.0, %v1154
      %v1156 = vpop.f32.mrf.mxu0
      %1157 = vdwg.mxu0
      %v1158 = vadd.f32 %v1077, %v1155
      %v1159 = vld [vmem:[%s4] sm:$0x1]
      %v1161 = vlaneseq
      %v1162 = vshrl.u32 %v1161, 7
      %v1163 = vsub.s32 0, %v1162
      %v1164 = vrot.slane %v1159, %v1163
      %v1166 = vadd.f32 %v1158, %v1164
      %v1167 = vmax.f32 %v1166, 0.0
      %vm1168 = vcmask 523264
      %1169 = vst.msk [vmem:[%s417] sm:$0xff] %vm1168, %v1167
      %v1170 = vsel %vm1168, %v1167, 0.0
      %v1171 = vrot.slane %v1170, 4
      %v1172 = vadd.f32 %v1170, %v1171
      %v1173 = vrot.slane %v1172, 2
      %v1174 = vadd.f32 %v1172, %v1173
      %v1175 = vrot.slane %v1174, 1
      %v1176 = vadd.f32 %v1174, %v1175
      %vm1177 = vcmask 516096
      %1178 = vst.msk [vmem:[%s424] sm:$0x1] %vm1177, %v1176
      %v1179 = vmul.f32 %v1167, %v1167
      %v1180 = vsel %vm1168, %v1179, 0.0
      %v1181 = vrot.slane %v1180, 4
      %v1182 = vadd.f32 %v1180, %v1181
      %v1183 = vrot.slane %v1182, 2
      %v1184 = vadd.f32 %v1182, %v1183
      %v1185 = vrot.slane %v1184, 1
      %v1186 = vadd.f32 %v1184, %v1185
      %1187 = vst.msk [vmem:[%s431] sm:$0x1] %vm1177, %v1186
      %p1188 = scmp.lt.s32.totalorder %s23, 1
      %s1189 = scalar_select %p1188, %s23, 1
      %p1190 = scmp.lt.s32.totalorder %s24, 7
      %s1191 = scalar_select %p1190, %s24, 7
      %s1192 = smul.addr %s1189, 8
      %s1193 = sadd.s32 %s1191, %s1192
      %s1194 = smul.addr %s1193, 8
      %s1195 = scalar_lea.vmem %s5, %s1194
      %p1196 = scmp.lt.s32.totalorder %s23, 1
      %s1197 = scalar_select %p1196, %s23, 1
      %p1198 = scmp.lt.s32.totalorder %s24, 7
      %s1199 = scalar_select %p1198, %s24, 7
      %s1200 = smul.addr %s1197, 8
      %s1201 = sadd.s32 %s1199, %s1200
      %s1202 = scalar_lea.vmem %s6, %s1201
      %p1203 = scmp.lt.s32.totalorder %s23, 1
      %s1204 = scalar_select %p1203, %s23, 1
      %p1205 = scmp.lt.s32.totalorder %s24, 7
      %s1206 = scalar_select %p1205, %s24, 7
      %s1207 = smul.addr %s1204, 8
      %s1208 = sadd.s32 %s1206, %s1207
      %s1209 = scalar_lea.vmem %s7, %s1208
      // Predicated region
      $region41: #{midscope_conv3d_block.2} parent=39 // pred_check
        %p1210 = pneg %p181
      $region42: #{midscope_conv3d_block.2} parent=39 // pred_check_branch
        %1212 = sbr.rel (%p1210) target = $region44
      $region43: #{midscope_conv3d_block.2} parent=39 // pred_region
        _
      $region44: #{midscope_conv3d_block.2} parent=39 // pred_fallthru
        _
      // Predicated region
      $region45: #{midscope_conv3d_block.2} parent=39 // pred_check
        %p1213 = pneg %p209
      $region46: #{midscope_conv3d_block.2} parent=39 // pred_check_branch
        %1215 = sbr.rel (%p1213) target = $region48
      $region47: #{midscope_conv3d_block.2} parent=39 // pred_region
        _
      $region48: #{midscope_conv3d_block.2} parent=39 // pred_fallthru
        _
      // Predicated region
      $region49: #{midscope_conv3d_block.2} parent=39 // pred_check
        %p1216 = pneg %p237
      $region50: #{midscope_conv3d_block.2} parent=39 // pred_check_branch
        %1218 = sbr.rel (%p1216) target = $region52
      $region51: #{midscope_conv3d_block.2} parent=39 // pred_region
        _
      $region52: #{midscope_conv3d_block.2} parent=39 // pred_fallthru
        _
    $region40: #{midscope_conv3d_block.2} parent=5 // pred_fallthru
      _
    %p1219 = scmp.le.s32.totalorder 2, %s14
    // Predicated region
    $region53: #{midscope_conv3d_block.2} parent=5 // pred_check
      %p1220 = pneg %p1219
    $region54: #{midscope_conv3d_block.2} parent=5 // pred_check_branch
      %1222 = sbr.rel (%p1220) target = $region56
    $region55: #{midscope_conv3d_block.2} parent=5 // pred_region
      %s1223 = ssub.s32 %s14, 2
      // Predicated region
      $region57: #{midscope_conv3d_block.2} parent=55 // pred_check
        %p1224 = pneg %p187
      $region58: #{midscope_conv3d_block.2} parent=55 // pred_check_branch
        %1226 = sbr.rel (%p1224) target = $region60
      $region59: #{midscope_conv3d_block.2} parent=55 // pred_region
        %p1227 = scmp.lt.s32.totalorder %s25, 1
        %s1228 = scalar_select %p1227, %s25, 1
        %p1229 = scmp.lt.s32.totalorder %s26, 7
        %s1230 = scalar_select %p1229, %s26, 7
        %s1231 = smul.addr %s1228, 8
        %s1232 = sadd.s32 %s1230, %s1231
        %s1233 = smul.addr %s1232, 8
        %s1234 = scalar_lea.vmem %s5, %s1233
      $region60: #{midscope_conv3d_block.2} parent=55 // pred_fallthru
        _
      // Predicated region
      $region61: #{midscope_conv3d_block.2} parent=55 // pred_check
        %p1235 = pneg %p215
      $region62: #{midscope_conv3d_block.2} parent=55 // pred_check_branch
        %1237 = sbr.rel (%p1235) target = $region64
      $region63: #{midscope_conv3d_block.2} parent=55 // pred_region
        %p1238 = scmp.lt.s32.totalorder %s25, 1
        %s1239 = scalar_select %p1238, %s25, 1
        %p1240 = scmp.lt.s32.totalorder %s26, 7
        %s1241 = scalar_select %p1240, %s26, 7
        %s1242 = smul.addr %s1239, 8
        %s1243 = sadd.s32 %s1241, %s1242
        %s1244 = scalar_lea.vmem %s6, %s1243
      $region64: #{midscope_conv3d_block.2} parent=55 // pred_fallthru
        _
      // Predicated region
      $region65: #{midscope_conv3d_block.2} parent=55 // pred_check
        %p1245 = pneg %p243
      $region66: #{midscope_conv3d_block.2} parent=55 // pred_check_branch
        %1247 = sbr.rel (%p1245) target = $region68
      $region67: #{midscope_conv3d_block.2} parent=55 // pred_region
        %p1248 = scmp.lt.s32.totalorder %s25, 1
        %s1249 = scalar_select %p1248, %s25, 1
        %p1250 = scmp.lt.s32.totalorder %s26, 7
        %s1251 = scalar_select %p1250, %s26, 7
        %s1252 = smul.addr %s1249, 8
        %s1253 = sadd.s32 %s1251, %s1252
        %s1254 = scalar_lea.vmem %s7, %s1253
      $region68: #{midscope_conv3d_block.2} parent=55 // pred_fallthru
        _
    $region56: #{midscope_conv3d_block.2} parent=5 // pred_fallthru
      _
  $region6: #{midscope_conv3d_block.2} parent=0 // loop_footer
    %s18 = sadd.s32 1, %s14
  $region7: #{midscope_conv3d_block.2} parent=0 // loop_footer_branch
    %13 = sbr.rel target = $region3
  $region8: #{midscope_conv3d_block.2} parent=0 // loop_exit
    _

// kernel: midscope_conv3d_block.3
$region0: #{midscope_conv3d_block.3}
  #allocation0 [shape = 'u32[]', space=smem, size = 0x4, offset = 0x4, fixed_abs, tag = 'smem constant byte address 0x4 - core index']
  #allocation1 [shape = 'u32[144,128]{1,0:T(1,128)}', space=vmem, size = 0x12000, scoped, tag = 'internal scratch']
  %s0 = inlined_call_operand.vmem [shape: f32[2,12,12,96], index: 0, kind: input, shape index: {}, may-alias: {0,1,2}]
  %s1 = inlined_call_operand.vmem [shape: f32[2,12,12,96], index: 1, kind: input, shape index: {}, may-alias: {0,1,2}]
  %s2 = inlined_call_operand.vmem [shape: f32[2,12,12,96], index: 2, kind: input, shape index: {}, may-alias: {0,1,2}]
  %s3 = inlined_call_operand.vmem [shape: f32[9,96,64], index: 3, kind: input, shape index: {}]
  %s4 = inlined_call_operand.vmem [shape: f32[1,64], index: 4, kind: input, shape index: {}]
  %s5 = inlined_call_operand.vmem [shape: f32[2,8,8,64], index: 5, kind: output, shape index: {0}]
  %s6 = inlined_call_operand.vmem [shape: f32[2,8,1,64], index: 6, kind: output, shape index: {1}]
  %s7 = inlined_call_operand.vmem [shape: f32[2,8,1,64], index: 7, kind: output, shape index: {2}]
  %8 = xla_tuple %s5, %s6, %s7
  %s9 = sld [smem:[#allocation0]]
  $region69: #{midscope_conv3d_block.3} parent=0
    _
  %s11 = ssub.s32 1, %s9
  %s12 = scalar_select 0, %s11, %s9
  loop: start=0, step=1, limit=18
  $region2: #{midscope_conv3d_block.3} parent=0 // loop_pre_header
    _
  $region3: #{midscope_conv3d_block.3} parent=0 // loop_header
    %s14 = sphi 0, %s18
    %p15 = scmp.ge.s32.totalorder %s14, 18
    %s21 = sphi 0, %s33
    %s22 = sphi 0, %s29
    %s23 = sphi 0, %s21
    %s24 = sphi 0, %s22
    %s25 = sphi 0, %s23
    %s26 = sphi 0, %s24
    %s38 = sphi 0, %s40
    %s41 = sphi 0, %s38
    %s42 = sphi 0, %s41
    %s58 = sphi 0, %s42
    %s68 = sphi 0, %s70
    %s71 = sphi 0, %s68
    %s72 = sphi 0, %s71
    %s88 = sphi 0, %s72
    %s98 = sphi 0, %s100
    %s101 = sphi 0, %s98
    %s102 = sphi 0, %s101
    %s118 = sphi 0, %s102
    %s122 = sphi 0, %s122
    %s124 = sphi 0, %s122
    %s125 = sphi 0, %s124
    %s139 = sphi 0, %s125
    %s143 = sphi 0, %s143
    %s145 = sphi 0, %s143
    %s146 = sphi 0, %s145
    %s160 = sphi 0, %s146
    %s168 = sphi 0, %s170
    %s171 = sphi 0, %s168
    %s172 = sphi 0, %s171
    %s188 = sphi 0, %s172
    %s196 = sphi 0, %s198
    %s199 = sphi 0, %s196
    %s200 = sphi 0, %s199
    %s216 = sphi 0, %s200
    %s224 = sphi 0, %s226
    %s227 = sphi 0, %s224
    %s228 = sphi 0, %s227
    %s244 = sphi 0, %s228
  $region4: #{midscope_conv3d_block.3} parent=0 // loop_header_branch
    %17 = sbr.rel (%p15) target = $region8
  $region5: #{midscope_conv3d_block.3} parent=0 // loop_body
    %s19 = ssub.s32 %s14, 1
    %s20 = ssub.s32 %s14, 2
    %s27 = sadd.s32 1, %s22
    %p28 = scmp.ge.s32.totalorder %s27, 8
    %s29 = scalar_select %p28, 0, %s27
    %s30 = sadd.s32 1, %s21
    %s31 = scalar_select %p28, %s30, %s21
    %p32 = scmp.ge.s32.totalorder %s31, 2
    %s33 = scalar_select %p32, 0, %s31
    %s34 = ssub.s32 %s21, %s33
    %s35 = ssub.s32 %s22, %s29
    %s36 = sor.u32 %s34, %s35
    %p37 = scmp.eq.s32.totalorder %s36, 0
    %s39 = sadd.s32 %s38, 1
    %s40 = scalar_select %p37, %s38, %s39
    %p43 = pneg %p37
    %p44 = scmp.eq.s32.totalorder %s14, 15
    %p45 = por %p43, %p44
    %p46 = scmp.ne.s32.totalorder %s38, %s41
    %p47 = scmp.eq.s32.totalorder %s14, 0
    %p48 = por %p46, %p47
    %p49 = scmp.ne.s32.totalorder %s38, %s41
    %p50 = scmp.eq.s32.totalorder %s19, 15
    %p51 = por %p49, %p50
    %p52 = scmp.ne.s32.totalorder %s41, %s42
    %p53 = scmp.eq.s32.totalorder %s19, 0
    %p54 = por %p52, %p53
    %p55 = scmp.ne.s32.totalorder %s41, %s42
    %p56 = scmp.eq.s32.totalorder %s20, 15
    %p57 = por %p55, %p56
    %p59 = scmp.ne.s32.totalorder %s42, %s58
    %p60 = scmp.eq.s32.totalorder %s20, 0
    %p61 = por %p59, %p60
    %s62 = sadd.s32 %s22, 2
    %s63 = sadd.s32 %s29, 2
    %s64 = ssub.s32 %s21, %s33
    %s65 = ssub.s32 %s62, %s63
    %s66 = sor.u32 %s64, %s65
    %p67 = scmp.eq.s32.totalorder %s66, 0
    %s69 = sadd.s32 %s68, 1
    %s70 = scalar_select %p67, %s68, %s69
    %p73 = pneg %p67
    %p74 = scmp.eq.s32.totalorder %s14, 15
    %p75 = por %p73, %p74
    %p76 = scmp.ne.s32.totalorder %s68, %s71
    %p77 = scmp.eq.s32.totalorder %s14, 0
    %p78 = por %p76, %p77
    %p79 = scmp.ne.s32.totalorder %s68, %s71
    %p80 = scmp.eq.s32.totalorder %s19, 15
    %p81 = por %p79, %p80
    %p82 = scmp.ne.s32.totalorder %s71, %s72
    %p83 = scmp.eq.s32.totalorder %s19, 0
    %p84 = por %p82, %p83
    %p85 = scmp.ne.s32.totalorder %s71, %s72
    %p86 = scmp.eq.s32.totalorder %s20, 15
    %p87 = por %p85, %p86
    %p89 = scmp.ne.s32.totalorder %s72, %s88
    %p90 = scmp.eq.s32.totalorder %s20, 0
    %p91 = por %p89, %p90
    %s92 = sadd.s32 %s22, 4
    %s93 = sadd.s32 %s29, 4
    %s94 = ssub.s32 %s21, %s33
    %s95 = ssub.s32 %s92, %s93
    %s96 = sor.u32 %s94, %s95
    %p97 = scmp.eq.s32.totalorder %s96, 0
    %s99 = sadd.s32 %s98, 1
    %s100 = scalar_select %p97, %s98, %s99
    %p103 = pneg %p97
    %p104 = scmp.eq.s32.totalorder %s14, 15
    %p105 = por %p103, %p104
    %p106 = scmp.ne.s32.totalorder %s98, %s101
    %p107 = scmp.eq.s32.totalorder %s14, 0
    %p108 = por %p106, %p107
    %p109 = scmp.ne.s32.totalorder %s98, %s101
    %p110 = scmp.eq.s32.totalorder %s19, 15
    %p111 = por %p109, %p110
    %p112 = scmp.ne.s32.totalorder %s101, %s102
    %p113 = scmp.eq.s32.totalorder %s19, 0
    %p114 = por %p112, %p113
    %p115 = scmp.ne.s32.totalorder %s101, %s102
    %p116 = scmp.eq.s32.totalorder %s20, 15
    %p117 = por %p115, %p116
    %p119 = scmp.ne.s32.totalorder %s102, %s118
    %p120 = scmp.eq.s32.totalorder %s20, 0
    %p121 = por %p119, %p120
    %s123 = sadd.s32 %s122, 1
    %p126 = scmp.eq.s32.totalorder %s14, 15
    %p127 = scmp.ne.s32.totalorder %s122, %s124
    %p128 = scmp.eq.s32.totalorder %s14, 0
    %p129 = por %p127, %p128
    %p130 = scmp.ne.s32.totalorder %s122, %s124
    %p131 = scmp.eq.s32.totalorder %s19, 15
    %p132 = por %p130, %p131
    %p133 = scmp.ne.s32.totalorder %s124, %s125
    %p134 = scmp.eq.s32.totalorder %s19, 0
    %p135 = por %p133, %p134
    %p136 = scmp.ne.s32.totalorder %s124, %s125
    %p137 = scmp.eq.s32.totalorder %s20, 15
    %p138 = por %p136, %p137
    %p140 = scmp.ne.s32.totalorder %s125, %s139
    %p141 = scmp.eq.s32.totalorder %s20, 0
    %p142 = por %p140, %p141
    %s144 = sadd.s32 %s143, 1
    %p147 = scmp.eq.s32.totalorder %s14, 15
    %p148 = scmp.ne.s32.totalorder %s143, %s145
    %p149 = scmp.eq.s32.totalorder %s14, 0
    %p150 = por %p148, %p149
    %p151 = scmp.ne.s32.totalorder %s143, %s145
    %p152 = scmp.eq.s32.totalorder %s19, 15
    %p153 = por %p151, %p152
    %p154 = scmp.ne.s32.totalorder %s145, %s146
    %p155 = scmp.eq.s32.totalorder %s19, 0
    %p156 = por %p154, %p155
    %p157 = scmp.ne.s32.totalorder %s145, %s146
    %p158 = scmp.eq.s32.totalorder %s20, 15
    %p159 = por %p157, %p158
    %p161 = scmp.ne.s32.totalorder %s146, %s160
    %p162 = scmp.eq.s32.totalorder %s20, 0
    %p163 = por %p161, %p162
    %s164 = ssub.s32 %s21, %s33
    %s165 = ssub.s32 %s22, %s29
    %s166 = sor.u32 %s164, %s165
    %p167 = scmp.eq.s32.totalorder %s166, 0
    %s169 = sadd.s32 %s168, 1
    %s170 = scalar_select %p167, %s168, %s169
    %p173 = pneg %p167
    %p174 = scmp.eq.s32.totalorder %s14, 15
    %p175 = por %p173, %p174
    %p176 = scmp.ne.s32.totalorder %s168, %s171
    %p177 = scmp.eq.s32.totalorder %s14, 0
    %p178 = por %p176, %p177
    %p179 = scmp.ne.s32.totalorder %s168, %s171
    %p180 = scmp.eq.s32.totalorder %s19, 15
    %p181 = por %p179, %p180
    %p182 = scmp.ne.s32.totalorder %s171, %s172
    %p183 = scmp.eq.s32.totalorder %s19, 0
    %p184 = por %p182, %p183
    %p185 = scmp.ne.s32.totalorder %s171, %s172
    %p186 = scmp.eq.s32.totalorder %s20, 15
    %p187 = por %p185, %p186
    %p189 = scmp.ne.s32.totalorder %s172, %s188
    %p190 = scmp.eq.s32.totalorder %s20, 0
    %p191 = por %p189, %p190
    %s192 = ssub.s32 %s21, %s33
    %s193 = ssub.s32 %s22, %s29
    %s194 = sor.u32 %s192, %s193
    %p195 = scmp.eq.s32.totalorder %s194, 0
    %s197 = sadd.s32 %s196, 1
    %s198 = scalar_select %p195, %s196, %s197
    %p201 = pneg %p195
    %p202 = scmp.eq.s32.totalorder %s14, 15
    %p203 = por %p201, %p202
    %p204 = scmp.ne.s32.totalorder %s196, %s199
    %p205 = scmp.eq.s32.totalorder %s14, 0
    %p206 = por %p204, %p205
    %p207 = scmp.ne.s32.totalorder %s196, %s199
    %p208 = scmp.eq.s32.totalorder %s19, 15
    %p209 = por %p207, %p208
    %p210 = scmp.ne.s32.totalorder %s199, %s200
    %p211 = scmp.eq.s32.totalorder %s19, 0
    %p212 = por %p210, %p211
    %p213 = scmp.ne.s32.totalorder %s199, %s200
    %p214 = scmp.eq.s32.totalorder %s20, 15
    %p215 = por %p213, %p214
    %p217 = scmp.ne.s32.totalorder %s200, %s216
    %p218 = scmp.eq.s32.totalorder %s20, 0
    %p219 = por %p217, %p218
    %s220 = ssub.s32 %s21, %s33
    %s221 = ssub.s32 %s22, %s29
    %s222 = sor.u32 %s220, %s221
    %p223 = scmp.eq.s32.totalorder %s222, 0
    %s225 = sadd.s32 %s224, 1
    %s226 = scalar_select %p223, %s224, %s225
    %p229 = pneg %p223
    %p230 = scmp.eq.s32.totalorder %s14, 15
    %p231 = por %p229, %p230
    %p232 = scmp.ne.s32.totalorder %s224, %s227
    %p233 = scmp.eq.s32.totalorder %s14, 0
    %p234 = por %p232, %p233
    %p235 = scmp.ne.s32.totalorder %s224, %s227
    %p236 = scmp.eq.s32.totalorder %s19, 15
    %p237 = por %p235, %p236
    %p238 = scmp.ne.s32.totalorder %s227, %s228
    %p239 = scmp.eq.s32.totalorder %s19, 0
    %p240 = por %p238, %p239
    %p241 = scmp.ne.s32.totalorder %s227, %s228
    %p242 = scmp.eq.s32.totalorder %s20, 15
    %p243 = por %p241, %p242
    %p245 = scmp.ne.s32.totalorder %s228, %s244
    %p246 = scmp.eq.s32.totalorder %s20, 0
    %p247 = por %p245, %p246
    %p248 = scmp.le.s32.totalorder 1, %s14
    %p249 = scmp.lt.s32.totalorder %s14, 17
    %p250 = pnand %p248, %p249
    %p251 = pneg %p250
    // Predicated region
    $region9: #{midscope_conv3d_block.3} parent=5 // pred_check
      _
    $region10: #{midscope_conv3d_block.3} parent=5 // pred_check_branch
      %253 = sbr.rel (%p250) target = $region12
    $region11: #{midscope_conv3d_block.3} parent=5 // pred_region
      %s254 = ssub.s32 %s14, 1
      // Predicated region
      $region13: #{midscope_conv3d_block.3} parent=11 // pred_check
        %p255 = pneg %p135
      $region14: #{midscope_conv3d_block.3} parent=11 // pred_check_branch
        %257 = sbr.rel (%p255) target = $region16
      $region15: #{midscope_conv3d_block.3} parent=11 // pred_region
        _
      $region16: #{midscope_conv3d_block.3} parent=11 // pred_fallthru
        _
      // Predicated region
      $region17: #{midscope_conv3d_block.3} parent=11 // pred_check
        %p258 = pneg %p156
      $region18: #{midscope_conv3d_block.3} parent=11 // pred_check_branch
        %260 = sbr.rel (%p258) target = $region20
      $region19: #{midscope_conv3d_block.3} parent=11 // pred_region
        _
      $region20: #{midscope_conv3d_block.3} parent=11 // pred_fallthru
        _
    $region12: #{midscope_conv3d_block.3} parent=5 // pred_fallthru
      _
    %p261 = scmp.lt.s32.totalorder %s14, 16
    // Predicated region
    $region21: #{midscope_conv3d_block.3} parent=5 // pred_check
      %p262 = pneg %p261
    $region22: #{midscope_conv3d_block.3} parent=5 // pred_check_branch
      %264 = sbr.rel (%p262) target = $region24
    $region23: #{midscope_conv3d_block.3} parent=5 // pred_region
      // Predicated region
      $region25: #{midscope_conv3d_block.3} parent=23 // pred_check
        %p265 = pneg %p48
      $region26: #{midscope_conv3d_block.3} parent=23 // pred_check_branch
        %267 = sbr.rel (%p265) target = $region28
      $region27: #{midscope_conv3d_block.3} parent=23 // pred_region
        %p268 = scmp.lt.s32.totalorder %s21, 1
        %s269 = scalar_select %p268, %s21, 1
        %p270 = scmp.lt.s32.totalorder %s22, 11
        %s271 = scalar_select %p270, %s22, 11
        %s272 = smul.addr %s271, 2
        %s273 = smul.addr %s269, 24
        %s274 = sadd.s32 %s272, %s273
        %s275 = smul.addr %s274, 8
        %s276 = scalar_lea.vmem %s0, %s275
      $region28: #{midscope_conv3d_block.3} parent=23 // pred_fallthru
        _
      // Predicated region
      $region29: #{midscope_conv3d_block.3} parent=23 // pred_check
        %p277 = pneg %p78
      $region30: #{midscope_conv3d_block.3} parent=23 // pred_check_branch
        %279 = sbr.rel (%p277) target = $region32
      $region31: #{midscope_conv3d_block.3} parent=23 // pred_region
        %s280 = sadd.s32 %s22, 2
        %p281 = scmp.lt.s32.totalorder %s21, 1
        %s282 = scalar_select %p281, %s21, 1
        %p283 = scmp.lt.s32.totalorder %s280, 11
        %s284 = scalar_select %p283, %s280, 11
        %s285 = smul.addr %s284, 2
        %s286 = smul.addr %s282, 24
        %s287 = sadd.s32 %s285, %s286
        %s288 = smul.addr %s287, 8
        %s289 = scalar_lea.vmem %s1, %s288
        %s290 = sadd.s32 %s22, 2
      $region32: #{midscope_conv3d_block.3} parent=23 // pred_fallthru
        _
      // Predicated region
      $region33: #{midscope_conv3d_block.3} parent=23 // pred_check
        %p291 = pneg %p108
      $region34: #{midscope_conv3d_block.3} parent=23 // pred_check_branch
        %293 = sbr.rel (%p291) target = $region36
      $region35: #{midscope_conv3d_block.3} parent=23 // pred_region
        %s294 = sadd.s32 %s22, 4
        %p295 = scmp.lt.s32.totalorder %s21, 1
        %s296 = scalar_select %p295, %s21, 1
        %p297 = scmp.lt.s32.totalorder %s294, 11
        %s298 = scalar_select %p297, %s294, 11
        %s299 = smul.addr %s298, 2
        %s300 = smul.addr %s296, 24
        %s301 = sadd.s32 %s299, %s300
        %s302 = smul.addr %s301, 8
        %s303 = scalar_lea.vmem %s2, %s302
        %s304 = sadd.s32 %s22, 4
      $region36: #{midscope_conv3d_block.3} parent=23 // pred_fallthru
        _
    $region24: #{midscope_conv3d_block.3} parent=5 // pred_fallthru
      _
    %p305 = scmp.le.s32.totalorder 1, %s14
    %p306 = scmp.lt.s32.totalorder %s14, 17
    %p307 = pnand %p305, %p306
    %p308 = pneg %p307
    // Predicated region
    $region37: #{midscope_conv3d_block.3} parent=5 // pred_check
      _
    $region38: #{midscope_conv3d_block.3} parent=5 // pred_check_branch
      %310 = sbr.rel (%p307) target = $region40
    $region39: #{midscope_conv3d_block.3} parent=5 // pred_region
      %s311 = ssub.s32 %s14, 1
      %p312 = scmp.lt.s32.totalorder %s23, 1
      %s313 = scalar_select %p312, %s23, 1
      %p314 = scmp.lt.s32.totalorder %s24, 11
      %s315 = scalar_select %p314, %s24, 11
      %s316 = smul.addr %s315, 2
      %s317 = smul.addr %s313, 24
      %s318 = sadd.s32 %s316, %s317
      %s319 = smul.addr %s318, 8
      %s320 = scalar_lea.vmem %s0, %s319
      %p321 = pneg %p54
      %p322 = pneg %p51
      %s323 = sadd.s32 %s24, 2
      %p324 = scmp.lt.s32.totalorder %s23, 1
      %s325 = scalar_select %p324, %s23, 1
      %p326 = scmp.lt.s32.totalorder %s323, 11
      %s327 = scalar_select %p326, %s323, 11
      %s328 = smul.addr %s327, 2
      %s329 = smul.addr %s325, 24
      %s330 = sadd.s32 %s328, %s329
      %s331 = smul.addr %s330, 8
      %s332 = scalar_lea.vmem %s1, %s331
      %p333 = pneg %p84
      %p334 = pneg %p81
      %s335 = sadd.s32 %s24, 4
      %p336 = scmp.lt.s32.totalorder %s23, 1
      %s337 = scalar_select %p336, %s23, 1
      %p338 = scmp.lt.s32.totalorder %s335, 11
      %s339 = scalar_select %p338, %s335, 11
      %s340 = smul.addr %s339, 2
      %s341 = smul.addr %s337, 24
      %s342 = sadd.s32 %s340, %s341
      %s343 = smul.addr %s342, 8
      %s344 = scalar_lea.vmem %s2, %s343
      %p345 = pneg %p114
      %p346 = pneg %p111
      %p347 = pneg %p135
      %p348 = pneg %p132
      %p349 = pneg %p156
      %p350 = pneg %p153
      %p351 = pneg %p184
      %p352 = pneg %p181
      %p353 = scmp.lt.s32.totalorder %s23, 1
      %s354 = scalar_select %p353, %s23, 1
      %p355 = scmp.lt.s32.totalorder %s24, 7
      %s356 = scalar_select %p355, %s24, 7
      %s357 = smul.addr %s354, 8
      %s358 = sadd.s32 %s356, %s357
      %s359 = smul.addr %s358, 8
      %s360 = scalar_lea.vmem %s5, %s359
      %p361 = pneg %p212
      %p362 = pneg %p209
      %p363 = scmp.lt.s32.totalorder %s23, 1
      %s364 = scalar_select %p363, %s23, 1
      %p365 = scmp.lt.s32.totalorder %s24, 7
      %s366 = scalar_select %p365, %s24, 7
      %s367 = smul.addr %s364, 8
      %s368 = sadd.s32 %s366, %s367
      %s369 = scalar_lea.vmem %s6, %s368
      %p370 = pneg %p240
      %p371 = pneg %p237
      %p372 = scmp.lt.s32.totalorder %s23, 1
      %s373 = scalar_select %p372, %s23, 1
      %p374 = scmp.lt.s32.totalorder %s24, 7
      %s375 = scalar_select %p374, %s24, 7
      %s376 = smul.addr %s373, 8
      %s377 = sadd.s32 %s375, %s376
      %s378 = scalar_lea.vmem %s7, %s377
      %p379 = scmp.lt.s32.totalorder %s23, 1
      %s380 = scalar_select %p379, %s23, 1
      %p381 = scmp.lt.s32.totalorder %s24, 11
      %s382 = scalar_select %p381, %s24, 11
      %s383 = smul.addr %s382, 2
      %s384 = smul.addr %s380, 24
      %s385 = sadd.s32 %s383, %s384
      %s386 = smul.addr %s385, 8
      %s387 = scalar_lea.vmem %s0, %s386
      %s388 = sadd.s32 %s24, 2
      %p389 = scmp.lt.s32.totalorder %s23, 1
      %s390 = scalar_select %p389, %s23, 1
      %p391 = scmp.lt.s32.totalorder %s388, 11
      %s392 = scalar_select %p391, %s388, 11
      %s393 = smul.addr %s392, 2
      %s394 = smul.addr %s390, 24
      %s395 = sadd.s32 %s393, %s394
      %s396 = smul.addr %s395, 8
      %s397 = scalar_lea.vmem %s1, %s396
      %s398 = sadd.s32 %s24, 2
      %s399 = sadd.s32 %s24, 4
      %p400 = scmp.lt.s32.totalorder %s23, 1
      %s401 = scalar_select %p400, %s23, 1
      %p402 = scmp.lt.s32.totalorder %s399, 11
      %s403 = scalar_select %p402, %s399, 11
      %s404 = smul.addr %s403, 2
      %s405 = smul.addr %s401, 24
      %s406 = sadd.s32 %s404, %s405
      %s407 = smul.addr %s406, 8
      %s408 = scalar_lea.vmem %s2, %s407
      %s409 = sadd.s32 %s24, 4
      %p410 = scmp.lt.s32.totalorder %s23, 1
      %s411 = scalar_select %p410, %s23, 1
      %p412 = scmp.lt.s32.totalorder %s24, 7
      %s413 = scalar_select %p412, %s24, 7
      %s414 = smul.addr %s411, 8
      %s415 = sadd.s32 %s413, %s414
      %s416 = smul.addr %s415, 8
      %s417 = scalar_lea.vmem %s5, %s416
      %p418 = scmp.lt.s32.totalorder %s23, 1
      %s419 = scalar_select %p418, %s23, 1
      %p420 = scmp.lt.s32.totalorder %s24, 7
      %s421 = scalar_select %p420, %s24, 7
      %s422 = smul.addr %s419, 8
      %s423 = sadd.s32 %s421, %s422
      %s424 = scalar_lea.vmem %s6, %s423
      %p425 = scmp.lt.s32.totalorder %s23, 1
      %s426 = scalar_select %p425, %s23, 1
      %p427 = scmp.lt.s32.totalorder %s24, 7
      %s428 = scalar_select %p427, %s24, 7
      %s429 = smul.addr %s426, 8
      %s430 = sadd.s32 %s428, %s429
      %s431 = scalar_lea.vmem %s7, %s430
      %v432 = vld [vmem:[%s387] sm:$0xff]
      %v433 = vld [vmem:[%s3] sm:$0xff]
      %v434 = vld [vmem:[%s3 + $0x8] sm:$0xff]
      %v435 = vld [vmem:[%s3 + $0x10] sm:$0xff]
      %v436 = vld [vmem:[%s3 + $0x18] sm:$0xff]
      %v437 = vld [vmem:[%s3 + $0x20] sm:$0xff]
      %v438 = vld [vmem:[%s3 + $0x28] sm:$0xff]
      %v439 = vld [vmem:[%s3 + $0x30] sm:$0xff]
      %v440 = vld [vmem:[%s3 + $0x38] sm:$0xff]
      %v441 = vld [vmem:[%s3 + $0x40] sm:$0xff]
      %v442 = vld [vmem:[%s3 + $0x48] sm:$0xff]
      %v443 = vld [vmem:[%s3 + $0x50] sm:$0xff]
      %v444 = vld [vmem:[%s3 + $0x58] sm:$0xff]
      %v445 = vld [vmem:[%s387 + $0x2] sm:$0xff]
      %s446 = scalar_lea.vmem %s3, 96
      %v447 = vld [vmem:[%s446] sm:$0xff]
      %v448 = vld [vmem:[%s446 + $0x8] sm:$0xff]
      %v449 = vld [vmem:[%s446 + $0x10] sm:$0xff]
      %v450 = vld [vmem:[%s446 + $0x18] sm:$0xff]
      %v451 = vld [vmem:[%s446 + $0x20] sm:$0xff]
      %v452 = vld [vmem:[%s446 + $0x28] sm:$0xff]
      %v453 = vld [vmem:[%s446 + $0x30] sm:$0xff]
      %v454 = vld [vmem:[%s446 + $0x38] sm:$0xff]
      %v455 = vld [vmem:[%s446 + $0x40] sm:$0xff]
      %v456 = vld [vmem:[%s446 + $0x48] sm:$0xff]
      %v457 = vld [vmem:[%s446 + $0x50] sm:$0xff]
      %v458 = vld [vmem:[%s446 + $0x58] sm:$0xff]
      %vm459 = vcmask 785408
      %v461 = vsel %vm459, %v445, 0
      %463 = vmatprep.subr.mxu0 0.0
      %464 = vmatpush1.msra.mxu0 0.0
      %465 = vmatprep.subr.mxu0 0.0
      %466 = vmatpush1.msra.mxu0 0.0
      %467 = vmatprep.subr.mxu0 0.0
      %468 = vmatpush1.msra.mxu0 0.0
      %469 = vmatprep.subr.mxu0 0.0
      %470 = vmatpush1.msra.mxu0 0.0
      %471 = vmatprep.subr.mxu0 0.0
      %472 = vmatpush1.msra.mxu0 %v458
      %473 = vmatprep.subr.mxu0 0.0
      %474 = vmatpush1.msra.mxu0 %v457
      %475 = vmatprep.subr.mxu0 0.0
      %476 = vmatpush1.msra.mxu0 %v456
      %477 = vmatprep.subr.mxu0 0.0
      %478 = vmatpush1.msra.mxu0 %v455
      %479 = vmatprep.subr.mxu0 0.0
      %480 = vmatpush1.msra.mxu0 %v454
      %481 = vmatprep.subr.mxu0 0.0
      %482 = vmatpush1.msra.mxu0 %v453
      %483 = vmatprep.subr.mxu0 0.0
      %484 = vmatpush1.msra.mxu0 %v452
      %485 = vmatprep.subr.mxu0 0.0
      %486 = vmatpush1.msra.mxu0 %v451
      %487 = vmatprep.subr.mxu0 0.0
      %488 = vmatpush1.msra.mxu0 %v450
      %489 = vmatprep.subr.mxu0 0.0
      %490 = vmatpush1.msra.mxu0 %v449
      %491 = vmatprep.subr.mxu0 0.0
      %492 = vmatpush1.msra.mxu0 %v448
      %493 = vmatprep.subr.mxu0 0.0
      %494 = vmatpush1.msra.mxu0 %v447
      %495 = vmatprep.subr.mxu0 0.0
      %496 = vmatpush2.msra.mxu0 0.0
      %497 = vmatprep.subr.mxu0 0.0
      %498 = vmatpush2.msra.mxu0 0.0
      %499 = vmatprep.subr.mxu0 0.0
      %500 = vmatpush2.msra.mxu0 0.0
      %501 = vmatprep.subr.mxu0 0.0
      %502 = vmatpush2.msra.mxu0 0.0
      %503 = vmatprep.subr.mxu0 0.0
      %504 = vmatpush2.msra.mxu0 0.0
      %505 = vmatprep.subr.mxu0 0.0
      %506 = vmatpush2.msra.mxu0 0.0
      %507 = vmatprep.subr.mxu0 0.0
      %508 = vmatpush2.msra.mxu0 0.0
      %509 = vmatprep.subr.mxu0 0.0
      %510 = vmatpush2.msra.mxu0 0.0
      %511 = vmatprep.subr.mxu0 0.0
      %512 = vmatpush2.msra.mxu0 0.0
      %513 = vmatprep.subr.mxu0 0.0
      %514 = vmatpush2.msra.mxu0 0.0
      %515 = vmatprep.subr.mxu0 0.0
      %516 = vmatpush2.msra.mxu0 0.0
      %517 = vmatprep.subr.mxu0 0.0
      %518 = vmatpush2.msra.mxu0 0.0
      %519 = vmatprep.subr.mxu0 0.0
      %520 = vmatpush2.msra.mxu0 0.0
      %521 = vmatprep.subr.mxu0 0.0
      %522 = vmatpush2.msra.mxu0 0.0
      %523 = vmatprep.subr.mxu0 0.0
      %524 = vmatpush2.msra.mxu0 0.0
      %525 = vmatprep.subr.mxu0 0.0
      %526 = vmatpush2.msra.mxu0 0.0
      %527 = vmatprep.mubr.f32.mxu0 0.0
      %528 = vmatmul.mubr.f32.gmra.mxu0 %v461
      %v529 = vpop.f32.mrf.mxu0
      %v530 = vadd.f32 0.0, %v529
      %v531 = vpop.f32.mrf.mxu0
      %532 = vdwg.mxu0
      %v534 = vsel %vm459, %v432, 0
      %536 = vmatprep.subr.mxu0 0.0
      %537 = vmatpush1.msra.mxu0 0.0
      %538 = vmatprep.subr.mxu0 0.0
      %539 = vmatpush1.msra.mxu0 0.0
      %540 = vmatprep.subr.mxu0 0.0
      %541 = vmatpush1.msra.mxu0 0.0
      %542 = vmatprep.subr.mxu0 0.0
      %543 = vmatpush1.msra.mxu0 0.0
      %544 = vmatprep.subr.mxu0 0.0
      %545 = vmatpush1.msra.mxu0 %v444
      %546 = vmatprep.subr.mxu0 0.0
      %547 = vmatpush1.msra.mxu0 %v443
      %548 = vmatprep.subr.mxu0 0.0
      %549 = vmatpush1.msra.mxu0 %v442
      %550 = vmatprep.subr.mxu0 0.0
      %551 = vmatpush1.msra.mxu0 %v441
      %552 = vmatprep.subr.mxu0 0.0
      %553 = vmatpush1.msra.mxu0 %v440
      %554 = vmatprep.subr.mxu0 0.0
      %555 = vmatpush1.msra.mxu0 %v439
      %556 = vmatprep.subr.mxu0 0.0
      %557 = vmatpush1.msra.mxu0 %v438
      %558 = vmatprep.subr.mxu0 0.0
      %559 = vmatpush1.msra.mxu0 %v437
      %560 = vmatprep.subr.mxu0 0.0
      %561 = vmatpush1.msra.mxu0 %v436
      %562 = vmatprep.subr.mxu0 0.0
      %563 = vmatpush1.msra.mxu0 %v435
      %564 = vmatprep.subr.mxu0 0.0
      %565 = vmatpush1.msra.mxu0 %v434
      %566 = vmatprep.subr.mxu0 0.0
      %567 = vmatpush1.msra.mxu0 %v433
      %568 = vmatprep.subr.mxu0 0.0
      %569 = vmatpush2.msra.mxu0 0.0
      %570 = vmatprep.subr.mxu0 0.0
      %571 = vmatpush2.msra.mxu0 0.0
      %572 = vmatprep.subr.mxu0 0.0
      %573 = vmatpush2.msra.mxu0 0.0
      %574 = vmatprep.subr.mxu0 0.0
      %575 = vmatpush2.msra.mxu0 0.0
      %576 = vmatprep.subr.mxu0 0.0
      %577 = vmatpush2.msra.mxu0 0.0
      %578 = vmatprep.subr.mxu0 0.0
      %579 = vmatpush2.msra.mxu0 0.0
      %580 = vmatprep.subr.mxu0 0.0
      %581 = vmatpush2.msra.mxu0 0.0
      %582 = vmatprep.subr.mxu0 0.0
      %583 = vmatpush2.msra.mxu0 0.0
      %584 = vmatprep.subr.mxu0 0.0
      %585 = vmatpush2.msra.mxu0 0.0
      %586 = vmatprep.subr.mxu0 0.0
      %587 = vmatpush2.msra.mxu0 0.0
      %588 = vmatprep.subr.mxu0 0.0
      %589 = vmatpush2.msra.mxu0 0.0
      %590 = vmatprep.subr.mxu0 0.0
      %591 = vmatpush2.msra.mxu0 0.0
      %592 = vmatprep.subr.mxu0 0.0
      %593 = vmatpush2.msra.mxu0 0.0
      %594 = vmatprep.subr.mxu0 0.0
      %595 = vmatpush2.msra.mxu0 0.0
      %596 = vmatprep.subr.mxu0 0.0
      %597 = vmatpush2.msra.mxu0 0.0
      %598 = vmatprep.subr.mxu0 0.0
      %599 = vmatpush2.msra.mxu0 0.0
      %600 = vmatprep.mubr.f32.mxu0 0.0
      %601 = vmatmul.mubr.f32.gmra.mxu0 %v534
      %v602 = vpop.f32.mrf.mxu0
      %v603 = vadd.f32 %v530, %v602
      %v604 = vpop.f32.mrf.mxu0
      %605 = vdwg.mxu0
      %v606 = vld [vmem:[%s387 + $0x4] sm:$0xff]
      %s607 = scalar_lea.vmem %s3, 192
      %v608 = vld [vmem:[%s607] sm:$0xff]
      %v609 = vld [vmem:[%s607 + $0x8] sm:$0xff]
      %v610 = vld [vmem:[%s607 + $0x10] sm:$0xff]
      %v611 = vld [vmem:[%s607 + $0x18] sm:$0xff]
      %v612 = vld [vmem:[%s607 + $0x20] sm:$0xff]
      %v613 = vld [vmem:[%s607 + $0x28] sm:$0xff]
      %v614 = vld [vmem:[%s607 + $0x30] sm:$0xff]
      %v615 = vld [vmem:[%s607 + $0x38] sm:$0xff]
      %v616 = vld [vmem:[%s607 + $0x40] sm:$0xff]
      %v617 = vld [vmem:[%s607 + $0x48] sm:$0xff]
      %v618 = vld [vmem:[%s607 + $0x50] sm:$0xff]
      %v619 = vld [vmem:[%s607 + $0x58] sm:$0xff]
      %v621 = vsel %vm459, %v606, 0
      %623 = vmatprep.subr.mxu0 0.0
      %624 = vmatpush1.msra.mxu0 0.0
      %625 = vmatprep.subr.mxu0 0.0
      %626 = vmatpush1.msra.mxu0 0.0
      %627 = vmatprep.subr.mxu0 0.0
      %628 = vmatpush1.msra.mxu0 0.0
      %629 = vmatprep.subr.mxu0 0.0
      %630 = vmatpush1.msra.mxu0 0.0
      %631 = vmatprep.subr.mxu0 0.0
      %632 = vmatpush1.msra.mxu0 %v619
      %633 = vmatprep.subr.mxu0 0.0
      %634 = vmatpush1.msra.mxu0 %v618
      %635 = vmatprep.subr.mxu0 0.0
      %636 = vmatpush1.msra.mxu0 %v617
      %637 = vmatprep.subr.mxu0 0.0
      %638 = vmatpush1.msra.mxu0 %v616
      %639 = vmatprep.subr.mxu0 0.0
      %640 = vmatpush1.msra.mxu0 %v615
      %641 = vmatprep.subr.mxu0 0.0
      %642 = vmatpush1.msra.mxu0 %v614
      %643 = vmatprep.subr.mxu0 0.0
      %644 = vmatpush1.msra.mxu0 %v613
      %645 = vmatprep.subr.mxu0 0.0
      %646 = vmatpush1.msra.mxu0 %v612
      %647 = vmatprep.subr.mxu0 0.0
      %648 = vmatpush1.msra.mxu0 %v611
      %649 = vmatprep.subr.mxu0 0.0
      %650 = vmatpush1.msra.mxu0 %v610
      %651 = vmatprep.subr.mxu0 0.0
      %652 = vmatpush1.msra.mxu0 %v609
      %653 = vmatprep.subr.mxu0 0.0
      %654 = vmatpush1.msra.mxu0 %v608
      %655 = vmatprep.subr.mxu0 0.0
      %656 = vmatpush2.msra.mxu0 0.0
      %657 = vmatprep.subr.mxu0 0.0
      %658 = vmatpush2.msra.mxu0 0.0
      %659 = vmatprep.subr.mxu0 0.0
      %660 = vmatpush2.msra.mxu0 0.0
      %661 = vmatprep.subr.mxu0 0.0
      %662 = vmatpush2.msra.mxu0 0.0
      %663 = vmatprep.subr.mxu0 0.0
      %664 = vmatpush2.msra.mxu0 0.0
      %665 = vmatprep.subr.mxu0 0.0
      %666 = vmatpush2.msra.mxu0 0.0
      %667 = vmatprep.subr.mxu0 0.0
      %668 = vmatpush2.msra.mxu0 0.0
      %669 = vmatprep.subr.mxu0 0.0
      %670 = vmatpush2.msra.mxu0 0.0
      %671 = vmatprep.subr.mxu0 0.0
      %672 = vmatpush2.msra.mxu0 0.0
      %673 = vmatprep.subr.mxu0 0.0
      %674 = vmatpush2.msra.mxu0 0.0
      %675 = vmatprep.subr.mxu0 0.0
      %676 = vmatpush2.msra.mxu0 0.0
      %677 = vmatprep.subr.mxu0 0.0
      %678 = vmatpush2.msra.mxu0 0.0
      %679 = vmatprep.subr.mxu0 0.0
      %680 = vmatpush2.msra.mxu0 0.0
      %681 = vmatprep.subr.mxu0 0.0
      %682 = vmatpush2.msra.mxu0 0.0
      %683 = vmatprep.subr.mxu0 0.0
      %684 = vmatpush2.msra.mxu0 0.0
      %685 = vmatprep.subr.mxu0 0.0
      %686 = vmatpush2.msra.mxu0 0.0
      %687 = vmatprep.mubr.f32.mxu0 0.0
      %688 = vmatmul.mubr.f32.gmra.mxu0 %v621
      %v689 = vpop.f32.mrf.mxu0
      %v690 = vadd.f32 0.0, %v689
      %v691 = vpop.f32.mrf.mxu0
      %692 = vdwg.mxu0
      %v693 = vadd.f32 %v603, %v690
      %v694 = vld [vmem:[%s397] sm:$0xff]
      %s695 = scalar_lea.vmem %s3, 288
      %v696 = vld [vmem:[%s695] sm:$0xff]
      %v697 = vld [vmem:[%s695 + $0x8] sm:$0xff]
      %v698 = vld [vmem:[%s695 + $0x10] sm:$0xff]
      %v699 = vld [vmem:[%s695 + $0x18] sm:$0xff]
      %v700 = vld [vmem:[%s695 + $0x20] sm:$0xff]
      %v701 = vld [vmem:[%s695 + $0x28] sm:$0xff]
      %v702 = vld [vmem:[%s695 + $0x30] sm:$0xff]
      %v703 = vld [vmem:[%s695 + $0x38] sm:$0xff]
      %v704 = vld [vmem:[%s695 + $0x40] sm:$0xff]
      %v705 = vld [vmem:[%s695 + $0x48] sm:$0xff]
      %v706 = vld [vmem:[%s695 + $0x50] sm:$0xff]
      %v707 = vld [vmem:[%s695 + $0x58] sm:$0xff]
      %v709 = vsel %vm459, %v694, 0
      %711 = vmatprep.subr.mxu0 0.0
      %712 = vmatpush1.msra.mxu0 0.0
      %713 = vmatprep.subr.mxu0 0.0
      %714 = vmatpush1.msra.mxu0 0.0
      %715 = vmatprep.subr.mxu0 0.0
      %716 = vmatpush1.msra.mxu0 0.0
      %717 = vmatprep.subr.mxu0 0.0
      %718 = vmatpush1.msra.mxu0 0.0
      %719 = vmatprep.subr.mxu0 0.0
      %720 = vmatpush1.msra.mxu0 %v707
      %721 = vmatprep.subr.mxu0 0.0
      %722 = vmatpush1.msra.mxu0 %v706
      %723 = vmatprep.subr.mxu0 0.0
      %724 = vmatpush1.msra.mxu0 %v705
      %725 = vmatprep.subr.mxu0 0.0
      %726 = vmatpush1.msra.mxu0 %v704
      %727 = vmatprep.subr.mxu0 0.0
      %728 = vmatpush1.msra.mxu0 %v703
      %729 = vmatprep.subr.mxu0 0.0
      %730 = vmatpush1.msra.mxu0 %v702
      %731 = vmatprep.subr.mxu0 0.0
      %732 = vmatpush1.msra.mxu0 %v701
      %733 = vmatprep.subr.mxu0 0.0
      %734 = vmatpush1.msra.mxu0 %v700
      %735 = vmatprep.subr.mxu0 0.0
      %736 = vmatpush1.msra.mxu0 %v699
      %737 = vmatprep.subr.mxu0 0.0
      %738 = vmatpush1.msra.mxu0 %v698
      %739 = vmatprep.subr.mxu0 0.0
      %740 = vmatpush1.msra.mxu0 %v697
      %741 = vmatprep.subr.mxu0 0.0
      %742 = vmatpush1.msra.mxu0 %v696
      %743 = vmatprep.subr.mxu0 0.0
      %744 = vmatpush2.msra.mxu0 0.0
      %745 = vmatprep.subr.mxu0 0.0
      %746 = vmatpush2.msra.mxu0 0.0
      %747 = vmatprep.subr.mxu0 0.0
      %748 = vmatpush2.msra.mxu0 0.0
      %749 = vmatprep.subr.mxu0 0.0
      %750 = vmatpush2.msra.mxu0 0.0
      %751 = vmatprep.subr.mxu0 0.0
      %752 = vmatpush2.msra.mxu0 0.0
      %753 = vmatprep.subr.mxu0 0.0
      %754 = vmatpush2.msra.mxu0 0.0
      %755 = vmatprep.subr.mxu0 0.0
      %756 = vmatpush2.msra.mxu0 0.0
      %757 = vmatprep.subr.mxu0 0.0
      %758 = vmatpush2.msra.mxu0 0.0
      %759 = vmatprep.subr.mxu0 0.0
      %760 = vmatpush2.msra.mxu0 0.0
      %761 = vmatprep.subr.mxu0 0.0
      %762 = vmatpush2.msra.mxu0 0.0
      %763 = vmatprep.subr.mxu0 0.0
      %764 = vmatpush2.msra.mxu0 0.0
      %765 = vmatprep.subr.mxu0 0.0
      %766 = vmatpush2.msra.mxu0 0.0
      %767 = vmatprep.subr.mxu0 0.0
      %768 = vmatpush2.msra.mxu0 0.0
      %769 = vmatprep.subr.mxu0 0.0
      %770 = vmatpush2.msra.mxu0 0.0
      %771 = vmatprep.subr.mxu0 0.0
      %772 = vmatpush2.msra.mxu0 0.0
      %773 = vmatprep.subr.mxu0 0.0
      %774 = vmatpush2.msra.mxu0 0.0
      %775 = vmatprep.mubr.f32.mxu0 0.0
      %776 = vmatmul.mubr.f32.gmra.mxu0 %v709
      %v777 = vpop.f32.mrf.mxu0
      %v778 = vadd.f32 0.0, %v777
      %v779 = vpop.f32.mrf.mxu0
      %780 = vdwg.mxu0
      %v781 = vadd.f32 %v693, %v778
      %v782 = vld [vmem:[%s397 + $0x2] sm:$0xff]
      %s783 = scalar_lea.vmem %s3, 384
      %v784 = vld [vmem:[%s783] sm:$0xff]
      %v785 = vld [vmem:[%s783 + $0x8] sm:$0xff]
      %v786 = vld [vmem:[%s783 + $0x10] sm:$0xff]
      %v787 = vld [vmem:[%s783 + $0x18] sm:$0xff]
      %v788 = vld [vmem:[%s783 + $0x20] sm:$0xff]
      %v789 = vld [vmem:[%s783 + $0x28] sm:$0xff]
      %v790 = vld [vmem:[%s783 + $0x30] sm:$0xff]
      %v791 = vld [vmem:[%s783 + $0x38] sm:$0xff]
      %v792 = vld [vmem:[%s783 + $0x40] sm:$0xff]
      %v793 = vld [vmem:[%s783 + $0x48] sm:$0xff]
      %v794 = vld [vmem:[%s783 + $0x50] sm:$0xff]
      %v795 = vld [vmem:[%s783 + $0x58] sm:$0xff]
      %v797 = vsel %vm459, %v782, 0
      %799 = vmatprep.subr.mxu0 0.0
      %800 = vmatpush1.msra.mxu0 0.0
      %801 = vmatprep.subr.mxu0 0.0
      %802 = vmatpush1.msra.mxu0 0.0
      %803 = vmatprep.subr.mxu0 0.0
      %804 = vmatpush1.msra.mxu0 0.0
      %805 = vmatprep.subr.mxu0 0.0
      %806 = vmatpush1.msra.mxu0 0.0
      %807 = vmatprep.subr.mxu0 0.0
      %808 = vmatpush1.msra.mxu0 %v795
      %809 = vmatprep.subr.mxu0 0.0
      %810 = vmatpush1.msra.mxu0 %v794
      %811 = vmatprep.subr.mxu0 0.0
      %812 = vmatpush1.msra.mxu0 %v793
      %813 = vmatprep.subr.mxu0 0.0
      %814 = vmatpush1.msra.mxu0 %v792
      %815 = vmatprep.subr.mxu0 0.0
      %816 = vmatpush1.msra.mxu0 %v791
      %817 = vmatprep.subr.mxu0 0.0
      %818 = vmatpush1.msra.mxu0 %v790
      %819 = vmatprep.subr.mxu0 0.0
      %820 = vmatpush1.msra.mxu0 %v789
      %821 = vmatprep.subr.mxu0 0.0
      %822 = vmatpush1.msra.mxu0 %v788
      %823 = vmatprep.subr.mxu0 0.0
      %824 = vmatpush1.msra.mxu0 %v787
      %825 = vmatprep.subr.mxu0 0.0
      %826 = vmatpush1.msra.mxu0 %v786
      %827 = vmatprep.subr.mxu0 0.0
      %828 = vmatpush1.msra.mxu0 %v785
      %829 = vmatprep.subr.mxu0 0.0
      %830 = vmatpush1.msra.mxu0 %v784
      %831 = vmatprep.subr.mxu0 0.0
      %832 = vmatpush2.msra.mxu0 0.0
      %833 = vmatprep.subr.mxu0 0.0
      %834 = vmatpush2.msra.mxu0 0.0
      %835 = vmatprep.subr.mxu0 0.0
      %836 = vmatpush2.msra.mxu0 0.0
      %837 = vmatprep.subr.mxu0 0.0
      %838 = vmatpush2.msra.mxu0 0.0
      %839 = vmatprep.subr.mxu0 0.0
      %840 = vmatpush2.msra.mxu0 0.0
      %841 = vmatprep.subr.mxu0 0.0
      %842 = vmatpush2.msra.mxu0 0.0
      %843 = vmatprep.subr.mxu0 0.0
      %844 = vmatpush2.msra.mxu0 0.0
      %845 = vmatprep.subr.mxu0 0.0
      %846 = vmatpush2.msra.mxu0 0.0
      %847 = vmatprep.subr.mxu0 0.0
      %848 = vmatpush2.msra.mxu0 0.0
      %849 = vmatprep.subr.mxu0 0.0
      %850 = vmatpush2.msra.mxu0 0.0
      %851 = vmatprep.subr.mxu0 0.0
      %852 = vmatpush2.msra.mxu0 0.0
      %853 = vmatprep.subr.mxu0 0.0
      %854 = vmatpush2.msra.mxu0 0.0
      %855 = vmatprep.subr.mxu0 0.0
      %856 = vmatpush2.msra.mxu0 0.0
      %857 = vmatprep.subr.mxu0 0.0
      %858 = vmatpush2.msra.mxu0 0.0
      %859 = vmatprep.subr.mxu0 0.0
      %860 = vmatpush2.msra.mxu0 0.0
      %861 = vmatprep.subr.mxu0 0.0
      %862 = vmatpush2.msra.mxu0 0.0
      %863 = vmatprep.mubr.f32.mxu0 0.0
      %864 = vmatmul.mubr.f32.gmra.mxu0 %v797
      %v865 = vpop.f32.mrf.mxu0
      %v866 = vadd.f32 0.0, %v865
      %v867 = vpop.f32.mrf.mxu0
      %868 = vdwg.mxu0
      %v869 = vadd.f32 %v781, %v866
      %v870 = vld [vmem:[%s397 + $0x4] sm:$0xff]
      %s871 = scalar_lea.vmem %s3, 480
      %v872 = vld [vmem:[%s871] sm:$0xff]
      %v873 = vld [vmem:[%s871 + $0x8] sm:$0xff]
      %v874 = vld [vmem:[%s871 + $0x10] sm:$0xff]
      %v875 = vld [vmem:[%s871 + $0x18] sm:$0xff]
      %v876 = vld [vmem:[%s871 + $0x20] sm:$0xff]
      %v877 = vld [vmem:[%s871 + $0x28] sm:$0xff]
      %v878 = vld [vmem:[%s871 + $0x30] sm:$0xff]
      %v879 = vld [vmem:[%s871 + $0x38] sm:$0xff]
      %v880 = vld [vmem:[%s871 + $0x40] sm:$0xff]
      %v881 = vld [vmem:[%s871 + $0x48] sm:$0xff]
      %v882 = vld [vmem:[%s871 + $0x50] sm:$0xff]
      %v883 = vld [vmem:[%s871 + $0x58] sm:$0xff]
      %v885 = vsel %vm459, %v870, 0
      %887 = vmatprep.subr.mxu0 0.0
      %888 = vmatpush1.msra.mxu0 0.0
      %889 = vmatprep.subr.mxu0 0.0
      %890 = vmatpush1.msra.mxu0 0.0
      %891 = vmatprep.subr.mxu0 0.0
      %892 = vmatpush1.msra.mxu0 0.0
      %893 = vmatprep.subr.mxu0 0.0
      %894 = vmatpush1.msra.mxu0 0.0
      %895 = vmatprep.subr.mxu0 0.0
      %896 = vmatpush1.msra.mxu0 %v883
      %897 = vmatprep.subr.mxu0 0.0
      %898 = vmatpush1.msra.mxu0 %v882
      %899 = vmatprep.subr.mxu0 0.0
      %900 = vmatpush1.msra.mxu0 %v881
      %901 = vmatprep.subr.mxu0 0.0
      %902 = vmatpush1.msra.mxu0 %v880
      %903 = vmatprep.subr.mxu0 0.0
      %904 = vmatpush1.msra.mxu0 %v879
      %905 = vmatprep.subr.mxu0 0.0
      %906 = vmatpush1.msra.mxu0 %v878
      %907 = vmatprep.subr.mxu0 0.0
      %908 = vmatpush1.msra.mxu0 %v877
      %909 = vmatprep.subr.mxu0 0.0
      %910 = vmatpush1.msra.mxu0 %v876
      %911 = vmatprep.subr.mxu0 0.0
      %912 = vmatpush1.msra.mxu0 %v875
      %913 = vmatprep.subr.mxu0 0.0
      %914 = vmatpush1.msra.mxu0 %v874
      %915 = vmatprep.subr.mxu0 0.0
      %916 = vmatpush1.msra.mxu0 %v873
      %917 = vmatprep.subr.mxu0 0.0
      %918 = vmatpush1.msra.mxu0 %v872
      %919 = vmatprep.subr.mxu0 0.0
      %920 = vmatpush2.msra.mxu0 0.0
      %921 = vmatprep.subr.mxu0 0.0
      %922 = vmatpush2.msra.mxu0 0.0
      %923 = vmatprep.subr.mxu0 0.0
      %924 = vmatpush2.msra.mxu0 0.0
      %925 = vmatprep.subr.mxu0 0.0
      %926 = vmatpush2.msra.mxu0 0.0
      %927 = vmatprep.subr.mxu0 0.0
      %928 = vmatpush2.msra.mxu0 0.0
      %929 = vmatprep.subr.mxu0 0.0
      %930 = vmatpush2.msra.mxu0 0.0
      %931 = vmatprep.subr.mxu0 0.0
      %932 = vmatpush2.msra.mxu0 0.0
      %933 = vmatprep.subr.mxu0 0.0
      %934 = vmatpush2.msra.mxu0 0.0
      %935 = vmatprep.subr.mxu0 0.0
      %936 = vmatpush2.msra.mxu0 0.0
      %937 = vmatprep.subr.mxu0 0.0
      %938 = vmatpush2.msra.mxu0 0.0
      %939 = vmatprep.subr.mxu0 0.0
      %940 = vmatpush2.msra.mxu0 0.0
      %941 = vmatprep.subr.mxu0 0.0
      %942 = vmatpush2.msra.mxu0 0.0
      %943 = vmatprep.subr.mxu0 0.0
      %944 = vmatpush2.msra.mxu0 0.0
      %945 = vmatprep.subr.mxu0 0.0
      %946 = vmatpush2.msra.mxu0 0.0
      %947 = vmatprep.subr.mxu0 0.0
      %948 = vmatpush2.msra.mxu0 0.0
      %949 = vmatprep.subr.mxu0 0.0
      %950 = vmatpush2.msra.mxu0 0.0
      %951 = vmatprep.mubr.f32.mxu0 0.0
      %952 = vmatmul.mubr.f32.gmra.mxu0 %v885
      %v953 = vpop.f32.mrf.mxu0
      %v954 = vadd.f32 0.0, %v953
      %v955 = vpop.f32.mrf.mxu0
      %956 = vdwg.mxu0
      %v957 = vadd.f32 %v869, %v954
      %v958 = vld [vmem:[%s408] sm:$0xff]
      %s959 = scalar_lea.vmem %s3, 576
      %v960 = vld [vmem:[%s959] sm:$0xff]
      %v961 = vld [vmem:[%s959 + $0x8] sm:$0xff]
      %v962 = vld [vmem:[%s959 + $0x10] sm:$0xff]
      %v963 = vld [vmem:[%s959 + $0x18] sm:$0xff]
      %v964 = vld [vmem:[%s959 + $0x20] sm:$0xff]
      %v965 = vld [vmem:[%s959 + $0x28] sm:$0xff]
      %v966 = vld [vmem:[%s959 + $0x30] sm:$0xff]
      %v967 = vld [vmem:[%s959 + $0x38] sm:$0xff]
      %v968 = vld [vmem:[%s959 + $0x40] sm:$0xff]
      %v969 = vld [vmem:[%s959 + $0x48] sm:$0xff]
      %v970 = vld [vmem:[%s959 + $0x50] sm:$0xff]
      %v971 = vld [vmem:[%s959 + $0x58] sm:$0xff]
      %v973 = vsel %vm459, %v958, 0
      %975 = vmatprep.subr.mxu0 0.0
      %976 = vmatpush1.msra.mxu0 0.0
      %977 = vmatprep.subr.mxu0 0.0
      %978 = vmatpush1.msra.mxu0 0.0
      %979 = vmatprep.subr.mxu0 0.0
      %980 = vmatpush1.msra.mxu0 0.0
      %981 = vmatprep.subr.mxu0 0.0
      %982 = vmatpush1.msra.mxu0 0.0
      %983 = vmatprep.subr.mxu0 0.0
      %984 = vmatpush1.msra.mxu0 %v971
      %985 = vmatprep.subr.mxu0 0.0
      %986 = vmatpush1.msra.mxu0 %v970
      %987 = vmatprep.subr.mxu0 0.0
      %988 = vmatpush1.msra.mxu0 %v969
      %989 = vmatprep.subr.mxu0 0.0
      %990 = vmatpush1.msra.mxu0 %v968
      %991 = vmatprep.subr.mxu0 0.0
      %992 = vmatpush1.msra.mxu0 %v967
      %993 = vmatprep.subr.mxu0 0.0
      %994 = vmatpush1.msra.mxu0 %v966
      %995 = vmatprep.subr.mxu0 0.0
      %996 = vmatpush1.msra.mxu0 %v965
      %997 = vmatprep.subr.mxu0 0.0
      %998 = vmatpush1.msra.mxu0 %v964
      %999 = vmatprep.subr.mxu0 0.0
      %1000 = vmatpush1.msra.mxu0 %v963
      %1001 = vmatprep.subr.mxu0 0.0
      %1002 = vmatpush1.msra.mxu0 %v962
      %1003 = vmatprep.subr.mxu0 0.0
      %1004 = vmatpush1.msra.mxu0 %v961
      %1005 = vmatprep.subr.mxu0 0.0
      %1006 = vmatpush1.msra.mxu0 %v960
      %1007 = vmatprep.subr.mxu0 0.0
      %1008 = vmatpush2.msra.mxu0 0.0
      %1009 = vmatprep.subr.mxu0 0.0
      %1010 = vmatpush2.msra.mxu0 0.0
      %1011 = vmatprep.subr.mxu0 0.0
      %1012 = vmatpush2.msra.mxu0 0.0
      %1013 = vmatprep.subr.mxu0 0.0
      %1014 = vmatpush2.msra.mxu0 0.0
      %1015 = vmatprep.subr.mxu0 0.0
      %1016 = vmatpush2.msra.mxu0 0.0
      %1017 = vmatprep.subr.mxu0 0.0
      %1018 = vmatpush2.msra.mxu0 0.0
      %1019 = vmatprep.subr.mxu0 0.0
      %1020 = vmatpush2.msra.mxu0 0.0
      %1021 = vmatprep.subr.mxu0 0.0
      %1022 = vmatpush2.msra.mxu0 0.0
      %1023 = vmatprep.subr.mxu0 0.0
      %1024 = vmatpush2.msra.mxu0 0.0
      %1025 = vmatprep.subr.mxu0 0.0
      %1026 = vmatpush2.msra.mxu0 0.0
      %1027 = vmatprep.subr.mxu0 0.0
      %1028 = vmatpush2.msra.mxu0 0.0
      %1029 = vmatprep.subr.mxu0 0.0
      %1030 = vmatpush2.msra.mxu0 0.0
      %1031 = vmatprep.subr.mxu0 0.0
      %1032 = vmatpush2.msra.mxu0 0.0
      %1033 = vmatprep.subr.mxu0 0.0
      %1034 = vmatpush2.msra.mxu0 0.0
      %1035 = vmatprep.subr.mxu0 0.0
      %1036 = vmatpush2.msra.mxu0 0.0
      %1037 = vmatprep.subr.mxu0 0.0
      %1038 = vmatpush2.msra.mxu0 0.0
      %1039 = vmatprep.mubr.f32.mxu0 0.0
      %1040 = vmatmul.mubr.f32.gmra.mxu0 %v973
      %v1041 = vpop.f32.mrf.mxu0
      %v1042 = vadd.f32 0.0, %v1041
      %v1043 = vpop.f32.mrf.mxu0
      %1044 = vdwg.mxu0
      %v1045 = vadd.f32 %v957, %v1042
      %v1046 = vld [vmem:[%s408 + $0x2] sm:$0xff]
      %s1047 = scalar_lea.vmem %s3, 672
      %v1048 = vld [vmem:[%s1047] sm:$0xff]
      %v1049 = vld [vmem:[%s1047 + $0x8] sm:$0xff]
      %v1050 = vld [vmem:[%s1047 + $0x10] sm:$0xff]
      %v1051 = vld [vmem:[%s1047 + $0x18] sm:$0xff]
      %v1052 = vld [vmem:[%s1047 + $0x20] sm:$0xff]
      %v1053 = vld [vmem:[%s1047 + $0x28] sm:$0xff]
      %v1054 = vld [vmem:[%s1047 + $0x30] sm:$0xff]
      %v1055 = vld [vmem:[%s1047 + $0x38] sm:$0xff]
      %v1056 = vld [vmem:[%s1047 + $0x40] sm:$0xff]
      %v1057 = vld [vmem:[%s1047 + $0x48] sm:$0xff]
      %v1058 = vld [vmem:[%s1047 + $0x50] sm:$0xff]
      %v1059 = vld [vmem:[%s1047 + $0x58] sm:$0xff]
      %v1061 = vsel %vm459, %v1046, 0
      %1063 = vmatprep.subr.mxu0 0.0
      %1064 = vmatpush1.msra.mxu0 0.0
      %1065 = vmatprep.subr.mxu0 0.0
      %1066 = vmatpush1.msra.mxu0 0.0
      %1067 = vmatprep.subr.mxu0 0.0
      %1068 = vmatpush1.msra.mxu0 0.0
      %1069 = vmatprep.subr.mxu0 0.0
      %1070 = vmatpush1.msra.mxu0 0.0
      %1071 = vmatprep.subr.mxu0 0.0
      %1072 = vmatpush1.msra.mxu0 %v1059
      %1073 = vmatprep.subr.mxu0 0.0
      %1074 = vmatpush1.msra.mxu0 %v1058
      %1075 = vmatprep.subr.mxu0 0.0
      %1076 = vmatpush1.msra.mxu0 %v1057
      %1077 = vmatprep.subr.mxu0 0.0
      %1078 = vmatpush1.msra.mxu0 %v1056
      %1079 = vmatprep.subr.mxu0 0.0
      %1080 = vmatpush1.msra.mxu0 %v1055
      %1081 = vmatprep.subr.mxu0 0.0
      %1082 = vmatpush1.msra.mxu0 %v1054
      %1083 = vmatprep.subr.mxu0 0.0
      %1084 = vmatpush1.msra.mxu0 %v1053
      %1085 = vmatprep.subr.mxu0 0.0
      %1086 = vmatpush1.msra.mxu0 %v1052
      %1087 = vmatprep.subr.mxu0 0.0
      %1088 = vmatpush1.msra.mxu0 %v1051
      %1089 = vmatprep.subr.mxu0 0.0
      %1090 = vmatpush1.msra.mxu0 %v1050
      %1091 = vmatprep.subr.mxu0 0.0
      %1092 = vmatpush1.msra.mxu0 %v1049
      %1093 = vmatprep.subr.mxu0 0.0
      %1094 = vmatpush1.msra.mxu0 %v1048
      %1095 = vmatprep.subr.mxu0 0.0
      %1096 = vmatpush2.msra.mxu0 0.0
      %1097 = vmatprep.subr.mxu0 0.0
      %1098 = vmatpush2.msra.mxu0 0.0
      %1099 = vmatprep.subr.mxu0 0.0
      %1100 = vmatpush2.msra.mxu0 0.0
      %1101 = vmatprep.subr.mxu0 0.0
      %1102 = vmatpush2.msra.mxu0 0.0
      %1103 = vmatprep.subr.mxu0 0.0
      %1104 = vmatpush2.msra.mxu0 0.0
      %1105 = vmatprep.subr.mxu0 0.0
      %1106 = vmatpush2.msra.mxu0 0.0
      %1107 = vmatprep.subr.mxu0 0.0
      %1108 = vmatpush2.msra.mxu0 0.0
      %1109 = vmatprep.subr.mxu0 0.0
      %1110 = vmatpush2.msra.mxu0 0.0
      %1111 = vmatprep.subr.mxu0 0.0
      %1112 = vmatpush2.msra.mxu0 0.0
      %1113 = vmatprep.subr.mxu0 0.0
      %1114 = vmatpush2.msra.mxu0 0.0
      %1115 = vmatprep.subr.mxu0 0.0
      %1116 = vmatpush2.msra.mxu0 0.0
      %1117 = vmatprep.subr.mxu0 0.0
      %1118 = vmatpush2.msra.mxu0 0.0
      %1119 = vmatprep.subr.mxu0 0.0
      %1120 = vmatpush2.msra.mxu0 0.0
      %1121 = vmatprep.subr.mxu0 0.0
      %1122 = vmatpush2.msra.mxu0 0.0
      %1123 = vmatprep.subr.mxu0 0.0
      %1124 = vmatpush2.msra.mxu0 0.0
      %1125 = vmatprep.subr.mxu0 0.0
      %1126 = vmatpush2.msra.mxu0 0.0
      %1127 = vmatprep.mubr.f32.mxu0 0.0
      %1128 = vmatmul.mubr.f32.gmra.mxu0 %v1061
      %v1129 = vpop.f32.mrf.mxu0
      %v1130 = vadd.f32 0.0, %v1129
      %v1131 = vpop.f32.mrf.mxu0
      %1132 = vdwg.mxu0
      %v1133 = vadd.f32 %v1045, %v1130
      %v1134 = vld [vmem:[%s408 + $0x4] sm:$0xff]
      %s1135 = scalar_lea.vmem %s3, 768
      %v1136 = vld [vmem:[%s1135] sm:$0xff]
      %v1137 = vld [vmem:[%s1135 + $0x8] sm:$0xff]
      %v1138 = vld [vmem:[%s1135 + $0x10] sm:$0xff]
      %v1139 = vld [vmem:[%s1135 + $0x18] sm:$0xff]
      %v1140 = vld [vmem:[%s1135 + $0x20] sm:$0xff]
      %v1141 = vld [vmem:[%s1135 + $0x28] sm:$0xff]
      %v1142 = vld [vmem:[%s1135 + $0x30] sm:$0xff]
      %v1143 = vld [vmem:[%s1135 + $0x38] sm:$0xff]
      %v1144 = vld [vmem:[%s1135 + $0x40] sm:$0xff]
      %v1145 = vld [vmem:[%s1135 + $0x48] sm:$0xff]
      %v1146 = vld [vmem:[%s1135 + $0x50] sm:$0xff]
      %v1147 = vld [vmem:[%s1135 + $0x58] sm:$0xff]
      %v1149 = vsel %vm459, %v1134, 0
      %1151 = vmatprep.subr.mxu0 0.0
      %1152 = vmatpush1.msra.mxu0 0.0
      %1153 = vmatprep.subr.mxu0 0.0
      %1154 = vmatpush1.msra.mxu0 0.0
      %1155 = vmatprep.subr.mxu0 0.0
      %1156 = vmatpush1.msra.mxu0 0.0
      %1157 = vmatprep.subr.mxu0 0.0
      %1158 = vmatpush1.msra.mxu0 0.0
      %1159 = vmatprep.subr.mxu0 0.0
      %1160 = vmatpush1.msra.mxu0 %v1147
      %1161 = vmatprep.subr.mxu0 0.0
      %1162 = vmatpush1.msra.mxu0 %v1146
      %1163 = vmatprep.subr.mxu0 0.0
      %1164 = vmatpush1.msra.mxu0 %v1145
      %1165 = vmatprep.subr.mxu0 0.0
      %1166 = vmatpush1.msra.mxu0 %v1144
      %1167 = vmatprep.subr.mxu0 0.0
      %1168 = vmatpush1.msra.mxu0 %v1143
      %1169 = vmatprep.subr.mxu0 0.0
      %1170 = vmatpush1.msra.mxu0 %v1142
      %1171 = vmatprep.subr.mxu0 0.0
      %1172 = vmatpush1.msra.mxu0 %v1141
      %1173 = vmatprep.subr.mxu0 0.0
      %1174 = vmatpush1.msra.mxu0 %v1140
      %1175 = vmatprep.subr.mxu0 0.0
      %1176 = vmatpush1.msra.mxu0 %v1139
      %1177 = vmatprep.subr.mxu0 0.0
      %1178 = vmatpush1.msra.mxu0 %v1138
      %1179 = vmatprep.subr.mxu0 0.0
      %1180 = vmatpush1.msra.mxu0 %v1137
      %1181 = vmatprep.subr.mxu0 0.0
      %1182 = vmatpush1.msra.mxu0 %v1136
      %1183 = vmatprep.subr.mxu0 0.0
      %1184 = vmatpush2.msra.mxu0 0.0
      %1185 = vmatprep.subr.mxu0 0.0
      %1186 = vmatpush2.msra.mxu0 0.0
      %1187 = vmatprep.subr.mxu0 0.0
      %1188 = vmatpush2.msra.mxu0 0.0
      %1189 = vmatprep.subr.mxu0 0.0
      %1190 = vmatpush2.msra.mxu0 0.0
      %1191 = vmatprep.subr.mxu0 0.0
      %1192 = vmatpush2.msra.mxu0 0.0
      %1193 = vmatprep.subr.mxu0 0.0
      %1194 = vmatpush2.msra.mxu0 0.0
      %1195 = vmatprep.subr.mxu0 0.0
      %1196 = vmatpush2.msra.mxu0 0.0
      %1197 = vmatprep.subr.mxu0 0.0
      %1198 = vmatpush2.msra.mxu0 0.0
      %1199 = vmatprep.subr.mxu0 0.0
      %1200 = vmatpush2.msra.mxu0 0.0
      %1201 = vmatprep.subr.mxu0 0.0
      %1202 = vmatpush2.msra.mxu0 0.0
      %1203 = vmatprep.subr.mxu0 0.0
      %1204 = vmatpush2.msra.mxu0 0.0
      %1205 = vmatprep.subr.mxu0 0.0
      %1206 = vmatpush2.msra.mxu0 0.0
      %1207 = vmatprep.subr.mxu0 0.0
      %1208 = vmatpush2.msra.mxu0 0.0
      %1209 = vmatprep.subr.mxu0 0.0
      %1210 = vmatpush2.msra.mxu0 0.0
      %1211 = vmatprep.subr.mxu0 0.0
      %1212 = vmatpush2.msra.mxu0 0.0
      %1213 = vmatprep.subr.mxu0 0.0
      %1214 = vmatpush2.msra.mxu0 0.0
      %1215 = vmatprep.mubr.f32.mxu0 0.0
      %1216 = vmatmul.mubr.f32.gmra.mxu0 %v1149
      %v1217 = vpop.f32.mrf.mxu0
      %v1218 = vadd.f32 0.0, %v1217
      %v1219 = vpop.f32.mrf.mxu0
      %1220 = vdwg.mxu0
      %v1221 = vadd.f32 %v1133, %v1218
      %v1222 = vld [vmem:[%s4] sm:$0x1]
      %v1224 = vlaneseq
      %v1225 = vshrl.u32 %v1224, 7
      %v1226 = vsub.s32 0, %v1225
      %v1227 = vrot.slane %v1222, %v1226
      %v1229 = vadd.f32 %v1221, %v1227
      %v1230 = vmax.f32 %v1229, 0.0
      %vm1231 = vcmask 523264
      %1232 = vst.msk [vmem:[%s417] sm:$0xff] %vm1231, %v1230
      %v1233 = vsel %vm1231, %v1230, 0.0
      %v1234 = vrot.slane %v1233, 4
      %v1235 = vadd.f32 %v1233, %v1234
      %v1236 = vrot.slane %v1235, 2
      %v1237 = vadd.f32 %v1235, %v1236
      %v1238 = vrot.slane %v1237, 1
      %v1239 = vadd.f32 %v1237, %v1238
      %vm1240 = vcmask 516096
      %1241 = vst.msk [vmem:[%s424] sm:$0x1] %vm1240, %v1239
      %v1242 = vmul.f32 %v1230, %v1230
      %v1243 = vsel %vm1231, %v1242, 0.0
      %v1244 = vrot.slane %v1243, 4
      %v1245 = vadd.f32 %v1243, %v1244
      %v1246 = vrot.slane %v1245, 2
      %v1247 = vadd.f32 %v1245, %v1246
      %v1248 = vrot.slane %v1247, 1
      %v1249 = vadd.f32 %v1247, %v1248
      %1250 = vst.msk [vmem:[%s431] sm:$0x1] %vm1240, %v1249
      %p1251 = scmp.lt.s32.totalorder %s23, 1
      %s1252 = scalar_select %p1251, %s23, 1
      %p1253 = scmp.lt.s32.totalorder %s24, 7
      %s1254 = scalar_select %p1253, %s24, 7
      %s1255 = smul.addr %s1252, 8
      %s1256 = sadd.s32 %s1254, %s1255
      %s1257 = smul.addr %s1256, 8
      %s1258 = scalar_lea.vmem %s5, %s1257
      %p1259 = scmp.lt.s32.totalorder %s23, 1
      %s1260 = scalar_select %p1259, %s23, 1
      %p1261 = scmp.lt.s32.totalorder %s24, 7
      %s1262 = scalar_select %p1261, %s24, 7
      %s1263 = smul.addr %s1260, 8
      %s1264 = sadd.s32 %s1262, %s1263
      %s1265 = scalar_lea.vmem %s6, %s1264
      %p1266 = scmp.lt.s32.totalorder %s23, 1
      %s1267 = scalar_select %p1266, %s23, 1
      %p1268 = scmp.lt.s32.totalorder %s24, 7
      %s1269 = scalar_select %p1268, %s24, 7
      %s1270 = smul.addr %s1267, 8
      %s1271 = sadd.s32 %s1269, %s1270
      %s1272 = scalar_lea.vmem %s7, %s1271
      // Predicated region
      $region41: #{midscope_conv3d_block.3} parent=39 // pred_check
        %p1273 = pneg %p181
      $region42: #{midscope_conv3d_block.3} parent=39 // pred_check_branch
        %1275 = sbr.rel (%p1273) target = $region44
      $region43: #{midscope_conv3d_block.3} parent=39 // pred_region
        _
      $region44: #{midscope_conv3d_block.3} parent=39 // pred_fallthru
        _
      // Predicated region
      $region45: #{midscope_conv3d_block.3} parent=39 // pred_check
        %p1276 = pneg %p209
      $region46: #{midscope_conv3d_block.3} parent=39 // pred_check_branch
        %1278 = sbr.rel (%p1276) target = $region48
      $region47: #{midscope_conv3d_block.3} parent=39 // pred_region
        _
      $region48: #{midscope_conv3d_block.3} parent=39 // pred_fallthru
        _
      // Predicated region
      $region49: #{midscope_conv3d_block.3} parent=39 // pred_check
        %p1279 = pneg %p237
      $region50: #{midscope_conv3d_block.3} parent=39 // pred_check_branch
        %1281 = sbr.rel (%p1279) target = $region52
      $region51: #{midscope_conv3d_block.3} parent=39 // pred_region
        _
      $region52: #{midscope_conv3d_block.3} parent=39 // pred_fallthru
        _
    $region40: #{midscope_conv3d_block.3} parent=5 // pred_fallthru
      _
    %p1282 = scmp.le.s32.totalorder 2, %s14
    // Predicated region
    $region53: #{midscope_conv3d_block.3} parent=5 // pred_check
      %p1283 = pneg %p1282
    $region54: #{midscope_conv3d_block.3} parent=5 // pred_check_branch
      %1285 = sbr.rel (%p1283) target = $region56
    $region55: #{midscope_conv3d_block.3} parent=5 // pred_region
      %s1286 = ssub.s32 %s14, 2
      // Predicated region
      $region57: #{midscope_conv3d_block.3} parent=55 // pred_check
        %p1287 = pneg %p187
      $region58: #{midscope_conv3d_block.3} parent=55 // pred_check_branch
        %1289 = sbr.rel (%p1287) target = $region60
      $region59: #{midscope_conv3d_block.3} parent=55 // pred_region
        %p1290 = scmp.lt.s32.totalorder %s25, 1
        %s1291 = scalar_select %p1290, %s25, 1
        %p1292 = scmp.lt.s32.totalorder %s26, 7
        %s1293 = scalar_select %p1292, %s26, 7
        %s1294 = smul.addr %s1291, 8
        %s1295 = sadd.s32 %s1293, %s1294
        %s1296 = smul.addr %s1295, 8
        %s1297 = scalar_lea.vmem %s5, %s1296
      $region60: #{midscope_conv3d_block.3} parent=55 // pred_fallthru
        _
      // Predicated region
      $region61: #{midscope_conv3d_block.3} parent=55 // pred_check
        %p1298 = pneg %p215
      $region62: #{midscope_conv3d_block.3} parent=55 // pred_check_branch
        %1300 = sbr.rel (%p1298) target = $region64
      $region63: #{midscope_conv3d_block.3} parent=55 // pred_region
        %p1301 = scmp.lt.s32.totalorder %s25, 1
        %s1302 = scalar_select %p1301, %s25, 1
        %p1303 = scmp.lt.s32.totalorder %s26, 7
        %s1304 = scalar_select %p1303, %s26, 7
        %s1305 = smul.addr %s1302, 8
        %s1306 = sadd.s32 %s1304, %s1305
        %s1307 = scalar_lea.vmem %s6, %s1306
      $region64: #{midscope_conv3d_block.3} parent=55 // pred_fallthru
        _
      // Predicated region
      $region65: #{midscope_conv3d_block.3} parent=55 // pred_check
        %p1308 = pneg %p243
      $region66: #{midscope_conv3d_block.3} parent=55 // pred_check_branch
        %1310 = sbr.rel (%p1308) target = $region68
      $region67: #{midscope_conv3d_block.3} parent=55 // pred_region
        %p1311 = scmp.lt.s32.totalorder %s25, 1
        %s1312 = scalar_select %p1311, %s25, 1
        %p1313 = scmp.lt.s32.totalorder %s26, 7
        %s1314 = scalar_select %p1313, %s26, 7
        %s1315 = smul.addr %s1312, 8
        %s1316 = sadd.s32 %s1314, %s1315
        %s1317 = scalar_lea.vmem %s7, %s1316
      $region68: #{midscope_conv3d_block.3} parent=55 // pred_fallthru
        _
    $region56: #{midscope_conv3d_block.3} parent=5 // pred_fallthru
      _
  $region6: #{midscope_conv3d_block.3} parent=0 // loop_footer
    %s18 = sadd.s32 1, %s14
  $region7: #{midscope_conv3d_block.3} parent=0 // loop_footer_branch
    %13 = sbr.rel target = $region3
  $region8: #{midscope_conv3d_block.3} parent=0 // loop_exit
    _

</llo_original>
